<compile_context>
chip_gen: v7x
topology: tpu7x:2x2x1
jax: 0.10.0
libtpu: 0.0.40
codegen_flags: <defaults>
</compile_context>

<pallas_src>
import math

import jax
import jax.numpy as jnp
from jax.experimental import pallas as pl
from jax.experimental.pallas import tpu as pltpu


# ----------------------------------------------------------------------------
# Kernel: per grid step c (one time-chunk of TC tokens)
#   X   = embedding[tokens[c*TC : c*TC+TC]]              (VMEM gather)
#   gi  = X @ Wih^T + bih                                (TC, 3H) batched matmul
#   for j in 0..TC-1 (serial):
#     gh = h @ Whh^T + bhh                               (1, 3H)
#     r = sigmoid(gi_r + gh_r); z = sigmoid(gi_z + gh_z)
#     n = tanh(gi_n + r * gh_n); h = (1 - z) * n + z * h
# PyTorch GRU gate order [r, z, n] is preserved by the (H, 3H) = W.T layout.
# ----------------------------------------------------------------------------
def encoder_gru_chunk_kernel(tok_ref,       # (T_pad,) int32, SMEM (scalar prefetch)
                             h0_ref,        # (1, H) initial hidden (VMEM-resident)
                             emb_ref,       # (V_pad, H) embedding table (VMEM-resident)
                             wih_ref,       # (H, 3H) W_ih^T (VMEM-resident)
                             whh_ref,       # (H, 3H) W_hh^T (VMEM-resident)
                             bih_ref,       # (1, 3H) f32
                             bhh_ref,       # (1, 3H) f32
                             out_ref,       # (TC, H) block of (T_pad, H) GRU outputs
                             emb_out_ref,   # (TC, H) block of (T_pad, H) embedded
                             h_carry,       # (1, H) f32 VMEM scratch: carried hidden
                             x_buf):        # (TC, H) f32 VMEM scratch: gathered rows
    c = pl.program_id(0)
    H = h0_ref.shape[1]
    TC = x_buf.shape[0]
    wdt = wih_ref.dtype          # matmul operand dtype (f32 or bf16)

    @pl.when(c == 0)
    def _():
        h_carry[...] = h0_ref[...]

    base = c * TC
    # Gather this chunk's embedding rows from the VMEM-resident table.
    for j in range(TC):
        tok = tok_ref[base + j]
        x_buf[pl.ds(j, 1), :] = emb_ref[pl.ds(tok, 1), :]

    x = x_buf[...]                           # (TC, H) f32
    emb_out_ref[...] = x                     # `embedded` output comes for free.

    # Hoisted input projection: one multi-row MXU matmul for the whole chunk.
    gi = jnp.dot(x.astype(wdt), wih_ref[...],
                 preferred_element_type=jnp.float32) + bih_ref[...]   # (TC, 3H) f32

    w_hh = whh_ref[...]                      # hoisted out of the serial loop
    b_hh = bhh_ref[...]
    h = h_carry[...]                         # (1, H) f32

    for j in range(TC):                      # serial recurrence (unrolled)
        gh = jnp.dot(h.astype(wdt), w_hh,
                     preferred_element_type=jnp.float32) + b_hh       # (1, 3H) f32
        gi_j = gi[j:j + 1, :]
        i_r, i_z, i_n = gi_j[:, 0:H], gi_j[:, H:2 * H], gi_j[:, 2 * H:3 * H]
        h_r, h_z, h_n = gh[:, 0:H], gh[:, H:2 * H], gh[:, 2 * H:3 * H]
        r = jax.nn.sigmoid(i_r + h_r)
        z = jax.nn.sigmoid(i_z + h_z)
        n = jnp.tanh(i_n + r * h_n)
        h = (1.0 - z) * n + z * h
        out_ref[pl.ds(j, 1), :] = h

    h_carry[...] = h


def prepare_encoder_params(emb, wih, whh, bih, bhh, *, weight_dtype=jnp.float32):
    """One-time conversion from PyTorch layout to the kernel layout.

    emb: (V, H) embedding table (rows padded to a multiple of 8, kept f32)
    wih/whh: (3H, H) gate blocks [r; z; n]  ->  (H, 3H) = W.T, cast to weight_dtype
    bih/bhh: (3H,)                           ->  (1, 3H) f32
    """
    V, H = emb.shape
    V_pad = ((V + 7) // 8) * 8
    emb_p = jnp.zeros((V_pad, H), jnp.float32).at[:V].set(emb.astype(jnp.float32))
    return dict(
        emb=emb_p,
        wih_t=jnp.transpose(wih).astype(weight_dtype),
        whh_t=jnp.transpose(whh).astype(weight_dtype),
        bih=bih.reshape(1, 3 * H).astype(jnp.float32),
        bhh=bhh.reshape(1, 3 * H).astype(jnp.float32),
    )


def encoder_rnn_forward_sequence(tokens, hidden0, params, *, time_chunk=8):
    """Runs T GRU steps in ONE pallas_call with VMEM-resident table and weights.

    tokens:  (T,) int32 token ids
    hidden0: (1, 1, H) initial hidden state
    params:  dict from prepare_encoder_params
    Returns (outputs (T,1,H), hidden (1,1,H), embedded (T,1,H)).
    """
    emb = params["emb"]
    wih_t, whh_t = params["wih_t"], params["whh_t"]
    bih, bhh = params["bih"], params["bhh"]

    V_pad, H = emb.shape
    H3 = 3 * H
    assert H % 128 == 0, "hidden size must be a multiple of 128 (TPU lane width)"
    assert wih_t.shape == (H, H3) and whh_t.shape == (H, H3)
    assert bih.shape == (1, H3) and bhh.shape == (1, H3)

    T = int(tokens.shape[0])
    TC = T if T <= int(time_chunk) else int(time_chunk)
    assert TC == T or TC % 8 == 0, "time_chunk must be a multiple of 8 when T > chunk"
    T_pad = ((T + TC - 1) // TC) * TC

    tok = jnp.zeros((T_pad,), jnp.int32).at[:T].set(tokens.astype(jnp.int32))
    h0 = hidden0.reshape(1, H).astype(jnp.float32)

    grid_spec = pltpu.PrefetchScalarGridSpec(
        num_scalar_prefetch=1,                     # token ids -> SMEM
        grid=(T_pad // TC,),
        in_specs=[
            pl.BlockSpec((1, H),     lambda c, tr: (0, 0)),   # h0      (resident)
            pl.BlockSpec((V_pad, H), lambda c, tr: (0, 0)),   # emb     (resident)
            pl.BlockSpec((H, H3),    lambda c, tr: (0, 0)),   # W_ih^T  (resident)
            pl.BlockSpec((H, H3),    lambda c, tr: (0, 0)),   # W_hh^T  (resident)
            pl.BlockSpec((1, H3),    lambda c, tr: (0, 0)),   # b_ih    (resident)
            pl.BlockSpec((1, H3),    lambda c, tr: (0, 0)),   # b_hh    (resident)
        ],
        out_specs=[
            pl.BlockSpec((TC, H), lambda c, tr: (c, 0)),      # per-chunk GRU outputs
            pl.BlockSpec((TC, H), lambda c, tr: (c, 0)),      # per-chunk embedded
        ],
        scratch_shapes=[
            pltpu.VMEM((1, H), jnp.float32),       # carried hidden state
            pltpu.VMEM((TC, H), jnp.float32),      # gathered embedding rows
        ],
    )

    outs, embs = pl.pallas_call(
        encoder_gru_chunk_kernel,
        grid_spec=grid_spec,
        out_shape=(
            jax.ShapeDtypeStruct((T_pad, H), jnp.float32),
            jax.ShapeDtypeStruct((T_pad, H), jnp.float32),
        ),
        compiler_params=pltpu.CompilerParams(
            dimension_semantics=("arbitrary",)),   # time axis carries hidden state
    )(tok, h0, emb, wih_t, whh_t, bih, bhh)

    outputs = outs[:T].reshape(T, 1, H)
    embedded = embs[:T].reshape(T, 1, H)
    hidden = outputs[-1:]                          # final hidden == last GRU output
    return outputs, hidden, embedded


def encoder_rnn_forward(token, hidden, params):
    """Mirrors EncoderRNN.forward(input, hidden) -> (output, hidden, embedded)
    for a single token (seq=1, batch=1), using the fused kernel with T=1."""
    return encoder_rnn_forward_sequence(jnp.reshape(token, (1,)), hidden, params)


# ----------------------------------------------------------------------------
# Pure-JAX reference replicating torch.nn.GRU semantics (PyTorch weight layout).
# ----------------------------------------------------------------------------
def _reference_sequence(tokens, hidden0, emb, wih, whh, bih, bhh,
                        weight_dtype=jnp.float32):
    H = emb.shape[1]
    h = hidden0.reshape(1, H)
    wih_t = jnp.transpose(wih).astype(weight_dtype)
    whh_t = jnp.transpose(whh).astype(weight_dtype)
    outs, embs = [], []
    for t in range(int(tokens.shape[0])):
        x = emb[tokens[t]].reshape(1, H)
        gi = jnp.dot(x.astype(weight_dtype), wih_t,
                     preferred_element_type=jnp.float32,
                     precision=jax.lax.Precision.HIGHEST) + bih
        gh = jnp.dot(h.astype(weight_dtype), whh_t,
                     preferred_element_type=jnp.float32,
                     precision=jax.lax.Precision.HIGHEST) + bhh
        i_r, i_z, i_n = gi[:, :H], gi[:, H:2 * H], gi[:, 2 * H:]
        h_r, h_z, h_n = gh[:, :H], gh[:, H:2 * H], gh[:, 2 * H:]
        r = jax.nn.sigmoid(i_r + h_r)
        z = jax.nn.sigmoid(i_z + h_z)
        n = jnp.tanh(i_n + r * h_n)
        h = (1.0 - z) * n + z * h
        outs.append(h)
        embs.append(x)
    outputs = jnp.stack(outs).reshape(-1, 1, H)
    embedded = jnp.stack(embs).reshape(-1, 1, H)
    return outputs, outputs[-1:], embedded


if __name__ == "__main__":
    VOCAB = 50        # input_size
    HIDDEN = 256      # hidden_size (matches the reference script)
    SEQ = 20          # number of encoder steps
    TIME_CHUNK = 8    # steps fused per grid invocation

    key = jax.random.PRNGKey(0)
    k_emb, k_wih, k_whh, k_bih, k_bhh, k_tok = jax.random.split(key, 6)

    # Parameter init matching EncoderRNN.__init__ shapes:
    #   embedding (input_size, hidden) ~ N(0,1); GRU weight_ih/hh (3H, H), biases (3H,)
    emb = jax.random.normal(k_emb, (VOCAB, HIDDEN), dtype=jnp.float32)
    bound = 1.0 / math.sqrt(HIDDEN)
    wih = jax.random.uniform(k_wih, (3 * HIDDEN, HIDDEN), jnp.float32, -bound, bound)
    whh = jax.random.uniform(k_whh, (3 * HIDDEN, HIDDEN), jnp.float32, -bound, bound)
    bih = jax.random.uniform(k_bih, (3 * HIDDEN,), jnp.float32, -bound, bound)
    bhh = jax.random.uniform(k_bhh, (3 * HIDDEN,), jnp.float32, -bound, bound)

    tokens = jax.random.randint(k_tok, (SEQ,), 0, VOCAB, dtype=jnp.int32)
    hidden0 = jnp.zeros((1, 1, HIDDEN), dtype=jnp.float32)   # initHidden()

    # One-time layout prep (kept out of the per-call path).
    params_f32 = prepare_encoder_params(emb, wih, whh, bih, bhh)
    params_bf16 = prepare_encoder_params(emb, wih, whh, bih, bhh,
                                         weight_dtype=jnp.bfloat16)

    # 1) Fused full-sequence encoder pass (chunked time grid), f32 weights.
    outs, hid, embs = encoder_rnn_forward_sequence(tokens, hidden0, params_f32,
                                                   time_chunk=TIME_CHUNK)
    # 2) Single-step forward, exactly the module's forward(input, hidden).
    out1, hid1, emb1 = encoder_rnn_forward(tokens[0], hidden0, params_f32)
    # 3) bf16-weight variant (f32 accumulation + f32 gate math).
    outs_bf, hid_bf, embs_bf = encoder_rnn_forward_sequence(tokens, hidden0,
                                                            params_bf16,
                                                            time_chunk=TIME_CHUNK)
    jax.block_until_ready((outs, hid, embs, out1, hid1, emb1,
                           outs_bf, hid_bf, embs_bf))

    # Correctness vs. pure-JAX PyTorch-layout references.
    r_outs, r_hid, r_embs = _reference_sequence(tokens, hidden0, emb, wih, whh, bih, bhh)
    r_out1, r_hid1, r_emb1 = _reference_sequence(tokens[:1], hidden0, emb, wih, whh, bih, bhh)
    rb_outs, rb_hid, rb_embs = _reference_sequence(tokens, hidden0, emb, wih, whh,
                                                   bih, bhh, weight_dtype=jnp.bfloat16)

    assert outs.shape == (SEQ, 1, HIDDEN) and hid.shape == (1, 1, HIDDEN)
    assert embs.shape == (SEQ, 1, HIDDEN)
    assert out1.shape == (1, 1, HIDDEN) and hid1.shape == (1, 1, HIDDEN)
    assert emb1.shape == (1, 1, HIDDEN)

    assert jnp.allclose(outs, r_outs, atol=1e-3, rtol=1e-3)
    assert jnp.allclose(hid, r_hid, atol=1e-3, rtol=1e-3)
    assert jnp.allclose(embs, r_embs, atol=1e-6, rtol=1e-6)
    assert jnp.allclose(out1, r_out1, atol=1e-3, rtol=1e-3)
    assert jnp.allclose(hid1, r_hid1, atol=1e-3, rtol=1e-3)
    assert jnp.allclose(emb1, r_emb1, atol=1e-6, rtol=1e-6)
    # bf16-weight path vs. a reference that also uses bf16 matmul operands.
    assert jnp.allclose(outs_bf, rb_outs, atol=1e-2, rtol=1e-2)
    assert jnp.allclose(hid_bf, rb_hid, atol=1e-2, rtol=1e-2)
    assert jnp.allclose(embs_bf, rb_embs, atol=1e-6, rtol=1e-6)

    print("KERNEL_OK")
</pallas_src>

<mosaic_0001>
module attributes {stable_mosaic.version = 11 : i64} {
  func.func @encoder_gru_chunk_kernel(%arg0: i32, %arg1: memref<24xi32, #tpu.memory_space<smem>>, %arg2: memref<1x256xf32, #tpu.memory_space<vmem>>, %arg3: memref<56x256xf32, #tpu.memory_space<vmem>>, %arg4: memref<256x768xf32, #tpu.memory_space<vmem>>, %arg5: memref<256x768xf32, #tpu.memory_space<vmem>>, %arg6: memref<1x768xf32, #tpu.memory_space<vmem>>, %arg7: memref<1x768xf32, #tpu.memory_space<vmem>>, %arg8: memref<8x256xf32, #tpu.memory_space<vmem>>, %arg9: memref<8x256xf32, #tpu.memory_space<vmem>>, %arg10: memref<1x256xf32, #tpu.memory_space<vmem>>, %arg11: memref<8x256xf32, #tpu.memory_space<vmem>>) attributes {dimension_semantics = [#tpu.dimension_semantics<arbitrary>], iteration_bounds = array<i64: 3>, scalar_prefetch = 1 : i64, scratch_operands = 2 : i64, tpu.core_type = #tpu.core_type<tc>, window_params = [{pipeline_mode = #tpu.pipeline_mode<synchronous>, transform_indices = @transform_0, window_bounds = array<i64: 1, 256>}, {pipeline_mode = #tpu.pipeline_mode<synchronous>, transform_indices = @transform_1, window_bounds = array<i64: 56, 256>}, {pipeline_mode = #tpu.pipeline_mode<synchronous>, transform_indices = @transform_2, window_bounds = array<i64: 256, 768>}, {pipeline_mode = #tpu.pipeline_mode<synchronous>, transform_indices = @transform_3, window_bounds = array<i64: 256, 768>}, {pipeline_mode = #tpu.pipeline_mode<synchronous>, transform_indices = @transform_4, window_bounds = array<i64: 1, 768>}, {pipeline_mode = #tpu.pipeline_mode<synchronous>, transform_indices = @transform_5, window_bounds = array<i64: 1, 768>}, {transform_indices = @transform_6, window_bounds = array<i64: 8, 256>}, {transform_indices = @transform_7, window_bounds = array<i64: 8, 256>}]} {
    %c0_i32 = arith.constant 0 : i32
    %0 = arith.cmpi eq, %arg0, %c0_i32 : i32
    %1 = arith.extui %0 : i1 to i32
    %c0_i32_0 = arith.constant 0 : i32
    %2 = arith.cmpi ne, %1, %c0_i32_0 : i32
    scf.if %2 {
      %c0_82 = arith.constant 0 : index
      %c0_83 = arith.constant 0 : index
      %303 = vector.load %arg2[%c0_82, %c0_83] : memref<1x256xf32, #tpu.memory_space<vmem>>, vector<1x256xf32>
      %c0_84 = arith.constant 0 : index
      %c0_85 = arith.constant 0 : index
      %304 = vector.load %arg10[%c0_84, %c0_85] : memref<1x256xf32, #tpu.memory_space<vmem>>, vector<1x256xf32>
      tpu.vector_store %arg10[%c0_84, %c0_85], %303 {strides = array<i32>} : memref<1x256xf32, #tpu.memory_space<vmem>>, vector<1x256xf32>,
    } else {
    }
    %c8_i32 = arith.constant 8 : i32
    %3 = arith.muli %arg0, %c8_i32 : i32
    %c0_i32_1 = arith.constant 0 : i32
    %4 = arith.addi %3, %c0_i32_1 : i32
    %5 = arith.index_cast %4 : i32 to index
    %6 = memref.load %arg1[%5] : memref<24xi32, #tpu.memory_space<smem>>
    %7 = arith.index_cast %6 : i32 to index
    %c0 = arith.constant 0 : index
    %8 = vector.load %arg3[%7, %c0] : memref<56x256xf32, #tpu.memory_space<vmem>>, vector<1x256xf32>
    %c0_2 = arith.constant 0 : index
    %c0_3 = arith.constant 0 : index
    %9 = vector.load %arg11[%c0_2, %c0_3] : memref<8x256xf32, #tpu.memory_space<vmem>>, vector<1x256xf32>
    tpu.vector_store %arg11[%c0_2, %c0_3], %8 {strides = array<i32>} : memref<8x256xf32, #tpu.memory_space<vmem>>, vector<1x256xf32>,
    %c1_i32 = arith.constant 1 : i32
    %10 = arith.addi %3, %c1_i32 : i32
    %11 = arith.index_cast %10 : i32 to index
    %12 = memref.load %arg1[%11] : memref<24xi32, #tpu.memory_space<smem>>
    %13 = arith.index_cast %12 : i32 to index
    %c0_4 = arith.constant 0 : index
    %14 = vector.load %arg3[%13, %c0_4] : memref<56x256xf32, #tpu.memory_space<vmem>>, vector<1x256xf32>
    %c1 = arith.constant 1 : index
    %c0_5 = arith.constant 0 : index
    %15 = vector.load %arg11[%c1, %c0_5] : memref<8x256xf32, #tpu.memory_space<vmem>>, vector<1x256xf32>
    tpu.vector_store %arg11[%c1, %c0_5], %14 {strides = array<i32>} : memref<8x256xf32, #tpu.memory_space<vmem>>, vector<1x256xf32>,
    %c2_i32 = arith.constant 2 : i32
    %16 = arith.addi %3, %c2_i32 : i32
    %17 = arith.index_cast %16 : i32 to index
    %18 = memref.load %arg1[%17] : memref<24xi32, #tpu.memory_space<smem>>
    %19 = arith.index_cast %18 : i32 to index
    %c0_6 = arith.constant 0 : index
    %20 = vector.load %arg3[%19, %c0_6] : memref<56x256xf32, #tpu.memory_space<vmem>>, vector<1x256xf32>
    %c2 = arith.constant 2 : index
    %c0_7 = arith.constant 0 : index
    %21 = vector.load %arg11[%c2, %c0_7] : memref<8x256xf32, #tpu.memory_space<vmem>>, vector<1x256xf32>
    tpu.vector_store %arg11[%c2, %c0_7], %20 {strides = array<i32>} : memref<8x256xf32, #tpu.memory_space<vmem>>, vector<1x256xf32>,
    %c3_i32 = arith.constant 3 : i32
    %22 = arith.addi %3, %c3_i32 : i32
    %23 = arith.index_cast %22 : i32 to index
    %24 = memref.load %arg1[%23] : memref<24xi32, #tpu.memory_space<smem>>
    %25 = arith.index_cast %24 : i32 to index
    %c0_8 = arith.constant 0 : index
    %26 = vector.load %arg3[%25, %c0_8] : memref<56x256xf32, #tpu.memory_space<vmem>>, vector<1x256xf32>
    %c3 = arith.constant 3 : index
    %c0_9 = arith.constant 0 : index
    %27 = vector.load %arg11[%c3, %c0_9] : memref<8x256xf32, #tpu.memory_space<vmem>>, vector<1x256xf32>
    tpu.vector_store %arg11[%c3, %c0_9], %26 {strides = array<i32>} : memref<8x256xf32, #tpu.memory_space<vmem>>, vector<1x256xf32>,
    %c4_i32 = arith.constant 4 : i32
    %28 = arith.addi %3, %c4_i32 : i32
    %29 = arith.index_cast %28 : i32 to index
    %30 = memref.load %arg1[%29] : memref<24xi32, #tpu.memory_space<smem>>
    %31 = arith.index_cast %30 : i32 to index
    %c0_10 = arith.constant 0 : index
    %32 = vector.load %arg3[%31, %c0_10] : memref<56x256xf32, #tpu.memory_space<vmem>>, vector<1x256xf32>
    %c4 = arith.constant 4 : index
    %c0_11 = arith.constant 0 : index
    %33 = vector.load %arg11[%c4, %c0_11] : memref<8x256xf32, #tpu.memory_space<vmem>>, vector<1x256xf32>
    tpu.vector_store %arg11[%c4, %c0_11], %32 {strides = array<i32>} : memref<8x256xf32, #tpu.memory_space<vmem>>, vector<1x256xf32>,
    %c5_i32 = arith.constant 5 : i32
    %34 = arith.addi %3, %c5_i32 : i32
    %35 = arith.index_cast %34 : i32 to index
    %36 = memref.load %arg1[%35] : memref<24xi32, #tpu.memory_space<smem>>
    %37 = arith.index_cast %36 : i32 to index
    %c0_12 = arith.constant 0 : index
    %38 = vector.load %arg3[%37, %c0_12] : memref<56x256xf32, #tpu.memory_space<vmem>>, vector<1x256xf32>
    %c5 = arith.constant 5 : index
    %c0_13 = arith.constant 0 : index
    %39 = vector.load %arg11[%c5, %c0_13] : memref<8x256xf32, #tpu.memory_space<vmem>>, vector<1x256xf32>
    tpu.vector_store %arg11[%c5, %c0_13], %38 {strides = array<i32>} : memref<8x256xf32, #tpu.memory_space<vmem>>, vector<1x256xf32>,
    %c6_i32 = arith.constant 6 : i32
    %40 = arith.addi %3, %c6_i32 : i32
    %41 = arith.index_cast %40 : i32 to index
    %42 = memref.load %arg1[%41] : memref<24xi32, #tpu.memory_space<smem>>
    %43 = arith.index_cast %42 : i32 to index
    %c0_14 = arith.constant 0 : index
    %44 = vector.load %arg3[%43, %c0_14] : memref<56x256xf32, #tpu.memory_space<vmem>>, vector<1x256xf32>
    %c6 = arith.constant 6 : index
    %c0_15 = arith.constant 0 : index
    %45 = vector.load %arg11[%c6, %c0_15] : memref<8x256xf32, #tpu.memory_space<vmem>>, vector<1x256xf32>
    tpu.vector_store %arg11[%c6, %c0_15], %44 {strides = array<i32>} : memref<8x256xf32, #tpu.memory_space<vmem>>, vector<1x256xf32>,
    %c7_i32 = arith.constant 7 : i32
    %46 = arith.addi %3, %c7_i32 : i32
    %47 = arith.index_cast %46 : i32 to index
    %48 = memref.load %arg1[%47] : memref<24xi32, #tpu.memory_space<smem>>
    %49 = arith.index_cast %48 : i32 to index
    %c0_16 = arith.constant 0 : index
    %50 = vector.load %arg3[%49, %c0_16] : memref<56x256xf32, #tpu.memory_space<vmem>>, vector<1x256xf32>
    %c7 = arith.constant 7 : index
    %c0_17 = arith.constant 0 : index
    %51 = vector.load %arg11[%c7, %c0_17] : memref<8x256xf32, #tpu.memory_space<vmem>>, vector<1x256xf32>
    tpu.vector_store %arg11[%c7, %c0_17], %50 {strides = array<i32>} : memref<8x256xf32, #tpu.memory_space<vmem>>, vector<1x256xf32>,
    %c0_18 = arith.constant 0 : index
    %c0_19 = arith.constant 0 : index
    %52 = vector.load %arg11[%c0_18, %c0_19] : memref<8x256xf32, #tpu.memory_space<vmem>>, vector<8x256xf32>
    %c0_20 = arith.constant 0 : index
    %c0_21 = arith.constant 0 : index
    %53 = vector.load %arg9[%c0_20, %c0_21] : memref<8x256xf32, #tpu.memory_space<vmem>>, vector<8x256xf32>
    tpu.vector_store %arg9[%c0_20, %c0_21], %52 {strides = array<i32>} : memref<8x256xf32, #tpu.memory_space<vmem>>, vector<8x256xf32>,
    %c0_22 = arith.constant 0 : index
    %c0_23 = arith.constant 0 : index
    %54 = vector.load %arg4[%c0_22, %c0_23] : memref<256x768xf32, #tpu.memory_space<vmem>>, vector<256x768xf32>
    %cst = arith.constant dense<0.000000e+00> : vector<8x768xf32>
    %55 = tpu.matmul %52, %54, %cst {dimension_numbers = #tpu.dot_dimension_numbers<[1], [0], [0], [1], [0, 0, 1, 1], [], []>} : vector<8x256xf32>, vector<256x768xf32>, vector<8x768xf32> -> vector<8x768xf32>
    %c0_24 = arith.constant 0 : index
    %c0_25 = arith.constant 0 : index
    %56 = vector.load %arg6[%c0_24, %c0_25] : memref<1x768xf32, #tpu.memory_space<vmem>>, vector<1x768xf32>
    %57 = vector.broadcast %56 : vector<1x768xf32> to vector<8x768xf32>
    %58 = arith.addf %55, %57 : vector<8x768xf32>
    %c0_26 = arith.constant 0 : index
    %c0_27 = arith.constant 0 : index
    %59 = vector.load %arg5[%c0_26, %c0_27] : memref<256x768xf32, #tpu.memory_space<vmem>>, vector<256x768xf32>
    %c0_28 = arith.constant 0 : index
    %c0_29 = arith.constant 0 : index
    %60 = vector.load %arg7[%c0_28, %c0_29] : memref<1x768xf32, #tpu.memory_space<vmem>>, vector<1x768xf32>
    %c0_30 = arith.constant 0 : index
    %c0_31 = arith.constant 0 : index
    %61 = vector.load %arg10[%c0_30, %c0_31] : memref<1x256xf32, #tpu.memory_space<vmem>>, vector<1x256xf32>
    %cst_32 = arith.constant dense<0.000000e+00> : vector<1x768xf32>
    %62 = tpu.matmul %61, %59, %cst_32 {dimension_numbers = #tpu.dot_dimension_numbers<[1], [0], [0], [1], [0, 0, 1, 1], [], []>} : vector<1x256xf32>, vector<256x768xf32>, vector<1x768xf32> -> vector<1x768xf32>
    %63 = arith.addf %62, %60 : vector<1x768xf32>
    %64 = vector.extract_strided_slice %58 {offsets = [0, 0], sizes = [1, 768], strides = [1, 1]} : vector<8x768xf32> to vector<1x768xf32>
    %65 = vector.extract_strided_slice %64 {offsets = [0, 0], sizes = [1, 256], strides = [1, 1]} : vector<1x768xf32> to vector<1x256xf32>
    %66 = vector.extract_strided_slice %64 {offsets = [0, 256], sizes = [1, 256], strides = [1, 1]} : vector<1x768xf32> to vector<1x256xf32>
    %67 = vector.extract_strided_slice %64 {offsets = [0, 512], sizes = [1, 256], strides = [1, 1]} : vector<1x768xf32> to vector<1x256xf32>
    %68 = vector.extract_strided_slice %63 {offsets = [0, 0], sizes = [1, 256], strides = [1, 1]} : vector<1x768xf32> to vector<1x256xf32>
    %69 = vector.extract_strided_slice %63 {offsets = [0, 256], sizes = [1, 256], strides = [1, 1]} : vector<1x768xf32> to vector<1x256xf32>
    %70 = vector.extract_strided_slice %63 {offsets = [0, 512], sizes = [1, 256], strides = [1, 1]} : vector<1x768xf32> to vector<1x256xf32>
    %71 = arith.addf %65, %68 : vector<1x256xf32>
    %72 = arith.negf %71 : vector<1x256xf32>
    %73 = math.exp %72 : vector<1x256xf32>
    %cst_33 = arith.constant 1.000000e+00 : f32
    %74 = vector.broadcast %cst_33 : f32 to vector<1x256xf32>
    %75 = arith.addf %74, %73 : vector<1x256xf32>
    %76 = arith.divf %74, %75 : vector<1x256xf32>
    %77 = arith.addf %66, %69 : vector<1x256xf32>
    %78 = arith.negf %77 : vector<1x256xf32>
    %79 = math.exp %78 : vector<1x256xf32>
    %cst_34 = arith.constant 1.000000e+00 : f32
    %80 = vector.broadcast %cst_34 : f32 to vector<1x256xf32>
    %81 = arith.addf %80, %79 : vector<1x256xf32>
    %82 = arith.divf %80, %81 : vector<1x256xf32>
    %83 = arith.mulf %76, %70 : vector<1x256xf32>
    %84 = arith.addf %67, %83 : vector<1x256xf32>
    %85 = math.tanh %84 : vector<1x256xf32>
    %cst_35 = arith.constant 1.000000e+00 : f32
    %86 = vector.broadcast %cst_35 : f32 to vector<1x256xf32>
    %87 = arith.subf %86, %82 : vector<1x256xf32>
    %88 = arith.mulf %87, %85 : vector<1x256xf32>
    %89 = arith.mulf %82, %61 : vector<1x256xf32>
    %90 = arith.addf %88, %89 : vector<1x256xf32>
    %c0_36 = arith.constant 0 : index
    %c0_37 = arith.constant 0 : index
    %91 = vector.load %arg8[%c0_36, %c0_37] : memref<8x256xf32, #tpu.memory_space<vmem>>, vector<1x256xf32>
    tpu.vector_store %arg8[%c0_36, %c0_37], %90 {strides = array<i32>} : memref<8x256xf32, #tpu.memory_space<vmem>>, vector<1x256xf32>,
    %cst_38 = arith.constant dense<0.000000e+00> : vector<1x768xf32>
    %92 = tpu.matmul %90, %59, %cst_38 {dimension_numbers = #tpu.dot_dimension_numbers<[1], [0], [0], [1], [0, 0, 1, 1], [], []>} : vector<1x256xf32>, vector<256x768xf32>, vector<1x768xf32> -> vector<1x768xf32>
    %93 = arith.addf %92, %60 : vector<1x768xf32>
    %94 = vector.extract_strided_slice %58 {offsets = [1, 0], sizes = [1, 768], strides = [1, 1]} : vector<8x768xf32> to vector<1x768xf32>
    %95 = vector.extract_strided_slice %94 {offsets = [0, 0], sizes = [1, 256], strides = [1, 1]} : vector<1x768xf32> to vector<1x256xf32>
    %96 = vector.extract_strided_slice %94 {offsets = [0, 256], sizes = [1, 256], strides = [1, 1]} : vector<1x768xf32> to vector<1x256xf32>
    %97 = vector.extract_strided_slice %94 {offsets = [0, 512], sizes = [1, 256], strides = [1, 1]} : vector<1x768xf32> to vector<1x256xf32>
    %98 = vector.extract_strided_slice %93 {offsets = [0, 0], sizes = [1, 256], strides = [1, 1]} : vector<1x768xf32> to vector<1x256xf32>
    %99 = vector.extract_strided_slice %93 {offsets = [0, 256], sizes = [1, 256], strides = [1, 1]} : vector<1x768xf32> to vector<1x256xf32>
    %100 = vector.extract_strided_slice %93 {offsets = [0, 512], sizes = [1, 256], strides = [1, 1]} : vector<1x768xf32> to vector<1x256xf32>
    %101 = arith.addf %95, %98 : vector<1x256xf32>
    %102 = arith.negf %101 : vector<1x256xf32>
    %103 = math.exp %102 : vector<1x256xf32>
    %cst_39 = arith.constant 1.000000e+00 : f32
    %104 = vector.broadcast %cst_39 : f32 to vector<1x256xf32>
    %105 = arith.addf %104, %103 : vector<1x256xf32>
    %106 = arith.divf %104, %105 : vector<1x256xf32>
    %107 = arith.addf %96, %99 : vector<1x256xf32>
    %108 = arith.negf %107 : vector<1x256xf32>
    %109 = math.exp %108 : vector<1x256xf32>
    %cst_40 = arith.constant 1.000000e+00 : f32
    %110 = vector.broadcast %cst_40 : f32 to vector<1x256xf32>
    %111 = arith.addf %110, %109 : vector<1x256xf32>
    %112 = arith.divf %110, %111 : vector<1x256xf32>
    %113 = arith.mulf %106, %100 : vector<1x256xf32>
    %114 = arith.addf %97, %113 : vector<1x256xf32>
    %115 = math.tanh %114 : vector<1x256xf32>
    %cst_41 = arith.constant 1.000000e+00 : f32
    %116 = vector.broadcast %cst_41 : f32 to vector<1x256xf32>
    %117 = arith.subf %116, %112 : vector<1x256xf32>
    %118 = arith.mulf %117, %115 : vector<1x256xf32>
    %119 = arith.mulf %112, %90 : vector<1x256xf32>
    %120 = arith.addf %118, %119 : vector<1x256xf32>
    %c1_42 = arith.constant 1 : index
    %c0_43 = arith.constant 0 : index
    %121 = vector.load %arg8[%c1_42, %c0_43] : memref<8x256xf32, #tpu.memory_space<vmem>>, vector<1x256xf32>
    tpu.vector_store %arg8[%c1_42, %c0_43], %120 {strides = array<i32>} : memref<8x256xf32, #tpu.memory_space<vmem>>, vector<1x256xf32>,
    %cst_44 = arith.constant dense<0.000000e+00> : vector<1x768xf32>
    %122 = tpu.matmul %120, %59, %cst_44 {dimension_numbers = #tpu.dot_dimension_numbers<[1], [0], [0], [1], [0, 0, 1, 1], [], []>} : vector<1x256xf32>, vector<256x768xf32>, vector<1x768xf32> -> vector<1x768xf32>
    %123 = arith.addf %122, %60 : vector<1x768xf32>
    %124 = vector.extract_strided_slice %58 {offsets = [2, 0], sizes = [1, 768], strides = [1, 1]} : vector<8x768xf32> to vector<1x768xf32>
    %125 = vector.extract_strided_slice %124 {offsets = [0, 0], sizes = [1, 256], strides = [1, 1]} : vector<1x768xf32> to vector<1x256xf32>
    %126 = vector.extract_strided_slice %124 {offsets = [0, 256], sizes = [1, 256], strides = [1, 1]} : vector<1x768xf32> to vector<1x256xf32>
    %127 = vector.extract_strided_slice %124 {offsets = [0, 512], sizes = [1, 256], strides = [1, 1]} : vector<1x768xf32> to vector<1x256xf32>
    %128 = vector.extract_strided_slice %123 {offsets = [0, 0], sizes = [1, 256], strides = [1, 1]} : vector<1x768xf32> to vector<1x256xf32>
    %129 = vector.extract_strided_slice %123 {offsets = [0, 256], sizes = [1, 256], strides = [1, 1]} : vector<1x768xf32> to vector<1x256xf32>
    %130 = vector.extract_strided_slice %123 {offsets = [0, 512], sizes = [1, 256], strides = [1, 1]} : vector<1x768xf32> to vector<1x256xf32>
    %131 = arith.addf %125, %128 : vector<1x256xf32>
    %132 = arith.negf %131 : vector<1x256xf32>
    %133 = math.exp %132 : vector<1x256xf32>
    %cst_45 = arith.constant 1.000000e+00 : f32
    %134 = vector.broadcast %cst_45 : f32 to vector<1x256xf32>
    %135 = arith.addf %134, %133 : vector<1x256xf32>
    %136 = arith.divf %134, %135 : vector<1x256xf32>
    %137 = arith.addf %126, %129 : vector<1x256xf32>
    %138 = arith.negf %137 : vector<1x256xf32>
    %139 = math.exp %138 : vector<1x256xf32>
    %cst_46 = arith.constant 1.000000e+00 : f32
    %140 = vector.broadcast %cst_46 : f32 to vector<1x256xf32>
    %141 = arith.addf %140, %139 : vector<1x256xf32>
    %142 = arith.divf %140, %141 : vector<1x256xf32>
    %143 = arith.mulf %136, %130 : vector<1x256xf32>
    %144 = arith.addf %127, %143 : vector<1x256xf32>
    %145 = math.tanh %144 : vector<1x256xf32>
    %cst_47 = arith.constant 1.000000e+00 : f32
    %146 = vector.broadcast %cst_47 : f32 to vector<1x256xf32>
    %147 = arith.subf %146, %142 : vector<1x256xf32>
    %148 = arith.mulf %147, %145 : vector<1x256xf32>
    %149 = arith.mulf %142, %120 : vector<1x256xf32>
    %150 = arith.addf %148, %149 : vector<1x256xf32>
    %c2_48 = arith.constant 2 : index
    %c0_49 = arith.constant 0 : index
    %151 = vector.load %arg8[%c2_48, %c0_49] : memref<8x256xf32, #tpu.memory_space<vmem>>, vector<1x256xf32>
    tpu.vector_store %arg8[%c2_48, %c0_49], %150 {strides = array<i32>} : memref<8x256xf32, #tpu.memory_space<vmem>>, vector<1x256xf32>,
    %cst_50 = arith.constant dense<0.000000e+00> : vector<1x768xf32>
    %152 = tpu.matmul %150, %59, %cst_50 {dimension_numbers = #tpu.dot_dimension_numbers<[1], [0], [0], [1], [0, 0, 1, 1], [], []>} : vector<1x256xf32>, vector<256x768xf32>, vector<1x768xf32> -> vector<1x768xf32>
    %153 = arith.addf %152, %60 : vector<1x768xf32>
    %154 = vector.extract_strided_slice %58 {offsets = [3, 0], sizes = [1, 768], strides = [1, 1]} : vector<8x768xf32> to vector<1x768xf32>
    %155 = vector.extract_strided_slice %154 {offsets = [0, 0], sizes = [1, 256], strides = [1, 1]} : vector<1x768xf32> to vector<1x256xf32>
    %156 = vector.extract_strided_slice %154 {offsets = [0, 256], sizes = [1, 256], strides = [1, 1]} : vector<1x768xf32> to vector<1x256xf32>
    %157 = vector.extract_strided_slice %154 {offsets = [0, 512], sizes = [1, 256], strides = [1, 1]} : vector<1x768xf32> to vector<1x256xf32>
    %158 = vector.extract_strided_slice %153 {offsets = [0, 0], sizes = [1, 256], strides = [1, 1]} : vector<1x768xf32> to vector<1x256xf32>
    %159 = vector.extract_strided_slice %153 {offsets = [0, 256], sizes = [1, 256], strides = [1, 1]} : vector<1x768xf32> to vector<1x256xf32>
    %160 = vector.extract_strided_slice %153 {offsets = [0, 512], sizes = [1, 256], strides = [1, 1]} : vector<1x768xf32> to vector<1x256xf32>
    %161 = arith.addf %155, %158 : vector<1x256xf32>
    %162 = arith.negf %161 : vector<1x256xf32>
    %163 = math.exp %162 : vector<1x256xf32>
    %cst_51 = arith.constant 1.000000e+00 : f32
    %164 = vector.broadcast %cst_51 : f32 to vector<1x256xf32>
    %165 = arith.addf %164, %163 : vector<1x256xf32>
    %166 = arith.divf %164, %165 : vector<1x256xf32>
    %167 = arith.addf %156, %159 : vector<1x256xf32>
    %168 = arith.negf %167 : vector<1x256xf32>
    %169 = math.exp %168 : vector<1x256xf32>
    %cst_52 = arith.constant 1.000000e+00 : f32
    %170 = vector.broadcast %cst_52 : f32 to vector<1x256xf32>
    %171 = arith.addf %170, %169 : vector<1x256xf32>
    %172 = arith.divf %170, %171 : vector<1x256xf32>
    %173 = arith.mulf %166, %160 : vector<1x256xf32>
    %174 = arith.addf %157, %173 : vector<1x256xf32>
    %175 = math.tanh %174 : vector<1x256xf32>
    %cst_53 = arith.constant 1.000000e+00 : f32
    %176 = vector.broadcast %cst_53 : f32 to vector<1x256xf32>
    %177 = arith.subf %176, %172 : vector<1x256xf32>
    %178 = arith.mulf %177, %175 : vector<1x256xf32>
    %179 = arith.mulf %172, %150 : vector<1x256xf32>
    %180 = arith.addf %178, %179 : vector<1x256xf32>
    %c3_54 = arith.constant 3 : index
    %c0_55 = arith.constant 0 : index
    %181 = vector.load %arg8[%c3_54, %c0_55] : memref<8x256xf32, #tpu.memory_space<vmem>>, vector<1x256xf32>
    tpu.vector_store %arg8[%c3_54, %c0_55], %180 {strides = array<i32>} : memref<8x256xf32, #tpu.memory_space<vmem>>, vector<1x256xf32>,
    %cst_56 = arith.constant dense<0.000000e+00> : vector<1x768xf32>
    %182 = tpu.matmul %180, %59, %cst_56 {dimension_numbers = #tpu.dot_dimension_numbers<[1], [0], [0], [1], [0, 0, 1, 1], [], []>} : vector<1x256xf32>, vector<256x768xf32>, vector<1x768xf32> -> vector<1x768xf32>
    %183 = arith.addf %182, %60 : vector<1x768xf32>
    %184 = vector.extract_strided_slice %58 {offsets = [4, 0], sizes = [1, 768], strides = [1, 1]} : vector<8x768xf32> to vector<1x768xf32>
    %185 = vector.extract_strided_slice %184 {offsets = [0, 0], sizes = [1, 256], strides = [1, 1]} : vector<1x768xf32> to vector<1x256xf32>
    %186 = vector.extract_strided_slice %184 {offsets = [0, 256], sizes = [1, 256], strides = [1, 1]} : vector<1x768xf32> to vector<1x256xf32>
    %187 = vector.extract_strided_slice %184 {offsets = [0, 512], sizes = [1, 256], strides = [1, 1]} : vector<1x768xf32> to vector<1x256xf32>
    %188 = vector.extract_strided_slice %183 {offsets = [0, 0], sizes = [1, 256], strides = [1, 1]} : vector<1x768xf32> to vector<1x256xf32>
    %189 = vector.extract_strided_slice %183 {offsets = [0, 256], sizes = [1, 256], strides = [1, 1]} : vector<1x768xf32> to vector<1x256xf32>
    %190 = vector.extract_strided_slice %183 {offsets = [0, 512], sizes = [1, 256], strides = [1, 1]} : vector<1x768xf32> to vector<1x256xf32>
    %191 = arith.addf %185, %188 : vector<1x256xf32>
    %192 = arith.negf %191 : vector<1x256xf32>
    %193 = math.exp %192 : vector<1x256xf32>
    %cst_57 = arith.constant 1.000000e+00 : f32
    %194 = vector.broadcast %cst_57 : f32 to vector<1x256xf32>
    %195 = arith.addf %194, %193 : vector<1x256xf32>
    %196 = arith.divf %194, %195 : vector<1x256xf32>
    %197 = arith.addf %186, %189 : vector<1x256xf32>
    %198 = arith.negf %197 : vector<1x256xf32>
    %199 = math.exp %198 : vector<1x256xf32>
    %cst_58 = arith.constant 1.000000e+00 : f32
    %200 = vector.broadcast %cst_58 : f32 to vector<1x256xf32>
    %201 = arith.addf %200, %199 : vector<1x256xf32>
    %202 = arith.divf %200, %201 : vector<1x256xf32>
    %203 = arith.mulf %196, %190 : vector<1x256xf32>
    %204 = arith.addf %187, %203 : vector<1x256xf32>
    %205 = math.tanh %204 : vector<1x256xf32>
    %cst_59 = arith.constant 1.000000e+00 : f32
    %206 = vector.broadcast %cst_59 : f32 to vector<1x256xf32>
    %207 = arith.subf %206, %202 : vector<1x256xf32>
    %208 = arith.mulf %207, %205 : vector<1x256xf32>
    %209 = arith.mulf %202, %180 : vector<1x256xf32>
    %210 = arith.addf %208, %209 : vector<1x256xf32>
    %c4_60 = arith.constant 4 : index
    %c0_61 = arith.constant 0 : index
    %211 = vector.load %arg8[%c4_60, %c0_61] : memref<8x256xf32, #tpu.memory_space<vmem>>, vector<1x256xf32>
    tpu.vector_store %arg8[%c4_60, %c0_61], %210 {strides = array<i32>} : memref<8x256xf32, #tpu.memory_space<vmem>>, vector<1x256xf32>,
    %cst_62 = arith.constant dense<0.000000e+00> : vector<1x768xf32>
    %212 = tpu.matmul %210, %59, %cst_62 {dimension_numbers = #tpu.dot_dimension_numbers<[1], [0], [0], [1], [0, 0, 1, 1], [], []>} : vector<1x256xf32>, vector<256x768xf32>, vector<1x768xf32> -> vector<1x768xf32>
    %213 = arith.addf %212, %60 : vector<1x768xf32>
    %214 = vector.extract_strided_slice %58 {offsets = [5, 0], sizes = [1, 768], strides = [1, 1]} : vector<8x768xf32> to vector<1x768xf32>
    %215 = vector.extract_strided_slice %214 {offsets = [0, 0], sizes = [1, 256], strides = [1, 1]} : vector<1x768xf32> to vector<1x256xf32>
    %216 = vector.extract_strided_slice %214 {offsets = [0, 256], sizes = [1, 256], strides = [1, 1]} : vector<1x768xf32> to vector<1x256xf32>
    %217 = vector.extract_strided_slice %214 {offsets = [0, 512], sizes = [1, 256], strides = [1, 1]} : vector<1x768xf32> to vector<1x256xf32>
    %218 = vector.extract_strided_slice %213 {offsets = [0, 0], sizes = [1, 256], strides = [1, 1]} : vector<1x768xf32> to vector<1x256xf32>
    %219 = vector.extract_strided_slice %213 {offsets = [0, 256], sizes = [1, 256], strides = [1, 1]} : vector<1x768xf32> to vector<1x256xf32>
    %220 = vector.extract_strided_slice %213 {offsets = [0, 512], sizes = [1, 256], strides = [1, 1]} : vector<1x768xf32> to vector<1x256xf32>
    %221 = arith.addf %215, %218 : vector<1x256xf32>
    %222 = arith.negf %221 : vector<1x256xf32>
    %223 = math.exp %222 : vector<1x256xf32>
    %cst_63 = arith.constant 1.000000e+00 : f32
    %224 = vector.broadcast %cst_63 : f32 to vector<1x256xf32>
    %225 = arith.addf %224, %223 : vector<1x256xf32>
    %226 = arith.divf %224, %225 : vector<1x256xf32>
    %227 = arith.addf %216, %219 : vector<1x256xf32>
    %228 = arith.negf %227 : vector<1x256xf32>
    %229 = math.exp %228 : vector<1x256xf32>
    %cst_64 = arith.constant 1.000000e+00 : f32
    %230 = vector.broadcast %cst_64 : f32 to vector<1x256xf32>
    %231 = arith.addf %230, %229 : vector<1x256xf32>
    %232 = arith.divf %230, %231 : vector<1x256xf32>
    %233 = arith.mulf %226, %220 : vector<1x256xf32>
    %234 = arith.addf %217, %233 : vector<1x256xf32>
    %235 = math.tanh %234 : vector<1x256xf32>
    %cst_65 = arith.constant 1.000000e+00 : f32
    %236 = vector.broadcast %cst_65 : f32 to vector<1x256xf32>
    %237 = arith.subf %236, %232 : vector<1x256xf32>
    %238 = arith.mulf %237, %235 : vector<1x256xf32>
    %239 = arith.mulf %232, %210 : vector<1x256xf32>
    %240 = arith.addf %238, %239 : vector<1x256xf32>
    %c5_66 = arith.constant 5 : index
    %c0_67 = arith.constant 0 : index
    %241 = vector.load %arg8[%c5_66, %c0_67] : memref<8x256xf32, #tpu.memory_space<vmem>>, vector<1x256xf32>
    tpu.vector_store %arg8[%c5_66, %c0_67], %240 {strides = array<i32>} : memref<8x256xf32, #tpu.memory_space<vmem>>, vector<1x256xf32>,
    %cst_68 = arith.constant dense<0.000000e+00> : vector<1x768xf32>
    %242 = tpu.matmul %240, %59, %cst_68 {dimension_numbers = #tpu.dot_dimension_numbers<[1], [0], [0], [1], [0, 0, 1, 1], [], []>} : vector<1x256xf32>, vector<256x768xf32>, vector<1x768xf32> -> vector<1x768xf32>
    %243 = arith.addf %242, %60 : vector<1x768xf32>
    %244 = vector.extract_strided_slice %58 {offsets = [6, 0], sizes = [1, 768], strides = [1, 1]} : vector<8x768xf32> to vector<1x768xf32>
    %245 = vector.extract_strided_slice %244 {offsets = [0, 0], sizes = [1, 256], strides = [1, 1]} : vector<1x768xf32> to vector<1x256xf32>
    %246 = vector.extract_strided_slice %244 {offsets = [0, 256], sizes = [1, 256], strides = [1, 1]} : vector<1x768xf32> to vector<1x256xf32>
    %247 = vector.extract_strided_slice %244 {offsets = [0, 512], sizes = [1, 256], strides = [1, 1]} : vector<1x768xf32> to vector<1x256xf32>
    %248 = vector.extract_strided_slice %243 {offsets = [0, 0], sizes = [1, 256], strides = [1, 1]} : vector<1x768xf32> to vector<1x256xf32>
    %249 = vector.extract_strided_slice %243 {offsets = [0, 256], sizes = [1, 256], strides = [1, 1]} : vector<1x768xf32> to vector<1x256xf32>
    %250 = vector.extract_strided_slice %243 {offsets = [0, 512], sizes = [1, 256], strides = [1, 1]} : vector<1x768xf32> to vector<1x256xf32>
    %251 = arith.addf %245, %248 : vector<1x256xf32>
    %252 = arith.negf %251 : vector<1x256xf32>
    %253 = math.exp %252 : vector<1x256xf32>
    %cst_69 = arith.constant 1.000000e+00 : f32
    %254 = vector.broadcast %cst_69 : f32 to vector<1x256xf32>
    %255 = arith.addf %254, %253 : vector<1x256xf32>
    %256 = arith.divf %254, %255 : vector<1x256xf32>
    %257 = arith.addf %246, %249 : vector<1x256xf32>
    %258 = arith.negf %257 : vector<1x256xf32>
    %259 = math.exp %258 : vector<1x256xf32>
    %cst_70 = arith.constant 1.000000e+00 : f32
    %260 = vector.broadcast %cst_70 : f32 to vector<1x256xf32>
    %261 = arith.addf %260, %259 : vector<1x256xf32>
    %262 = arith.divf %260, %261 : vector<1x256xf32>
    %263 = arith.mulf %256, %250 : vector<1x256xf32>
    %264 = arith.addf %247, %263 : vector<1x256xf32>
    %265 = math.tanh %264 : vector<1x256xf32>
    %cst_71 = arith.constant 1.000000e+00 : f32
    %266 = vector.broadcast %cst_71 : f32 to vector<1x256xf32>
    %267 = arith.subf %266, %262 : vector<1x256xf32>
    %268 = arith.mulf %267, %265 : vector<1x256xf32>
    %269 = arith.mulf %262, %240 : vector<1x256xf32>
    %270 = arith.addf %268, %269 : vector<1x256xf32>
    %c6_72 = arith.constant 6 : index
    %c0_73 = arith.constant 0 : index
    %271 = vector.load %arg8[%c6_72, %c0_73] : memref<8x256xf32, #tpu.memory_space<vmem>>, vector<1x256xf32>
    tpu.vector_store %arg8[%c6_72, %c0_73], %270 {strides = array<i32>} : memref<8x256xf32, #tpu.memory_space<vmem>>, vector<1x256xf32>,
    %cst_74 = arith.constant dense<0.000000e+00> : vector<1x768xf32>
    %272 = tpu.matmul %270, %59, %cst_74 {dimension_numbers = #tpu.dot_dimension_numbers<[1], [0], [0], [1], [0, 0, 1, 1], [], []>} : vector<1x256xf32>, vector<256x768xf32>, vector<1x768xf32> -> vector<1x768xf32>
    %273 = arith.addf %272, %60 : vector<1x768xf32>
    %274 = vector.extract_strided_slice %58 {offsets = [7, 0], sizes = [1, 768], strides = [1, 1]} : vector<8x768xf32> to vector<1x768xf32>
    %275 = vector.extract_strided_slice %274 {offsets = [0, 0], sizes = [1, 256], strides = [1, 1]} : vector<1x768xf32> to vector<1x256xf32>
    %276 = vector.extract_strided_slice %274 {offsets = [0, 256], sizes = [1, 256], strides = [1, 1]} : vector<1x768xf32> to vector<1x256xf32>
    %277 = vector.extract_strided_slice %274 {offsets = [0, 512], sizes = [1, 256], strides = [1, 1]} : vector<1x768xf32> to vector<1x256xf32>
    %278 = vector.extract_strided_slice %273 {offsets = [0, 0], sizes = [1, 256], strides = [1, 1]} : vector<1x768xf32> to vector<1x256xf32>
    %279 = vector.extract_strided_slice %273 {offsets = [0, 256], sizes = [1, 256], strides = [1, 1]} : vector<1x768xf32> to vector<1x256xf32>
    %280 = vector.extract_strided_slice %273 {offsets = [0, 512], sizes = [1, 256], strides = [1, 1]} : vector<1x768xf32> to vector<1x256xf32>
    %281 = arith.addf %275, %278 : vector<1x256xf32>
    %282 = arith.negf %281 : vector<1x256xf32>
    %283 = math.exp %282 : vector<1x256xf32>
    %cst_75 = arith.constant 1.000000e+00 : f32
    %284 = vector.broadcast %cst_75 : f32 to vector<1x256xf32>
    %285 = arith.addf %284, %283 : vector<1x256xf32>
    %286 = arith.divf %284, %285 : vector<1x256xf32>
    %287 = arith.addf %276, %279 : vector<1x256xf32>
    %288 = arith.negf %287 : vector<1x256xf32>
    %289 = math.exp %288 : vector<1x256xf32>
    %cst_76 = arith.constant 1.000000e+00 : f32
    %290 = vector.broadcast %cst_76 : f32 to vector<1x256xf32>
    %291 = arith.addf %290, %289 : vector<1x256xf32>
    %292 = arith.divf %290, %291 : vector<1x256xf32>
    %293 = arith.mulf %286, %280 : vector<1x256xf32>
    %294 = arith.addf %277, %293 : vector<1x256xf32>
    %295 = math.tanh %294 : vector<1x256xf32>
    %cst_77 = arith.constant 1.000000e+00 : f32
    %296 = vector.broadcast %cst_77 : f32 to vector<1x256xf32>
    %297 = arith.subf %296, %292 : vector<1x256xf32>
    %298 = arith.mulf %297, %295 : vector<1x256xf32>
    %299 = arith.mulf %292, %270 : vector<1x256xf32>
    %300 = arith.addf %298, %299 : vector<1x256xf32>
    %c7_78 = arith.constant 7 : index
    %c0_79 = arith.constant 0 : index
    %301 = vector.load %arg8[%c7_78, %c0_79] : memref<8x256xf32, #tpu.memory_space<vmem>>, vector<1x256xf32>
    tpu.vector_store %arg8[%c7_78, %c0_79], %300 {strides = array<i32>} : memref<8x256xf32, #tpu.memory_space<vmem>>, vector<1x256xf32>,
    %c0_80 = arith.constant 0 : index
    %c0_81 = arith.constant 0 : index
    %302 = vector.load %arg10[%c0_80, %c0_81] : memref<1x256xf32, #tpu.memory_space<vmem>>, vector<1x256xf32>
    tpu.vector_store %arg10[%c0_80, %c0_81], %300 {strides = array<i32>} : memref<1x256xf32, #tpu.memory_space<vmem>>, vector<1x256xf32>,
    return
  }
  func.func @transform_0(%arg0: i32, %arg1: memref<24xi32, #tpu.memory_space<smem>>) -> (i32, i32) {
    %c0_i32 = arith.constant 0 : i32
    %c0_i32_0 = arith.constant 0 : i32
    %c0_i32_1 = arith.constant 0 : i32
    return %c0_i32, %c0_i32_0 : i32, i32
  }
  func.func @transform_1(%arg0: i32, %arg1: memref<24xi32, #tpu.memory_space<smem>>) -> (i32, i32) {
    %c0_i32 = arith.constant 0 : i32
    %c0_i32_0 = arith.constant 0 : i32
    %c0_i32_1 = arith.constant 0 : i32
    return %c0_i32, %c0_i32_0 : i32, i32
  }
  func.func @transform_2(%arg0: i32, %arg1: memref<24xi32, #tpu.memory_space<smem>>) -> (i32, i32) {
    %c0_i32 = arith.constant 0 : i32
    %c0_i32_0 = arith.constant 0 : i32
    %c0_i32_1 = arith.constant 0 : i32
    return %c0_i32, %c0_i32_0 : i32, i32
  }
  func.func @transform_3(%arg0: i32, %arg1: memref<24xi32, #tpu.memory_space<smem>>) -> (i32, i32) {
    %c0_i32 = arith.constant 0 : i32
    %c0_i32_0 = arith.constant 0 : i32
    %c0_i32_1 = arith.constant 0 : i32
    return %c0_i32, %c0_i32_0 : i32, i32
  }
  func.func @transform_4(%arg0: i32, %arg1: memref<24xi32, #tpu.memory_space<smem>>) -> (i32, i32) {
    %c0_i32 = arith.constant 0 : i32
    %c0_i32_0 = arith.constant 0 : i32
    %c0_i32_1 = arith.constant 0 : i32
    return %c0_i32, %c0_i32_0 : i32, i32
  }
  func.func @transform_5(%arg0: i32, %arg1: memref<24xi32, #tpu.memory_space<smem>>) -> (i32, i32) {
    %c0_i32 = arith.constant 0 : i32
    %c0_i32_0 = arith.constant 0 : i32
    %c0_i32_1 = arith.constant 0 : i32
    return %c0_i32, %c0_i32_0 : i32, i32
  }
  func.func @transform_6(%arg0: i32, %arg1: memref<24xi32, #tpu.memory_space<smem>>) -> (i32, i32) {
    %c0_i32 = arith.constant 0 : i32
    %c0_i32_0 = arith.constant 0 : i32
    return %arg0, %c0_i32 : i32, i32
  }
  func.func @transform_7(%arg0: i32, %arg1: memref<24xi32, #tpu.memory_space<smem>>) -> (i32, i32) {
    %c0_i32 = arith.constant 0 : i32
    %c0_i32_0 = arith.constant 0 : i32
    return %arg0, %c0_i32 : i32, i32
  }
}

</mosaic_0001>

<llo_original>
// kernel: tpu_custom_call.1
$region0: #{tpu_custom_call.1}
  #allocation0 [shape = 'u32[]', space=smem, size = 0x4, offset = 0x4, fixed_abs, tag = 'smem constant byte address 0x4 - core index']
  #allocation1 [shape = 'u32[144,128]{1,0:T(1,128)}', space=vmem, size = 0x12000, scoped, tag = 'internal scratch']
  #allocation2 [shape = 'f32[1,256]{1,0:T(1,128)}', space=vmem, size = 0x400, scoped, tag = 'scratch operand']
  #allocation3 [shape = 'f32[8,256]{1,0:T(8,128)}', space=vmem, size = 0x2000, scoped, tag = 'scratch operand']
  #allocation4 [shape = 's32[1]{0}', space=sflag, size = 0x4, scoped, tag = 'scoped memory for tpu_custom_call.1']
  #allocation5 [shape = 'u8[512]{0}', space=smem, size = 0x200, scoped, tag = 'prefetched SMEM operand 0']
  %s0 = inlined_call_operand.hbm [shape: s32[24], index: 0, kind: input, shape index: {}]
  %s1 = inlined_call_operand.vmem [shape: f32[1,256], index: 1, kind: input, shape index: {}]
  %s2 = inlined_call_operand.hbm [shape: f32[56,256], index: 2, kind: input, shape index: {}]
  %s3 = inlined_call_operand.hbm [shape: f32[256,768], index: 3, kind: input, shape index: {}]
  %s4 = inlined_call_operand.hbm [shape: f32[256,768], index: 4, kind: input, shape index: {}]
  %s5 = inlined_call_operand.vmem [shape: f32[1,768], index: 5, kind: input, shape index: {}]
  %s6 = inlined_call_operand.vmem [shape: f32[1,768], index: 6, kind: input, shape index: {}]
  %s7 = inlined_call_operand.hbm [shape: f32[24,256], index: 7, kind: output, shape index: {0}]
  %s8 = inlined_call_operand.hbm [shape: f32[24,256], index: 8, kind: output, shape index: {1}]
  %9 = xla_tuple %s7, %s8
  %s10 = sld [smem:[#allocation0]]
  $region81: #{tpu_custom_call.1} parent=0
    _
  %s12 = ssub.s32 1, %s10
  %s13 = scalar_select 0, %s12, %s10
  %15 = dma.hbm_to_smem %s0, 16, [#allocation5], [#allocation4]
  %16 = dma.done [#allocation4], 16
  %17 = sfence
  $region1: #{tpu_custom_call.1} parent=0
    #allocation6 [shape = 'u8[57344]{0}', space=vmem, size = 0xe000, scoped, tag = 'input window, operand 2, single buffered']
    #allocation7 [shape = 's32[2]{0}', space=sflag, size = 0x8, scoped, tag = 'scoped memory for tpu_custom_call.1']
    #allocation8 [shape = 's32[2]{0}', space=sflag, size = 0x8, scoped, tag = 'scoped memory for tpu_custom_call.1']
    #allocation9 [shape = 'u8[786432]{0}', space=vmem, size = 0xc0000, scoped, tag = 'input window, operand 3, single buffered']
    #allocation10 [shape = 's32[1]{0}', space=sflag, size = 0x4, scoped, tag = 'scoped memory for tpu_custom_call.1']
    #allocation11 [shape = 'u8[786432]{0}', space=vmem, size = 0xc0000, scoped, tag = 'input window, operand 4, single buffered']
    #allocation12 [shape = 'u8[16384]{0}', space=vmem, size = 0x4000, scoped, tag = 'output window, operand 0']
    #allocation13 [shape = 'u8[16384]{0}', space=vmem, size = 0x4000, scoped, tag = 'output window, operand 1']
    #allocation14 [shape = 's32[2]{0}', space=sflag, size = 0x8, scoped, tag = 'scoped memory for tpu_custom_call.1']
    %18 = vsyncpa [#allocation7], 0
    %19 = vsyncpa [#allocation10], 0
    %20 = vsyncpa [#allocation8], 0
    %s21 = scalar_lea.sflag [#allocation8], 1
    %22 = vsyncpa %s21, 0
    %23 = vsyncpa [#allocation14], 0
    %s24 = scalar_lea.sflag [#allocation14], 1
    %25 = vsyncpa %s24, 0
    loop: start=0, step=1, limit=5
    $region2: #{tpu_custom_call.1} parent=1 // loop_pre_header
      _
    $region3: #{tpu_custom_call.1} parent=1 // loop_header
      %s27 = sphi 0, %s31
      %p28 = scmp.ge.s32.totalorder %s27, 5
      %s35 = sphi 0, %s35
      %s37 = sphi 0, %s35
      %s38 = sphi 0, %s37
      %s52 = sphi 0, %s38
      %s56 = sphi 0, %s56
      %s58 = sphi 0, %s56
      %s59 = sphi 0, %s58
      %s73 = sphi 0, %s59
      %s77 = sphi 0, %s77
      %s79 = sphi 0, %s77
      %s80 = sphi 0, %s79
      %s94 = sphi 0, %s80
      %s98 = sphi 0, %s98
      %s100 = sphi 0, %s98
      %s101 = sphi 0, %s100
      %s115 = sphi 0, %s101
      %s119 = sphi 0, %s119
      %s121 = sphi 0, %s119
      %s122 = sphi 0, %s121
      %s136 = sphi 0, %s122
      %s140 = sphi 0, %s140
      %s142 = sphi 0, %s140
      %s143 = sphi 0, %s142
      %s157 = sphi 0, %s143
      %s163 = sphi 0, %s165
      %s166 = sphi 0, %s163
      %s167 = sphi 0, %s166
      %s183 = sphi 0, %s167
      %s189 = sphi 0, %s191
      %s192 = sphi 0, %s189
      %s193 = sphi 0, %s192
      %s209 = sphi 0, %s193
    $region4: #{tpu_custom_call.1} parent=1 // loop_header_branch
      %30 = sbr.rel (%p28) target = $region8
    $region5: #{tpu_custom_call.1} parent=1 // loop_body
      %s32 = ssub.s32 %s27, 1
      %s33 = ssub.s32 %s27, 2
      %s34 = sadd.s32 %s27, 1
      %s36 = sadd.s32 %s35, 1
      %p39 = scmp.eq.s32.totalorder %s27, 2
      %p40 = scmp.ne.s32.totalorder %s35, %s37
      %p41 = scmp.eq.s32.totalorder %s27, 0
      %p42 = por %p40, %p41
      %p43 = scmp.ne.s32.totalorder %s35, %s37
      %p44 = scmp.eq.s32.totalorder %s32, 2
      %p45 = por %p43, %p44
      %p46 = scmp.ne.s32.totalorder %s37, %s38
      %p47 = scmp.eq.s32.totalorder %s32, 0
      %p48 = por %p46, %p47
      %p49 = scmp.ne.s32.totalorder %s37, %s38
      %p50 = scmp.eq.s32.totalorder %s33, 2
      %p51 = por %p49, %p50
      %p53 = scmp.ne.s32.totalorder %s38, %s52
      %p54 = scmp.eq.s32.totalorder %s33, 0
      %p55 = por %p53, %p54
      %s57 = sadd.s32 %s56, 1
      %p60 = scmp.eq.s32.totalorder %s27, 2
      %p61 = scmp.ne.s32.totalorder %s56, %s58
      %p62 = scmp.eq.s32.totalorder %s27, 0
      %p63 = por %p61, %p62
      %p64 = scmp.ne.s32.totalorder %s56, %s58
      %p65 = scmp.eq.s32.totalorder %s32, 2
      %p66 = por %p64, %p65
      %p67 = scmp.ne.s32.totalorder %s58, %s59
      %p68 = scmp.eq.s32.totalorder %s32, 0
      %p69 = por %p67, %p68
      %p70 = scmp.ne.s32.totalorder %s58, %s59
      %p71 = scmp.eq.s32.totalorder %s33, 2
      %p72 = por %p70, %p71
      %p74 = scmp.ne.s32.totalorder %s59, %s73
      %p75 = scmp.eq.s32.totalorder %s33, 0
      %p76 = por %p74, %p75
      %s78 = sadd.s32 %s77, 1
      %p81 = scmp.eq.s32.totalorder %s27, 2
      %p82 = scmp.ne.s32.totalorder %s77, %s79
      %p83 = scmp.eq.s32.totalorder %s27, 0
      %p84 = por %p82, %p83
      %p85 = scmp.ne.s32.totalorder %s77, %s79
      %p86 = scmp.eq.s32.totalorder %s32, 2
      %p87 = por %p85, %p86
      %p88 = scmp.ne.s32.totalorder %s79, %s80
      %p89 = scmp.eq.s32.totalorder %s32, 0
      %p90 = por %p88, %p89
      %p91 = scmp.ne.s32.totalorder %s79, %s80
      %p92 = scmp.eq.s32.totalorder %s33, 2
      %p93 = por %p91, %p92
      %p95 = scmp.ne.s32.totalorder %s80, %s94
      %p96 = scmp.eq.s32.totalorder %s33, 0
      %p97 = por %p95, %p96
      %s99 = sadd.s32 %s98, 1
      %p102 = scmp.eq.s32.totalorder %s27, 2
      %p103 = scmp.ne.s32.totalorder %s98, %s100
      %p104 = scmp.eq.s32.totalorder %s27, 0
      %p105 = por %p103, %p104
      %p106 = scmp.ne.s32.totalorder %s98, %s100
      %p107 = scmp.eq.s32.totalorder %s32, 2
      %p108 = por %p106, %p107
      %p109 = scmp.ne.s32.totalorder %s100, %s101
      %p110 = scmp.eq.s32.totalorder %s32, 0
      %p111 = por %p109, %p110
      %p112 = scmp.ne.s32.totalorder %s100, %s101
      %p113 = scmp.eq.s32.totalorder %s33, 2
      %p114 = por %p112, %p113
      %p116 = scmp.ne.s32.totalorder %s101, %s115
      %p117 = scmp.eq.s32.totalorder %s33, 0
      %p118 = por %p116, %p117
      %s120 = sadd.s32 %s119, 1
      %p123 = scmp.eq.s32.totalorder %s27, 2
      %p124 = scmp.ne.s32.totalorder %s119, %s121
      %p125 = scmp.eq.s32.totalorder %s27, 0
      %p126 = por %p124, %p125
      %p127 = scmp.ne.s32.totalorder %s119, %s121
      %p128 = scmp.eq.s32.totalorder %s32, 2
      %p129 = por %p127, %p128
      %p130 = scmp.ne.s32.totalorder %s121, %s122
      %p131 = scmp.eq.s32.totalorder %s32, 0
      %p132 = por %p130, %p131
      %p133 = scmp.ne.s32.totalorder %s121, %s122
      %p134 = scmp.eq.s32.totalorder %s33, 2
      %p135 = por %p133, %p134
      %p137 = scmp.ne.s32.totalorder %s122, %s136
      %p138 = scmp.eq.s32.totalorder %s33, 0
      %p139 = por %p137, %p138
      %s141 = sadd.s32 %s140, 1
      %p144 = scmp.eq.s32.totalorder %s27, 2
      %p145 = scmp.ne.s32.totalorder %s140, %s142
      %p146 = scmp.eq.s32.totalorder %s27, 0
      %p147 = por %p145, %p146
      %p148 = scmp.ne.s32.totalorder %s140, %s142
      %p149 = scmp.eq.s32.totalorder %s32, 2
      %p150 = por %p148, %p149
      %p151 = scmp.ne.s32.totalorder %s142, %s143
      %p152 = scmp.eq.s32.totalorder %s32, 0
      %p153 = por %p151, %p152
      %p154 = scmp.ne.s32.totalorder %s142, %s143
      %p155 = scmp.eq.s32.totalorder %s33, 2
      %p156 = por %p154, %p155
      %p158 = scmp.ne.s32.totalorder %s143, %s157
      %p159 = scmp.eq.s32.totalorder %s33, 0
      %p160 = por %p158, %p159
      %s161 = ssub.s32 %s27, %s34
      %p162 = scmp.eq.s32.totalorder %s161, 0
      %s164 = sadd.s32 %s163, 1
      %s165 = scalar_select %p162, %s163, %s164
      %p168 = pneg %p162
      %p169 = scmp.eq.s32.totalorder %s27, 2
      %p170 = por %p168, %p169
      %p171 = scmp.ne.s32.totalorder %s163, %s166
      %p172 = scmp.eq.s32.totalorder %s27, 0
      %p173 = por %p171, %p172
      %p174 = scmp.ne.s32.totalorder %s163, %s166
      %p175 = scmp.eq.s32.totalorder %s32, 2
      %p176 = por %p174, %p175
      %p177 = scmp.ne.s32.totalorder %s166, %s167
      %p178 = scmp.eq.s32.totalorder %s32, 0
      %p179 = por %p177, %p178
      %p180 = scmp.ne.s32.totalorder %s166, %s167
      %p181 = scmp.eq.s32.totalorder %s33, 2
      %p182 = por %p180, %p181
      %p184 = scmp.ne.s32.totalorder %s167, %s183
      %p185 = scmp.eq.s32.totalorder %s33, 0
      %p186 = por %p184, %p185
      %s187 = ssub.s32 %s27, %s34
      %p188 = scmp.eq.s32.totalorder %s187, 0
      %s190 = sadd.s32 %s189, 1
      %s191 = scalar_select %p188, %s189, %s190
      %p194 = pneg %p188
      %p195 = scmp.eq.s32.totalorder %s27, 2
      %p196 = por %p194, %p195
      %p197 = scmp.ne.s32.totalorder %s189, %s192
      %p198 = scmp.eq.s32.totalorder %s27, 0
      %p199 = por %p197, %p198
      %p200 = scmp.ne.s32.totalorder %s189, %s192
      %p201 = scmp.eq.s32.totalorder %s32, 2
      %p202 = por %p200, %p201
      %p203 = scmp.ne.s32.totalorder %s192, %s193
      %p204 = scmp.eq.s32.totalorder %s32, 0
      %p205 = por %p203, %p204
      %p206 = scmp.ne.s32.totalorder %s192, %s193
      %p207 = scmp.eq.s32.totalorder %s33, 2
      %p208 = por %p206, %p207
      %p210 = scmp.ne.s32.totalorder %s193, %s209
      %p211 = scmp.eq.s32.totalorder %s33, 0
      %p212 = por %p210, %p211
      %p213 = scmp.le.s32.totalorder 1, %s27
      %p214 = scmp.lt.s32.totalorder %s27, 4
      %p215 = pnand %p213, %p214
      %p216 = pneg %p215
      // Predicated region
      $region9: #{tpu_custom_call.1} parent=5 // pred_check
        _
      $region10: #{tpu_custom_call.1} parent=5 // pred_check_branch
        %218 = sbr.rel (%p215) target = $region12
      $region11: #{tpu_custom_call.1} parent=5 // pred_region
        %s219 = ssub.s32 %s27, 1
        // Predicated region
        $region13: #{tpu_custom_call.1} parent=11 // pred_check
          %p220 = pneg %p48
        $region14: #{tpu_custom_call.1} parent=11 // pred_check_branch
          %222 = sbr.rel (%p220) target = $region16
        $region15: #{tpu_custom_call.1} parent=11 // pred_region
          _
        $region16: #{tpu_custom_call.1} parent=11 // pred_fallthru
          _
        // Predicated region
        $region17: #{tpu_custom_call.1} parent=11 // pred_check
          %p223 = pneg %p69
        $region18: #{tpu_custom_call.1} parent=11 // pred_check_branch
          %225 = sbr.rel (%p223) target = $region20
        $region19: #{tpu_custom_call.1} parent=11 // pred_region
          %s227 = ssub.s32 1792, 1792
          %228 = vsyncadd [#allocation7], %s227
          %s229 = sshll.u32 [#allocation6], 4
          %s230 = int_to_ptr.vmem [resolvable:$true] %s229
          %235 = dma.hbm_to_vmem [thread:$0]  %s2, 1792, %s230, [#allocation7], 256, 256, 16
        $region20: #{tpu_custom_call.1} parent=11 // pred_fallthru
          _
        // Predicated region
        $region21: #{tpu_custom_call.1} parent=11 // pred_check
          %p236 = pneg %p90
        $region22: #{tpu_custom_call.1} parent=11 // pred_check_branch
          %238 = sbr.rel (%p236) target = $region24
        $region23: #{tpu_custom_call.1} parent=11 // pred_region
          %s240 = ssub.s32 24576, 24576
          %241 = vsyncadd [#allocation10], %s240
          %s242 = sshll.u32 [#allocation9], 4
          %s243 = int_to_ptr.vmem [resolvable:$true] %s242
          %248 = dma.hbm_to_vmem [thread:$0]  %s3, 24576, %s243, [#allocation10], 768, 768, 48
        $region24: #{tpu_custom_call.1} parent=11 // pred_fallthru
          _
        // Predicated region
        $region25: #{tpu_custom_call.1} parent=11 // pred_check
          %p249 = pneg %p111
        $region26: #{tpu_custom_call.1} parent=11 // pred_check_branch
          %251 = sbr.rel (%p249) target = $region28
        $region27: #{tpu_custom_call.1} parent=11 // pred_region
          %s253 = ssub.s32 24576, 24576
          %254 = vsyncadd [#allocation10], %s253
          %s255 = sshll.u32 [#allocation11], 4
          %s256 = int_to_ptr.vmem [resolvable:$true] %s255
          %261 = dma.hbm_to_vmem [thread:$0]  %s4, 24576, %s256, [#allocation10], 768, 768, 48
        $region28: #{tpu_custom_call.1} parent=11 // pred_fallthru
          _
        // Predicated region
        $region29: #{tpu_custom_call.1} parent=11 // pred_check
          %p262 = pneg %p132
        $region30: #{tpu_custom_call.1} parent=11 // pred_check_branch
          %264 = sbr.rel (%p262) target = $region32
        $region31: #{tpu_custom_call.1} parent=11 // pred_region
          _
        $region32: #{tpu_custom_call.1} parent=11 // pred_fallthru
          _
        // Predicated region
        $region33: #{tpu_custom_call.1} parent=11 // pred_check
          %p265 = pneg %p153
        $region34: #{tpu_custom_call.1} parent=11 // pred_check_branch
          %267 = sbr.rel (%p265) target = $region36
        $region35: #{tpu_custom_call.1} parent=11 // pred_region
          _
        $region36: #{tpu_custom_call.1} parent=11 // pred_fallthru
          _
      $region12: #{tpu_custom_call.1} parent=5 // pred_fallthru
        _
      %p268 = scmp.lt.s32.totalorder %s27, 3
      // Predicated region
      $region37: #{tpu_custom_call.1} parent=5 // pred_check
        %p269 = pneg %p268
      $region38: #{tpu_custom_call.1} parent=5 // pred_check_branch
        %271 = sbr.rel (%p269) target = $region40
      $region39: #{tpu_custom_call.1} parent=5 // pred_region
        _
      $region40: #{tpu_custom_call.1} parent=5 // pred_fallthru
        _
      %p272 = scmp.le.s32.totalorder 1, %s27
      %p273 = scmp.lt.s32.totalorder %s27, 4
      %p274 = pnand %p272, %p273
      %p275 = pneg %p274
      // Predicated region
      $region41: #{tpu_custom_call.1} parent=5 // pred_check
        _
      $region42: #{tpu_custom_call.1} parent=5 // pred_check_branch
        %277 = sbr.rel (%p274) target = $region44
      $region43: #{tpu_custom_call.1} parent=5 // pred_region
        %s278 = ssub.s32 %s27, 1
        // Predicated region
        $region45: #{tpu_custom_call.1} parent=43 // pred_check
          %p279 = pneg %p69
        $region46: #{tpu_custom_call.1} parent=43 // pred_check_branch
          %281 = sbr.rel (%p279) target = $region48
        $region47: #{tpu_custom_call.1} parent=43 // pred_region
          %282 = dma.done [#allocation7], 1792
        $region48: #{tpu_custom_call.1} parent=43 // pred_fallthru
          _
        // Predicated region
        $region49: #{tpu_custom_call.1} parent=43 // pred_check
          %p283 = pneg %p90
        $region50: #{tpu_custom_call.1} parent=43 // pred_check_branch
          %285 = sbr.rel (%p283) target = $region52
        $region51: #{tpu_custom_call.1} parent=43 // pred_region
          %286 = dma.done [#allocation10], 24576
        $region52: #{tpu_custom_call.1} parent=43 // pred_fallthru
          _
        // Predicated region
        $region53: #{tpu_custom_call.1} parent=43 // pred_check
          %p287 = pneg %p111
        $region54: #{tpu_custom_call.1} parent=43 // pred_check_branch
          %289 = sbr.rel (%p287) target = $region56
        $region55: #{tpu_custom_call.1} parent=43 // pred_region
          %290 = dma.done [#allocation10], 24576
        $region56: #{tpu_custom_call.1} parent=43 // pred_fallthru
          _
        %p291 = pneg %p48
        %p292 = pneg %p45
        %p293 = pneg %p69
        %p294 = pneg %p66
        %p295 = pneg %p90
        %p296 = pneg %p87
        %p297 = pneg %p111
        %p298 = pneg %p108
        %p299 = pneg %p132
        %p300 = pneg %p129
        %p301 = pneg %p153
        %p302 = pneg %p150
        %p303 = pneg %p179
        %p304 = pneg %p176
        %s305 = sand.u32 %s166, 1
        %s306 = scalar_lea.sflag [#allocation8], %s305
        %s307 = sand.u32 %s166, 1
        %s308 = smul.addr %s307, 16
        %s309 = scalar_lea.vmem [#allocation12], %s308
        %p310 = pneg %p205
        %p311 = pneg %p202
        %s312 = sand.u32 %s192, 1
        %s313 = scalar_lea.sflag [#allocation14], %s312
        %s314 = sand.u32 %s192, 1
        %s315 = smul.addr %s314, 16
        %s316 = scalar_lea.vmem [#allocation13], %s315
        %p317 = scmp.eq.s32.totalorder %s32, 0
        // Predicated region
        $region57: #{tpu_custom_call.1} parent=43 // pred_check
          %p318 = pneg %p317
        $region58: #{tpu_custom_call.1} parent=43 // pred_check_branch
          %320 = sbr.rel (%p318) target = $region60
        $region59: #{tpu_custom_call.1} parent=43 // pred_region
          %v321 = vld [vmem:[%s1] sm:$0x3]
          %v322 = vlaneseq
          %vm323 = vcmp.ge.s32.totalorder %v322, 0
          %vm324 = vcmp.lt.s32.totalorder %v322, 256
          %vm325 = vmand %vm323, %vm324
          %326 = vst.msk [vmem:[#allocation2] sm:$0x3] %vm325, %v321
        $region60: #{tpu_custom_call.1} parent=43 // pred_fallthru
          _
        %s327 = smul.u32 %s32, 8
        %s328 = sld [smem:[#allocation5 + %s327]]
        %s329 = sshra.s32 %s328, 3
        %s330 = sand.u32 %s328, 7
        %s331 = sshra.s32 %s328, 3
        %s332 = sand.u32 %s328, 7
        %s333 = smul.u32 %s329, 2
        %s334 = smul.u32 %s333, 8
        %s335 = sadd.s32 %s334, %s332
        %s336 = scalar_lea.vmem [#allocation6], %s335
        %v337 = vld [vmem:[%s336] ss:$8 sm:$0x3]
        %v338 = vlaneseq
        %vm339 = vcmp.ge.s32.totalorder %v338, 0
        %vm340 = vcmp.lt.s32.totalorder %v338, 256
        %vm341 = vmand %vm339, %vm340
        %342 = vst.msk [vmem:[#allocation3] ss:$8 sm:$0x3] %vm341, %v337
        %343 = vst.msk [vmem:[#allocation3] ss:$8 sm:$0x0] %vm341, %v337
        %s344 = sadd.s32 %s327, 1
        %s345 = sld [smem:[#allocation5 + %s344]]
        %s346 = sshra.s32 %s345, 3
        %s347 = sand.u32 %s345, 7
        %s348 = sshra.s32 %s345, 3
        %s349 = sand.u32 %s345, 7
        %s350 = smul.u32 %s346, 2
        %s351 = smul.u32 %s350, 8
        %s352 = sadd.s32 %s351, %s349
        %s353 = scalar_lea.vmem [#allocation6], %s352
        %v354 = vld [vmem:[%s353] ss:$8 sm:$0x3]
        %s355 = scalar_lea.vmem [#allocation3], 1
        %356 = vst.msk [vmem:[%s355] ss:$8 sm:$0x3] %vm341, %v354
        %357 = vst.msk [vmem:[%s355] ss:$8 sm:$0x0] %vm341, %v354
        %s358 = sadd.s32 %s327, 2
        %s359 = sld [smem:[#allocation5 + %s358]]
        %s360 = sshra.s32 %s359, 3
        %s361 = sand.u32 %s359, 7
        %s362 = sshra.s32 %s359, 3
        %s363 = sand.u32 %s359, 7
        %s364 = smul.u32 %s360, 2
        %s365 = smul.u32 %s364, 8
        %s366 = sadd.s32 %s365, %s363
        %s367 = scalar_lea.vmem [#allocation6], %s366
        %v368 = vld [vmem:[%s367] ss:$8 sm:$0x3]
        %s369 = scalar_lea.vmem [#allocation3], 2
        %370 = vst.msk [vmem:[%s369] ss:$8 sm:$0x3] %vm341, %v368
        %371 = vst.msk [vmem:[%s369] ss:$8 sm:$0x0] %vm341, %v368
        %s372 = sadd.s32 %s327, 3
        %s373 = sld [smem:[#allocation5 + %s372]]
        %s374 = sshra.s32 %s373, 3
        %s375 = sand.u32 %s373, 7
        %s376 = sshra.s32 %s373, 3
        %s377 = sand.u32 %s373, 7
        %s378 = smul.u32 %s374, 2
        %s379 = smul.u32 %s378, 8
        %s380 = sadd.s32 %s379, %s377
        %s381 = scalar_lea.vmem [#allocation6], %s380
        %v382 = vld [vmem:[%s381] ss:$8 sm:$0x3]
        %s383 = scalar_lea.vmem [#allocation3], 3
        %384 = vst.msk [vmem:[%s383] ss:$8 sm:$0x3] %vm341, %v382
        %385 = vst.msk [vmem:[%s383] ss:$8 sm:$0x0] %vm341, %v382
        %s386 = sadd.s32 %s327, 4
        %s387 = sld [smem:[#allocation5 + %s386]]
        %s388 = sshra.s32 %s387, 3
        %s389 = sand.u32 %s387, 7
        %s390 = sshra.s32 %s387, 3
        %s391 = sand.u32 %s387, 7
        %s392 = smul.u32 %s388, 2
        %s393 = smul.u32 %s392, 8
        %s394 = sadd.s32 %s393, %s391
        %s395 = scalar_lea.vmem [#allocation6], %s394
        %v396 = vld [vmem:[%s395] ss:$8 sm:$0x3]
        %s397 = scalar_lea.vmem [#allocation3], 4
        %398 = vst.msk [vmem:[%s397] ss:$8 sm:$0x3] %vm341, %v396
        %399 = vst.msk [vmem:[%s397] ss:$8 sm:$0x0] %vm341, %v396
        %s400 = sadd.s32 %s327, 5
        %s401 = sld [smem:[#allocation5 + %s400]]
        %s402 = sshra.s32 %s401, 3
        %s403 = sand.u32 %s401, 7
        %s404 = sshra.s32 %s401, 3
        %s405 = sand.u32 %s401, 7
        %s406 = smul.u32 %s402, 2
        %s407 = smul.u32 %s406, 8
        %s408 = sadd.s32 %s407, %s405
        %s409 = scalar_lea.vmem [#allocation6], %s408
        %v410 = vld [vmem:[%s409] ss:$8 sm:$0x3]
        %s411 = scalar_lea.vmem [#allocation3], 5
        %412 = vst.msk [vmem:[%s411] ss:$8 sm:$0x3] %vm341, %v410
        %413 = vst.msk [vmem:[%s411] ss:$8 sm:$0x0] %vm341, %v410
        %s414 = sadd.s32 %s327, 6
        %s415 = sld [smem:[#allocation5 + %s414]]
        %s416 = sshra.s32 %s415, 3
        %s417 = sand.u32 %s415, 7
        %s418 = sshra.s32 %s415, 3
        %s419 = sand.u32 %s415, 7
        %s420 = smul.u32 %s416, 2
        %s421 = smul.u32 %s420, 8
        %s422 = sadd.s32 %s421, %s419
        %s423 = scalar_lea.vmem [#allocation6], %s422
        %v424 = vld [vmem:[%s423] ss:$8 sm:$0x3]
        %s425 = scalar_lea.vmem [#allocation3], 6
        %426 = vst.msk [vmem:[%s425] ss:$8 sm:$0x3] %vm341, %v424
        %427 = vst.msk [vmem:[%s425] ss:$8 sm:$0x0] %vm341, %v424
        %s428 = sadd.s32 %s327, 7
        %s429 = sld [smem:[#allocation5 + %s428]]
        %s430 = sshra.s32 %s429, 3
        %s431 = sand.u32 %s429, 7
        %s432 = sshra.s32 %s429, 3
        %s433 = sand.u32 %s429, 7
        %s434 = smul.u32 %s430, 2
        %s435 = smul.u32 %s434, 8
        %s436 = sadd.s32 %s435, %s433
        %s437 = scalar_lea.vmem [#allocation6], %s436
        %v438 = vld [vmem:[%s437] ss:$8 sm:$0x3]
        %s439 = scalar_lea.vmem [#allocation3], 7
        %440 = vst.msk [vmem:[%s439] ss:$8 sm:$0x3] %vm341, %v438
        %441 = vst.msk [vmem:[%s439] ss:$8 sm:$0x0] %vm341, %v438
        %v442 = vld [vmem:[#allocation3] sm:$0xff]
        %v443 = vld [vmem:[#allocation3 + $0x8] sm:$0xff]
        %444 = vst [vmem:[%s316] sm:$0xff] %v442
        %445 = vst [vmem:[%s316 + $0x8] sm:$0xff] %v443
        %v446 = vld [vmem:[#allocation9] sm:$0xff]
        %v447 = vld [vmem:[#allocation9 + $0x8] sm:$0xff]
        %v448 = vld [vmem:[#allocation9 + $0x10] sm:$0xff]
        %v449 = vld [vmem:[#allocation9 + $0x18] sm:$0xff]
        %v450 = vld [vmem:[#allocation9 + $0x20] sm:$0xff]
        %v451 = vld [vmem:[#allocation9 + $0x28] sm:$0xff]
        %v452 = vld [vmem:[#allocation9 + $0x30] sm:$0xff]
        %v453 = vld [vmem:[#allocation9 + $0x38] sm:$0xff]
        %v454 = vld [vmem:[#allocation9 + $0x40] sm:$0xff]
        %v455 = vld [vmem:[#allocation9 + $0x48] sm:$0xff]
        %v456 = vld [vmem:[#allocation9 + $0x50] sm:$0xff]
        %v457 = vld [vmem:[#allocation9 + $0x58] sm:$0xff]
        %v458 = vld [vmem:[#allocation9 + $0x60] sm:$0xff]
        %v459 = vld [vmem:[#allocation9 + $0x68] sm:$0xff]
        %v460 = vld [vmem:[#allocation9 + $0x70] sm:$0xff]
        %v461 = vld [vmem:[#allocation9 + $0x78] sm:$0xff]
        %v462 = vld [vmem:[#allocation9 + $0x80] sm:$0xff]
        %v463 = vld [vmem:[#allocation9 + $0x88] sm:$0xff]
        %v464 = vld [vmem:[#allocation9 + $0x90] sm:$0xff]
        %v465 = vld [vmem:[#allocation9 + $0x98] sm:$0xff]
        %v466 = vld [vmem:[#allocation9 + $0xa0] sm:$0xff]
        %v467 = vld [vmem:[#allocation9 + $0xa8] sm:$0xff]
        %v468 = vld [vmem:[#allocation9 + $0xb0] sm:$0xff]
        %v469 = vld [vmem:[#allocation9 + $0xb8] sm:$0xff]
        %v470 = vld [vmem:[#allocation9 + $0xc0] sm:$0xff]
        %v471 = vld [vmem:[#allocation9 + $0xc8] sm:$0xff]
        %v472 = vld [vmem:[#allocation9 + $0xd0] sm:$0xff]
        %v473 = vld [vmem:[#allocation9 + $0xd8] sm:$0xff]
        %v474 = vld [vmem:[#allocation9 + $0xe0] sm:$0xff]
        %v475 = vld [vmem:[#allocation9 + $0xe8] sm:$0xff]
        %v476 = vld [vmem:[#allocation9 + $0xf0] sm:$0xff]
        %v477 = vld [vmem:[#allocation9 + $0xf8] sm:$0xff]
        %v478 = vld [vmem:[#allocation9 + $0x100] sm:$0xff]
        %v479 = vld [vmem:[#allocation9 + $0x108] sm:$0xff]
        %v480 = vld [vmem:[#allocation9 + $0x110] sm:$0xff]
        %v481 = vld [vmem:[#allocation9 + $0x118] sm:$0xff]
        %v482 = vld [vmem:[#allocation9 + $0x120] sm:$0xff]
        %v483 = vld [vmem:[#allocation9 + $0x128] sm:$0xff]
        %v484 = vld [vmem:[#allocation9 + $0x130] sm:$0xff]
        %v485 = vld [vmem:[#allocation9 + $0x138] sm:$0xff]
        %v486 = vld [vmem:[#allocation9 + $0x140] sm:$0xff]
        %v487 = vld [vmem:[#allocation9 + $0x148] sm:$0xff]
        %v488 = vld [vmem:[#allocation9 + $0x150] sm:$0xff]
        %v489 = vld [vmem:[#allocation9 + $0x158] sm:$0xff]
        %v490 = vld [vmem:[#allocation9 + $0x160] sm:$0xff]
        %v491 = vld [vmem:[#allocation9 + $0x168] sm:$0xff]
        %v492 = vld [vmem:[#allocation9 + $0x170] sm:$0xff]
        %v493 = vld [vmem:[#allocation9 + $0x178] sm:$0xff]
        %v494 = vld [vmem:[#allocation9 + $0x180] sm:$0xff]
        %v495 = vld [vmem:[#allocation9 + $0x188] sm:$0xff]
        %v496 = vld [vmem:[#allocation9 + $0x190] sm:$0xff]
        %v497 = vld [vmem:[#allocation9 + $0x198] sm:$0xff]
        %v498 = vld [vmem:[#allocation9 + $0x1a0] sm:$0xff]
        %v499 = vld [vmem:[#allocation9 + $0x1a8] sm:$0xff]
        %v500 = vld [vmem:[#allocation9 + $0x1b0] sm:$0xff]
        %v501 = vld [vmem:[#allocation9 + $0x1b8] sm:$0xff]
        %v502 = vld [vmem:[#allocation9 + $0x1c0] sm:$0xff]
        %v503 = vld [vmem:[#allocation9 + $0x1c8] sm:$0xff]
        %v504 = vld [vmem:[#allocation9 + $0x1d0] sm:$0xff]
        %v505 = vld [vmem:[#allocation9 + $0x1d8] sm:$0xff]
        %v506 = vld [vmem:[#allocation9 + $0x1e0] sm:$0xff]
        %v507 = vld [vmem:[#allocation9 + $0x1e8] sm:$0xff]
        %v508 = vld [vmem:[#allocation9 + $0x1f0] sm:$0xff]
        %v509 = vld [vmem:[#allocation9 + $0x1f8] sm:$0xff]
        %v510 = vld [vmem:[#allocation9 + $0x200] sm:$0xff]
        %v511 = vld [vmem:[#allocation9 + $0x208] sm:$0xff]
        %v512 = vld [vmem:[#allocation9 + $0x210] sm:$0xff]
        %v513 = vld [vmem:[#allocation9 + $0x218] sm:$0xff]
        %v514 = vld [vmem:[#allocation9 + $0x220] sm:$0xff]
        %v515 = vld [vmem:[#allocation9 + $0x228] sm:$0xff]
        %v516 = vld [vmem:[#allocation9 + $0x230] sm:$0xff]
        %v517 = vld [vmem:[#allocation9 + $0x238] sm:$0xff]
        %v518 = vld [vmem:[#allocation9 + $0x240] sm:$0xff]
        %v519 = vld [vmem:[#allocation9 + $0x248] sm:$0xff]
        %v520 = vld [vmem:[#allocation9 + $0x250] sm:$0xff]
        %v521 = vld [vmem:[#allocation9 + $0x258] sm:$0xff]
        %v522 = vld [vmem:[#allocation9 + $0x260] sm:$0xff]
        %v523 = vld [vmem:[#allocation9 + $0x268] sm:$0xff]
        %v524 = vld [vmem:[#allocation9 + $0x270] sm:$0xff]
        %v525 = vld [vmem:[#allocation9 + $0x278] sm:$0xff]
        %v526 = vld [vmem:[#allocation9 + $0x280] sm:$0xff]
        %v527 = vld [vmem:[#allocation9 + $0x288] sm:$0xff]
        %v528 = vld [vmem:[#allocation9 + $0x290] sm:$0xff]
        %v529 = vld [vmem:[#allocation9 + $0x298] sm:$0xff]
        %v530 = vld [vmem:[#allocation9 + $0x2a0] sm:$0xff]
        %v531 = vld [vmem:[#allocation9 + $0x2a8] sm:$0xff]
        %v532 = vld [vmem:[#allocation9 + $0x2b0] sm:$0xff]
        %v533 = vld [vmem:[#allocation9 + $0x2b8] sm:$0xff]
        %v534 = vld [vmem:[#allocation9 + $0x2c0] sm:$0xff]
        %v535 = vld [vmem:[#allocation9 + $0x2c8] sm:$0xff]
        %v536 = vld [vmem:[#allocation9 + $0x2d0] sm:$0xff]
        %v537 = vld [vmem:[#allocation9 + $0x2d8] sm:$0xff]
        %v538 = vld [vmem:[#allocation9 + $0x2e0] sm:$0xff]
        %v539 = vld [vmem:[#allocation9 + $0x2e8] sm:$0xff]
        %v540 = vld [vmem:[#allocation9 + $0x2f0] sm:$0xff]
        %v541 = vld [vmem:[#allocation9 + $0x2f8] sm:$0xff]
        %v542 = vld [vmem:[#allocation9 + $0x300] sm:$0xff]
        %v543 = vld [vmem:[#allocation9 + $0x308] sm:$0xff]
        %v544 = vld [vmem:[#allocation9 + $0x310] sm:$0xff]
        %v545 = vld [vmem:[#allocation9 + $0x318] sm:$0xff]
        %v546 = vld [vmem:[#allocation9 + $0x320] sm:$0xff]
        %v547 = vld [vmem:[#allocation9 + $0x328] sm:$0xff]
        %v548 = vld [vmem:[#allocation9 + $0x330] sm:$0xff]
        %v549 = vld [vmem:[#allocation9 + $0x338] sm:$0xff]
        %v550 = vld [vmem:[#allocation9 + $0x340] sm:$0xff]
        %v551 = vld [vmem:[#allocation9 + $0x348] sm:$0xff]
        %v552 = vld [vmem:[#allocation9 + $0x350] sm:$0xff]
        %v553 = vld [vmem:[#allocation9 + $0x358] sm:$0xff]
        %v554 = vld [vmem:[#allocation9 + $0x360] sm:$0xff]
        %v555 = vld [vmem:[#allocation9 + $0x368] sm:$0xff]
        %v556 = vld [vmem:[#allocation9 + $0x370] sm:$0xff]
        %v557 = vld [vmem:[#allocation9 + $0x378] sm:$0xff]
        %v558 = vld [vmem:[#allocation9 + $0x380] sm:$0xff]
        %v559 = vld [vmem:[#allocation9 + $0x388] sm:$0xff]
        %v560 = vld [vmem:[#allocation9 + $0x390] sm:$0xff]
        %v561 = vld [vmem:[#allocation9 + $0x398] sm:$0xff]
        %v562 = vld [vmem:[#allocation9 + $0x3a0] sm:$0xff]
        %v563 = vld [vmem:[#allocation9 + $0x3a8] sm:$0xff]
        %v564 = vld [vmem:[#allocation9 + $0x3b0] sm:$0xff]
        %v565 = vld [vmem:[#allocation9 + $0x3b8] sm:$0xff]
        %v566 = vld [vmem:[#allocation9 + $0x3c0] sm:$0xff]
        %v567 = vld [vmem:[#allocation9 + $0x3c8] sm:$0xff]
        %v568 = vld [vmem:[#allocation9 + $0x3d0] sm:$0xff]
        %v569 = vld [vmem:[#allocation9 + $0x3d8] sm:$0xff]
        %v570 = vld [vmem:[#allocation9 + $0x3e0] sm:$0xff]
        %v571 = vld [vmem:[#allocation9 + $0x3e8] sm:$0xff]
        %v572 = vld [vmem:[#allocation9 + $0x3f0] sm:$0xff]
        %v573 = vld [vmem:[#allocation9 + $0x3f8] sm:$0xff]
        %v574 = vld [vmem:[#allocation9 + $0x400] sm:$0xff]
        %v575 = vld [vmem:[#allocation9 + $0x408] sm:$0xff]
        %v576 = vld [vmem:[#allocation9 + $0x410] sm:$0xff]
        %v577 = vld [vmem:[#allocation9 + $0x418] sm:$0xff]
        %v578 = vld [vmem:[#allocation9 + $0x420] sm:$0xff]
        %v579 = vld [vmem:[#allocation9 + $0x428] sm:$0xff]
        %v580 = vld [vmem:[#allocation9 + $0x430] sm:$0xff]
        %v581 = vld [vmem:[#allocation9 + $0x438] sm:$0xff]
        %v582 = vld [vmem:[#allocation9 + $0x440] sm:$0xff]
        %v583 = vld [vmem:[#allocation9 + $0x448] sm:$0xff]
        %v584 = vld [vmem:[#allocation9 + $0x450] sm:$0xff]
        %v585 = vld [vmem:[#allocation9 + $0x458] sm:$0xff]
        %v586 = vld [vmem:[#allocation9 + $0x460] sm:$0xff]
        %v587 = vld [vmem:[#allocation9 + $0x468] sm:$0xff]
        %v588 = vld [vmem:[#allocation9 + $0x470] sm:$0xff]
        %v589 = vld [vmem:[#allocation9 + $0x478] sm:$0xff]
        %v590 = vld [vmem:[#allocation9 + $0x480] sm:$0xff]
        %v591 = vld [vmem:[#allocation9 + $0x488] sm:$0xff]
        %v592 = vld [vmem:[#allocation9 + $0x490] sm:$0xff]
        %v593 = vld [vmem:[#allocation9 + $0x498] sm:$0xff]
        %v594 = vld [vmem:[#allocation9 + $0x4a0] sm:$0xff]
        %v595 = vld [vmem:[#allocation9 + $0x4a8] sm:$0xff]
        %v596 = vld [vmem:[#allocation9 + $0x4b0] sm:$0xff]
        %v597 = vld [vmem:[#allocation9 + $0x4b8] sm:$0xff]
        %v598 = vld [vmem:[#allocation9 + $0x4c0] sm:$0xff]
        %v599 = vld [vmem:[#allocation9 + $0x4c8] sm:$0xff]
        %v600 = vld [vmem:[#allocation9 + $0x4d0] sm:$0xff]
        %v601 = vld [vmem:[#allocation9 + $0x4d8] sm:$0xff]
        %v602 = vld [vmem:[#allocation9 + $0x4e0] sm:$0xff]
        %v603 = vld [vmem:[#allocation9 + $0x4e8] sm:$0xff]
        %v604 = vld [vmem:[#allocation9 + $0x4f0] sm:$0xff]
        %v605 = vld [vmem:[#allocation9 + $0x4f8] sm:$0xff]
        %v606 = vld [vmem:[#allocation9 + $0x500] sm:$0xff]
        %v607 = vld [vmem:[#allocation9 + $0x508] sm:$0xff]
        %v608 = vld [vmem:[#allocation9 + $0x510] sm:$0xff]
        %v609 = vld [vmem:[#allocation9 + $0x518] sm:$0xff]
        %v610 = vld [vmem:[#allocation9 + $0x520] sm:$0xff]
        %v611 = vld [vmem:[#allocation9 + $0x528] sm:$0xff]
        %v612 = vld [vmem:[#allocation9 + $0x530] sm:$0xff]
        %v613 = vld [vmem:[#allocation9 + $0x538] sm:$0xff]
        %v614 = vld [vmem:[#allocation9 + $0x540] sm:$0xff]
        %v615 = vld [vmem:[#allocation9 + $0x548] sm:$0xff]
        %v616 = vld [vmem:[#allocation9 + $0x550] sm:$0xff]
        %v617 = vld [vmem:[#allocation9 + $0x558] sm:$0xff]
        %v618 = vld [vmem:[#allocation9 + $0x560] sm:$0xff]
        %v619 = vld [vmem:[#allocation9 + $0x568] sm:$0xff]
        %v620 = vld [vmem:[#allocation9 + $0x570] sm:$0xff]
        %v621 = vld [vmem:[#allocation9 + $0x578] sm:$0xff]
        %v622 = vld [vmem:[#allocation9 + $0x580] sm:$0xff]
        %v623 = vld [vmem:[#allocation9 + $0x588] sm:$0xff]
        %v624 = vld [vmem:[#allocation9 + $0x590] sm:$0xff]
        %v625 = vld [vmem:[#allocation9 + $0x598] sm:$0xff]
        %v626 = vld [vmem:[#allocation9 + $0x5a0] sm:$0xff]
        %v627 = vld [vmem:[#allocation9 + $0x5a8] sm:$0xff]
        %v628 = vld [vmem:[#allocation9 + $0x5b0] sm:$0xff]
        %v629 = vld [vmem:[#allocation9 + $0x5b8] sm:$0xff]
        %v630 = vld [vmem:[#allocation9 + $0x5c0] sm:$0xff]
        %v631 = vld [vmem:[#allocation9 + $0x5c8] sm:$0xff]
        %v632 = vld [vmem:[#allocation9 + $0x5d0] sm:$0xff]
        %v633 = vld [vmem:[#allocation9 + $0x5d8] sm:$0xff]
        %v634 = vld [vmem:[#allocation9 + $0x5e0] sm:$0xff]
        %v635 = vld [vmem:[#allocation9 + $0x5e8] sm:$0xff]
        %v636 = vld [vmem:[#allocation9 + $0x5f0] sm:$0xff]
        %v637 = vld [vmem:[#allocation9 + $0x5f8] sm:$0xff]
        %v638 = vld [vmem:[%s5] sm:$0x3f]
        %v640 = vlaneseq
        %v641 = vshrl.u32 %v640, 7
        %v642 = vsub.s32 0, %v641
        %v643 = vrot.slane %v638, %v642
        %v644 = vlaneseq
        %v645 = vshrl.u32 %v644, 7
        %v646 = vsub.s32 1, %v645
        %v647 = vrot.slane %v638, %v646
        %v648 = vlaneseq
        %v649 = vshrl.u32 %v648, 7
        %v650 = vsub.s32 2, %v649
        %v651 = vrot.slane %v638, %v650
        %v652 = vlaneseq
        %v653 = vshrl.u32 %v652, 7
        %v654 = vsub.s32 3, %v653
        %v655 = vrot.slane %v638, %v654
        %v656 = vlaneseq
        %v657 = vshrl.u32 %v656, 7
        %v658 = vsub.s32 4, %v657
        %v659 = vrot.slane %v638, %v658
        %v660 = vlaneseq
        %v661 = vshrl.u32 %v660, 7
        %v662 = vsub.s32 5, %v661
        %v663 = vrot.slane %v638, %v662
        %670 = vmatprep.subr.mxu0 %v447
        %671 = vmatpush1.msra.mxu0 %v446
        %672 = vmatprep.subr.mxu0 %v453
        %673 = vmatpush1.msra.mxu0 %v452
        %674 = vmatprep.subr.mxu0 %v459
        %675 = vmatpush1.msra.mxu0 %v458
        %676 = vmatprep.subr.mxu0 %v465
        %677 = vmatpush1.msra.mxu0 %v464
        %678 = vmatprep.subr.mxu0 %v471
        %679 = vmatpush1.msra.mxu0 %v470
        %680 = vmatprep.subr.mxu0 %v477
        %681 = vmatpush1.msra.mxu0 %v476
        %682 = vmatprep.subr.mxu0 %v483
        %683 = vmatpush1.msra.mxu0 %v482
        %684 = vmatprep.subr.mxu0 %v489
        %685 = vmatpush1.msra.mxu0 %v488
        %686 = vmatprep.subr.mxu0 %v495
        %687 = vmatpush1.msra.mxu0 %v494
        %688 = vmatprep.subr.mxu0 %v501
        %689 = vmatpush1.msra.mxu0 %v500
        %690 = vmatprep.subr.mxu0 %v507
        %691 = vmatpush1.msra.mxu0 %v506
        %692 = vmatprep.subr.mxu0 %v513
        %693 = vmatpush1.msra.mxu0 %v512
        %694 = vmatprep.subr.mxu0 %v519
        %695 = vmatpush1.msra.mxu0 %v518
        %696 = vmatprep.subr.mxu0 %v525
        %697 = vmatpush1.msra.mxu0 %v524
        %698 = vmatprep.subr.mxu0 %v531
        %699 = vmatpush1.msra.mxu0 %v530
        %700 = vmatprep.subr.mxu0 %v537
        %701 = vmatpush1.msra.mxu0 %v536
        %702 = vmatprep.subr.mxu0 %v543
        %703 = vmatpush1.msra.mxu0 %v542
        %704 = vmatprep.subr.mxu0 %v549
        %705 = vmatpush1.msra.mxu0 %v548
        %706 = vmatprep.subr.mxu0 %v555
        %707 = vmatpush1.msra.mxu0 %v554
        %708 = vmatprep.subr.mxu0 %v561
        %709 = vmatpush1.msra.mxu0 %v560
        %710 = vmatprep.subr.mxu0 %v567
        %711 = vmatpush1.msra.mxu0 %v566
        %712 = vmatprep.subr.mxu0 %v573
        %713 = vmatpush1.msra.mxu0 %v572
        %714 = vmatprep.subr.mxu0 %v579
        %715 = vmatpush1.msra.mxu0 %v578
        %716 = vmatprep.subr.mxu0 %v585
        %717 = vmatpush1.msra.mxu0 %v584
        %718 = vmatprep.subr.mxu0 %v591
        %719 = vmatpush1.msra.mxu0 %v590
        %720 = vmatprep.subr.mxu0 %v597
        %721 = vmatpush1.msra.mxu0 %v596
        %722 = vmatprep.subr.mxu0 %v603
        %723 = vmatpush1.msra.mxu0 %v602
        %724 = vmatprep.subr.mxu0 %v609
        %725 = vmatpush1.msra.mxu0 %v608
        %726 = vmatprep.subr.mxu0 %v615
        %727 = vmatpush1.msra.mxu0 %v614
        %728 = vmatprep.subr.mxu0 %v621
        %729 = vmatpush1.msra.mxu0 %v620
        %730 = vmatprep.subr.mxu0 %v627
        %731 = vmatpush1.msra.mxu0 %v626
        %732 = vmatprep.subr.mxu0 %v633
        %733 = vmatpush1.msra.mxu0 %v632
        %734 = vmatprep.mubr.f32.mxu0 %v443
        %735 = vmatmul.mubr.f32.gmra.mrb[0].mxu0 %v442
        %v736 = vpop.f32.mrb[0].mxu0
        %v737 = vadd.f32 %v643, %v736
        %v738 = vpop.f32.mrb[0].mxu0
        %v739 = vadd.f32 %v647, %v738
        %740 = vdwg.mxu0
        %741 = vmatprep.subr.mxu0 %v449
        %742 = vmatpush1.msra.mxu0 %v448
        %743 = vmatprep.subr.mxu0 %v455
        %744 = vmatpush1.msra.mxu0 %v454
        %745 = vmatprep.subr.mxu0 %v461
        %746 = vmatpush1.msra.mxu0 %v460
        %747 = vmatprep.subr.mxu0 %v467
        %748 = vmatpush1.msra.mxu0 %v466
        %749 = vmatprep.subr.mxu0 %v473
        %750 = vmatpush1.msra.mxu0 %v472
        %751 = vmatprep.subr.mxu0 %v479
        %752 = vmatpush1.msra.mxu0 %v478
        %753 = vmatprep.subr.mxu0 %v485
        %754 = vmatpush1.msra.mxu0 %v484
        %755 = vmatprep.subr.mxu0 %v491
        %756 = vmatpush1.msra.mxu0 %v490
        %757 = vmatprep.subr.mxu0 %v497
        %758 = vmatpush1.msra.mxu0 %v496
        %759 = vmatprep.subr.mxu0 %v503
        %760 = vmatpush1.msra.mxu0 %v502
        %761 = vmatprep.subr.mxu0 %v509
        %762 = vmatpush1.msra.mxu0 %v508
        %763 = vmatprep.subr.mxu0 %v515
        %764 = vmatpush1.msra.mxu0 %v514
        %765 = vmatprep.subr.mxu0 %v521
        %766 = vmatpush1.msra.mxu0 %v520
        %767 = vmatprep.subr.mxu0 %v527
        %768 = vmatpush1.msra.mxu0 %v526
        %769 = vmatprep.subr.mxu0 %v533
        %770 = vmatpush1.msra.mxu0 %v532
        %771 = vmatprep.subr.mxu0 %v539
        %772 = vmatpush1.msra.mxu0 %v538
        %773 = vmatprep.subr.mxu0 %v545
        %774 = vmatpush1.msra.mxu0 %v544
        %775 = vmatprep.subr.mxu0 %v551
        %776 = vmatpush1.msra.mxu0 %v550
        %777 = vmatprep.subr.mxu0 %v557
        %778 = vmatpush1.msra.mxu0 %v556
        %779 = vmatprep.subr.mxu0 %v563
        %780 = vmatpush1.msra.mxu0 %v562
        %781 = vmatprep.subr.mxu0 %v569
        %782 = vmatpush1.msra.mxu0 %v568
        %783 = vmatprep.subr.mxu0 %v575
        %784 = vmatpush1.msra.mxu0 %v574
        %785 = vmatprep.subr.mxu0 %v581
        %786 = vmatpush1.msra.mxu0 %v580
        %787 = vmatprep.subr.mxu0 %v587
        %788 = vmatpush1.msra.mxu0 %v586
        %789 = vmatprep.subr.mxu0 %v593
        %790 = vmatpush1.msra.mxu0 %v592
        %791 = vmatprep.subr.mxu0 %v599
        %792 = vmatpush1.msra.mxu0 %v598
        %793 = vmatprep.subr.mxu0 %v605
        %794 = vmatpush1.msra.mxu0 %v604
        %795 = vmatprep.subr.mxu0 %v611
        %796 = vmatpush1.msra.mxu0 %v610
        %797 = vmatprep.subr.mxu0 %v617
        %798 = vmatpush1.msra.mxu0 %v616
        %799 = vmatprep.subr.mxu0 %v623
        %800 = vmatpush1.msra.mxu0 %v622
        %801 = vmatprep.subr.mxu0 %v629
        %802 = vmatpush1.msra.mxu0 %v628
        %803 = vmatprep.subr.mxu0 %v635
        %804 = vmatpush1.msra.mxu0 %v634
        %805 = vmatprep.mubr.f32.mxu0 %v443
        %806 = vmatmul.mubr.f32.gmra.mrb[0].mxu0 %v442
        %v807 = vpop.f32.mrb[0].mxu0
        %v808 = vadd.f32 %v651, %v807
        %v809 = vpop.f32.mrb[0].mxu0
        %v810 = vadd.f32 %v655, %v809
        %811 = vdwg.mxu0
        %812 = vmatprep.subr.mxu0 %v451
        %813 = vmatpush1.msra.mxu0 %v450
        %814 = vmatprep.subr.mxu0 %v457
        %815 = vmatpush1.msra.mxu0 %v456
        %816 = vmatprep.subr.mxu0 %v463
        %817 = vmatpush1.msra.mxu0 %v462
        %818 = vmatprep.subr.mxu0 %v469
        %819 = vmatpush1.msra.mxu0 %v468
        %820 = vmatprep.subr.mxu0 %v475
        %821 = vmatpush1.msra.mxu0 %v474
        %822 = vmatprep.subr.mxu0 %v481
        %823 = vmatpush1.msra.mxu0 %v480
        %824 = vmatprep.subr.mxu0 %v487
        %825 = vmatpush1.msra.mxu0 %v486
        %826 = vmatprep.subr.mxu0 %v493
        %827 = vmatpush1.msra.mxu0 %v492
        %828 = vmatprep.subr.mxu0 %v499
        %829 = vmatpush1.msra.mxu0 %v498
        %830 = vmatprep.subr.mxu0 %v505
        %831 = vmatpush1.msra.mxu0 %v504
        %832 = vmatprep.subr.mxu0 %v511
        %833 = vmatpush1.msra.mxu0 %v510
        %834 = vmatprep.subr.mxu0 %v517
        %835 = vmatpush1.msra.mxu0 %v516
        %836 = vmatprep.subr.mxu0 %v523
        %837 = vmatpush1.msra.mxu0 %v522
        %838 = vmatprep.subr.mxu0 %v529
        %839 = vmatpush1.msra.mxu0 %v528
        %840 = vmatprep.subr.mxu0 %v535
        %841 = vmatpush1.msra.mxu0 %v534
        %842 = vmatprep.subr.mxu0 %v541
        %843 = vmatpush1.msra.mxu0 %v540
        %844 = vmatprep.subr.mxu0 %v547
        %845 = vmatpush1.msra.mxu0 %v546
        %846 = vmatprep.subr.mxu0 %v553
        %847 = vmatpush1.msra.mxu0 %v552
        %848 = vmatprep.subr.mxu0 %v559
        %849 = vmatpush1.msra.mxu0 %v558
        %850 = vmatprep.subr.mxu0 %v565
        %851 = vmatpush1.msra.mxu0 %v564
        %852 = vmatprep.subr.mxu0 %v571
        %853 = vmatpush1.msra.mxu0 %v570
        %854 = vmatprep.subr.mxu0 %v577
        %855 = vmatpush1.msra.mxu0 %v576
        %856 = vmatprep.subr.mxu0 %v583
        %857 = vmatpush1.msra.mxu0 %v582
        %858 = vmatprep.subr.mxu0 %v589
        %859 = vmatpush1.msra.mxu0 %v588
        %860 = vmatprep.subr.mxu0 %v595
        %861 = vmatpush1.msra.mxu0 %v594
        %862 = vmatprep.subr.mxu0 %v601
        %863 = vmatpush1.msra.mxu0 %v600
        %864 = vmatprep.subr.mxu0 %v607
        %865 = vmatpush1.msra.mxu0 %v606
        %866 = vmatprep.subr.mxu0 %v613
        %867 = vmatpush1.msra.mxu0 %v612
        %868 = vmatprep.subr.mxu0 %v619
        %869 = vmatpush1.msra.mxu0 %v618
        %870 = vmatprep.subr.mxu0 %v625
        %871 = vmatpush1.msra.mxu0 %v624
        %872 = vmatprep.subr.mxu0 %v631
        %873 = vmatpush1.msra.mxu0 %v630
        %874 = vmatprep.subr.mxu0 %v637
        %875 = vmatpush1.msra.mxu0 %v636
        %876 = vmatprep.mubr.f32.mxu0 %v443
        %877 = vmatmul.mubr.f32.gmra.mrb[0].mxu0 %v442
        %v878 = vpop.f32.mrb[0].mxu0
        %v879 = vadd.f32 %v659, %v878
        %v880 = vpop.f32.mrb[0].mxu0
        %v881 = vadd.f32 %v663, %v880
        %882 = vdwg.mxu0
        %v883 = vld [vmem:[#allocation11] sm:$0xff]
        %v884 = vld [vmem:[#allocation11 + $0x8] sm:$0xff]
        %v885 = vld [vmem:[#allocation11 + $0x10] sm:$0xff]
        %v886 = vld [vmem:[#allocation11 + $0x18] sm:$0xff]
        %v887 = vld [vmem:[#allocation11 + $0x20] sm:$0xff]
        %v888 = vld [vmem:[#allocation11 + $0x28] sm:$0xff]
        %v889 = vld [vmem:[#allocation11 + $0x30] sm:$0xff]
        %v890 = vld [vmem:[#allocation11 + $0x38] sm:$0xff]
        %v891 = vld [vmem:[#allocation11 + $0x40] sm:$0xff]
        %v892 = vld [vmem:[#allocation11 + $0x48] sm:$0xff]
        %v893 = vld [vmem:[#allocation11 + $0x50] sm:$0xff]
        %v894 = vld [vmem:[#allocation11 + $0x58] sm:$0xff]
        %v895 = vld [vmem:[#allocation11 + $0x60] sm:$0xff]
        %v896 = vld [vmem:[#allocation11 + $0x68] sm:$0xff]
        %v897 = vld [vmem:[#allocation11 + $0x70] sm:$0xff]
        %v898 = vld [vmem:[#allocation11 + $0x78] sm:$0xff]
        %v899 = vld [vmem:[#allocation11 + $0x80] sm:$0xff]
        %v900 = vld [vmem:[#allocation11 + $0x88] sm:$0xff]
        %v901 = vld [vmem:[#allocation11 + $0x90] sm:$0xff]
        %v902 = vld [vmem:[#allocation11 + $0x98] sm:$0xff]
        %v903 = vld [vmem:[#allocation11 + $0xa0] sm:$0xff]
        %v904 = vld [vmem:[#allocation11 + $0xa8] sm:$0xff]
        %v905 = vld [vmem:[#allocation11 + $0xb0] sm:$0xff]
        %v906 = vld [vmem:[#allocation11 + $0xb8] sm:$0xff]
        %v907 = vld [vmem:[#allocation11 + $0xc0] sm:$0xff]
        %v908 = vld [vmem:[#allocation11 + $0xc8] sm:$0xff]
        %v909 = vld [vmem:[#allocation11 + $0xd0] sm:$0xff]
        %v910 = vld [vmem:[#allocation11 + $0xd8] sm:$0xff]
        %v911 = vld [vmem:[#allocation11 + $0xe0] sm:$0xff]
        %v912 = vld [vmem:[#allocation11 + $0xe8] sm:$0xff]
        %v913 = vld [vmem:[#allocation11 + $0xf0] sm:$0xff]
        %v914 = vld [vmem:[#allocation11 + $0xf8] sm:$0xff]
        %v915 = vld [vmem:[#allocation11 + $0x100] sm:$0xff]
        %v916 = vld [vmem:[#allocation11 + $0x108] sm:$0xff]
        %v917 = vld [vmem:[#allocation11 + $0x110] sm:$0xff]
        %v918 = vld [vmem:[#allocation11 + $0x118] sm:$0xff]
        %v919 = vld [vmem:[#allocation11 + $0x120] sm:$0xff]
        %v920 = vld [vmem:[#allocation11 + $0x128] sm:$0xff]
        %v921 = vld [vmem:[#allocation11 + $0x130] sm:$0xff]
        %v922 = vld [vmem:[#allocation11 + $0x138] sm:$0xff]
        %v923 = vld [vmem:[#allocation11 + $0x140] sm:$0xff]
        %v924 = vld [vmem:[#allocation11 + $0x148] sm:$0xff]
        %v925 = vld [vmem:[#allocation11 + $0x150] sm:$0xff]
        %v926 = vld [vmem:[#allocation11 + $0x158] sm:$0xff]
        %v927 = vld [vmem:[#allocation11 + $0x160] sm:$0xff]
        %v928 = vld [vmem:[#allocation11 + $0x168] sm:$0xff]
        %v929 = vld [vmem:[#allocation11 + $0x170] sm:$0xff]
        %v930 = vld [vmem:[#allocation11 + $0x178] sm:$0xff]
        %v931 = vld [vmem:[#allocation11 + $0x180] sm:$0xff]
        %v932 = vld [vmem:[#allocation11 + $0x188] sm:$0xff]
        %v933 = vld [vmem:[#allocation11 + $0x190] sm:$0xff]
        %v934 = vld [vmem:[#allocation11 + $0x198] sm:$0xff]
        %v935 = vld [vmem:[#allocation11 + $0x1a0] sm:$0xff]
        %v936 = vld [vmem:[#allocation11 + $0x1a8] sm:$0xff]
        %v937 = vld [vmem:[#allocation11 + $0x1b0] sm:$0xff]
        %v938 = vld [vmem:[#allocation11 + $0x1b8] sm:$0xff]
        %v939 = vld [vmem:[#allocation11 + $0x1c0] sm:$0xff]
        %v940 = vld [vmem:[#allocation11 + $0x1c8] sm:$0xff]
        %v941 = vld [vmem:[#allocation11 + $0x1d0] sm:$0xff]
        %v942 = vld [vmem:[#allocation11 + $0x1d8] sm:$0xff]
        %v943 = vld [vmem:[#allocation11 + $0x1e0] sm:$0xff]
        %v944 = vld [vmem:[#allocation11 + $0x1e8] sm:$0xff]
        %v945 = vld [vmem:[#allocation11 + $0x1f0] sm:$0xff]
        %v946 = vld [vmem:[#allocation11 + $0x1f8] sm:$0xff]
        %v947 = vld [vmem:[#allocation11 + $0x200] sm:$0xff]
        %v948 = vld [vmem:[#allocation11 + $0x208] sm:$0xff]
        %v949 = vld [vmem:[#allocation11 + $0x210] sm:$0xff]
        %v950 = vld [vmem:[#allocation11 + $0x218] sm:$0xff]
        %v951 = vld [vmem:[#allocation11 + $0x220] sm:$0xff]
        %v952 = vld [vmem:[#allocation11 + $0x228] sm:$0xff]
        %v953 = vld [vmem:[#allocation11 + $0x230] sm:$0xff]
        %v954 = vld [vmem:[#allocation11 + $0x238] sm:$0xff]
        %v955 = vld [vmem:[#allocation11 + $0x240] sm:$0xff]
        %v956 = vld [vmem:[#allocation11 + $0x248] sm:$0xff]
        %v957 = vld [vmem:[#allocation11 + $0x250] sm:$0xff]
        %v958 = vld [vmem:[#allocation11 + $0x258] sm:$0xff]
        %v959 = vld [vmem:[#allocation11 + $0x260] sm:$0xff]
        %v960 = vld [vmem:[#allocation11 + $0x268] sm:$0xff]
        %v961 = vld [vmem:[#allocation11 + $0x270] sm:$0xff]
        %v962 = vld [vmem:[#allocation11 + $0x278] sm:$0xff]
        %v963 = vld [vmem:[#allocation11 + $0x280] sm:$0xff]
        %v964 = vld [vmem:[#allocation11 + $0x288] sm:$0xff]
        %v965 = vld [vmem:[#allocation11 + $0x290] sm:$0xff]
        %v966 = vld [vmem:[#allocation11 + $0x298] sm:$0xff]
        %v967 = vld [vmem:[#allocation11 + $0x2a0] sm:$0xff]
        %v968 = vld [vmem:[#allocation11 + $0x2a8] sm:$0xff]
        %v969 = vld [vmem:[#allocation11 + $0x2b0] sm:$0xff]
        %v970 = vld [vmem:[#allocation11 + $0x2b8] sm:$0xff]
        %v971 = vld [vmem:[#allocation11 + $0x2c0] sm:$0xff]
        %v972 = vld [vmem:[#allocation11 + $0x2c8] sm:$0xff]
        %v973 = vld [vmem:[#allocation11 + $0x2d0] sm:$0xff]
        %v974 = vld [vmem:[#allocation11 + $0x2d8] sm:$0xff]
        %v975 = vld [vmem:[#allocation11 + $0x2e0] sm:$0xff]
        %v976 = vld [vmem:[#allocation11 + $0x2e8] sm:$0xff]
        %v977 = vld [vmem:[#allocation11 + $0x2f0] sm:$0xff]
        %v978 = vld [vmem:[#allocation11 + $0x2f8] sm:$0xff]
        %v979 = vld [vmem:[#allocation11 + $0x300] sm:$0xff]
        %v980 = vld [vmem:[#allocation11 + $0x308] sm:$0xff]
        %v981 = vld [vmem:[#allocation11 + $0x310] sm:$0xff]
        %v982 = vld [vmem:[#allocation11 + $0x318] sm:$0xff]
        %v983 = vld [vmem:[#allocation11 + $0x320] sm:$0xff]
        %v984 = vld [vmem:[#allocation11 + $0x328] sm:$0xff]
        %v985 = vld [vmem:[#allocation11 + $0x330] sm:$0xff]
        %v986 = vld [vmem:[#allocation11 + $0x338] sm:$0xff]
        %v987 = vld [vmem:[#allocation11 + $0x340] sm:$0xff]
        %v988 = vld [vmem:[#allocation11 + $0x348] sm:$0xff]
        %v989 = vld [vmem:[#allocation11 + $0x350] sm:$0xff]
        %v990 = vld [vmem:[#allocation11 + $0x358] sm:$0xff]
        %v991 = vld [vmem:[#allocation11 + $0x360] sm:$0xff]
        %v992 = vld [vmem:[#allocation11 + $0x368] sm:$0xff]
        %v993 = vld [vmem:[#allocation11 + $0x370] sm:$0xff]
        %v994 = vld [vmem:[#allocation11 + $0x378] sm:$0xff]
        %v995 = vld [vmem:[#allocation11 + $0x380] sm:$0xff]
        %v996 = vld [vmem:[#allocation11 + $0x388] sm:$0xff]
        %v997 = vld [vmem:[#allocation11 + $0x390] sm:$0xff]
        %v998 = vld [vmem:[#allocation11 + $0x398] sm:$0xff]
        %v999 = vld [vmem:[#allocation11 + $0x3a0] sm:$0xff]
        %v1000 = vld [vmem:[#allocation11 + $0x3a8] sm:$0xff]
        %v1001 = vld [vmem:[#allocation11 + $0x3b0] sm:$0xff]
        %v1002 = vld [vmem:[#allocation11 + $0x3b8] sm:$0xff]
        %v1003 = vld [vmem:[#allocation11 + $0x3c0] sm:$0xff]
        %v1004 = vld [vmem:[#allocation11 + $0x3c8] sm:$0xff]
        %v1005 = vld [vmem:[#allocation11 + $0x3d0] sm:$0xff]
        %v1006 = vld [vmem:[#allocation11 + $0x3d8] sm:$0xff]
        %v1007 = vld [vmem:[#allocation11 + $0x3e0] sm:$0xff]
        %v1008 = vld [vmem:[#allocation11 + $0x3e8] sm:$0xff]
        %v1009 = vld [vmem:[#allocation11 + $0x3f0] sm:$0xff]
        %v1010 = vld [vmem:[#allocation11 + $0x3f8] sm:$0xff]
        %v1011 = vld [vmem:[#allocation11 + $0x400] sm:$0xff]
        %v1012 = vld [vmem:[#allocation11 + $0x408] sm:$0xff]
        %v1013 = vld [vmem:[#allocation11 + $0x410] sm:$0xff]
        %v1014 = vld [vmem:[#allocation11 + $0x418] sm:$0xff]
        %v1015 = vld [vmem:[#allocation11 + $0x420] sm:$0xff]
        %v1016 = vld [vmem:[#allocation11 + $0x428] sm:$0xff]
        %v1017 = vld [vmem:[#allocation11 + $0x430] sm:$0xff]
        %v1018 = vld [vmem:[#allocation11 + $0x438] sm:$0xff]
        %v1019 = vld [vmem:[#allocation11 + $0x440] sm:$0xff]
        %v1020 = vld [vmem:[#allocation11 + $0x448] sm:$0xff]
        %v1021 = vld [vmem:[#allocation11 + $0x450] sm:$0xff]
        %v1022 = vld [vmem:[#allocation11 + $0x458] sm:$0xff]
        %v1023 = vld [vmem:[#allocation11 + $0x460] sm:$0xff]
        %v1024 = vld [vmem:[#allocation11 + $0x468] sm:$0xff]
        %v1025 = vld [vmem:[#allocation11 + $0x470] sm:$0xff]
        %v1026 = vld [vmem:[#allocation11 + $0x478] sm:$0xff]
        %v1027 = vld [vmem:[#allocation11 + $0x480] sm:$0xff]
        %v1028 = vld [vmem:[#allocation11 + $0x488] sm:$0xff]
        %v1029 = vld [vmem:[#allocation11 + $0x490] sm:$0xff]
        %v1030 = vld [vmem:[#allocation11 + $0x498] sm:$0xff]
        %v1031 = vld [vmem:[#allocation11 + $0x4a0] sm:$0xff]
        %v1032 = vld [vmem:[#allocation11 + $0x4a8] sm:$0xff]
        %v1033 = vld [vmem:[#allocation11 + $0x4b0] sm:$0xff]
        %v1034 = vld [vmem:[#allocation11 + $0x4b8] sm:$0xff]
        %v1035 = vld [vmem:[#allocation11 + $0x4c0] sm:$0xff]
        %v1036 = vld [vmem:[#allocation11 + $0x4c8] sm:$0xff]
        %v1037 = vld [vmem:[#allocation11 + $0x4d0] sm:$0xff]
        %v1038 = vld [vmem:[#allocation11 + $0x4d8] sm:$0xff]
        %v1039 = vld [vmem:[#allocation11 + $0x4e0] sm:$0xff]
        %v1040 = vld [vmem:[#allocation11 + $0x4e8] sm:$0xff]
        %v1041 = vld [vmem:[#allocation11 + $0x4f0] sm:$0xff]
        %v1042 = vld [vmem:[#allocation11 + $0x4f8] sm:$0xff]
        %v1043 = vld [vmem:[#allocation11 + $0x500] sm:$0xff]
        %v1044 = vld [vmem:[#allocation11 + $0x508] sm:$0xff]
        %v1045 = vld [vmem:[#allocation11 + $0x510] sm:$0xff]
        %v1046 = vld [vmem:[#allocation11 + $0x518] sm:$0xff]
        %v1047 = vld [vmem:[#allocation11 + $0x520] sm:$0xff]
        %v1048 = vld [vmem:[#allocation11 + $0x528] sm:$0xff]
        %v1049 = vld [vmem:[#allocation11 + $0x530] sm:$0xff]
        %v1050 = vld [vmem:[#allocation11 + $0x538] sm:$0xff]
        %v1051 = vld [vmem:[#allocation11 + $0x540] sm:$0xff]
        %v1052 = vld [vmem:[#allocation11 + $0x548] sm:$0xff]
        %v1053 = vld [vmem:[#allocation11 + $0x550] sm:$0xff]
        %v1054 = vld [vmem:[#allocation11 + $0x558] sm:$0xff]
        %v1055 = vld [vmem:[#allocation11 + $0x560] sm:$0xff]
        %v1056 = vld [vmem:[#allocation11 + $0x568] sm:$0xff]
        %v1057 = vld [vmem:[#allocation11 + $0x570] sm:$0xff]
        %v1058 = vld [vmem:[#allocation11 + $0x578] sm:$0xff]
        %v1059 = vld [vmem:[#allocation11 + $0x580] sm:$0xff]
        %v1060 = vld [vmem:[#allocation11 + $0x588] sm:$0xff]
        %v1061 = vld [vmem:[#allocation11 + $0x590] sm:$0xff]
        %v1062 = vld [vmem:[#allocation11 + $0x598] sm:$0xff]
        %v1063 = vld [vmem:[#allocation11 + $0x5a0] sm:$0xff]
        %v1064 = vld [vmem:[#allocation11 + $0x5a8] sm:$0xff]
        %v1065 = vld [vmem:[#allocation11 + $0x5b0] sm:$0xff]
        %v1066 = vld [vmem:[#allocation11 + $0x5b8] sm:$0xff]
        %v1067 = vld [vmem:[#allocation11 + $0x5c0] sm:$0xff]
        %v1068 = vld [vmem:[#allocation11 + $0x5c8] sm:$0xff]
        %v1069 = vld [vmem:[#allocation11 + $0x5d0] sm:$0xff]
        %v1070 = vld [vmem:[#allocation11 + $0x5d8] sm:$0xff]
        %v1071 = vld [vmem:[#allocation11 + $0x5e0] sm:$0xff]
        %v1072 = vld [vmem:[#allocation11 + $0x5e8] sm:$0xff]
        %v1073 = vld [vmem:[#allocation11 + $0x5f0] sm:$0xff]
        %v1074 = vld [vmem:[#allocation11 + $0x5f8] sm:$0xff]
        %v1075 = vld [vmem:[%s6] sm:$0x3f]
        %v1076 = vld [vmem:[#allocation2] sm:$0x3]
        %v1078 = vlaneseq
        %v1079 = vshrl.u32 %v1078, 7
        %v1080 = vsub.s32 0, %v1079
        %v1081 = vrot.slane %v1076, %v1080
        %v1082 = vlaneseq
        %v1083 = vshrl.u32 %v1082, 7
        %v1084 = vsub.s32 1, %v1083
        %v1085 = vrot.slane %v1076, %v1084
        %v1089 = vlaneseq
        %v1090 = vshrl.u32 %v1089, 7
        %v1091 = vsub.s32 0, %v1090
        %v1092 = vrot.slane %v1075, %v1091
        %v1093 = vlaneseq
        %v1094 = vshrl.u32 %v1093, 7
        %v1095 = vsub.s32 1, %v1094
        %v1096 = vrot.slane %v1075, %v1095
        %v1097 = vlaneseq
        %v1098 = vshrl.u32 %v1097, 7
        %v1099 = vsub.s32 2, %v1098
        %v1100 = vrot.slane %v1075, %v1099
        %v1101 = vlaneseq
        %v1102 = vshrl.u32 %v1101, 7
        %v1103 = vsub.s32 3, %v1102
        %v1104 = vrot.slane %v1075, %v1103
        %v1105 = vlaneseq
        %v1106 = vshrl.u32 %v1105, 7
        %v1107 = vsub.s32 4, %v1106
        %v1108 = vrot.slane %v1075, %v1107
        %v1109 = vlaneseq
        %v1110 = vshrl.u32 %v1109, 7
        %v1111 = vsub.s32 5, %v1110
        %v1112 = vrot.slane %v1075, %v1111
        %1119 = vmatprep.subr.mxu0 %v884
        %1120 = vmatpush1.msra.mxu0 %v883
        %1121 = vmatprep.subr.mxu0 %v890
        %1122 = vmatpush1.msra.mxu0 %v889
        %1123 = vmatprep.subr.mxu0 %v896
        %1124 = vmatpush1.msra.mxu0 %v895
        %1125 = vmatprep.subr.mxu0 %v902
        %1126 = vmatpush1.msra.mxu0 %v901
        %1127 = vmatprep.subr.mxu0 %v908
        %1128 = vmatpush1.msra.mxu0 %v907
        %1129 = vmatprep.subr.mxu0 %v914
        %1130 = vmatpush1.msra.mxu0 %v913
        %1131 = vmatprep.subr.mxu0 %v920
        %1132 = vmatpush1.msra.mxu0 %v919
        %1133 = vmatprep.subr.mxu0 %v926
        %1134 = vmatpush1.msra.mxu0 %v925
        %1135 = vmatprep.subr.mxu0 %v932
        %1136 = vmatpush1.msra.mxu0 %v931
        %1137 = vmatprep.subr.mxu0 %v938
        %1138 = vmatpush1.msra.mxu0 %v937
        %1139 = vmatprep.subr.mxu0 %v944
        %1140 = vmatpush1.msra.mxu0 %v943
        %1141 = vmatprep.subr.mxu0 %v950
        %1142 = vmatpush1.msra.mxu0 %v949
        %1143 = vmatprep.subr.mxu0 %v956
        %1144 = vmatpush1.msra.mxu0 %v955
        %1145 = vmatprep.subr.mxu0 %v962
        %1146 = vmatpush1.msra.mxu0 %v961
        %1147 = vmatprep.subr.mxu0 %v968
        %1148 = vmatpush1.msra.mxu0 %v967
        %1149 = vmatprep.subr.mxu0 %v974
        %1150 = vmatpush1.msra.mxu0 %v973
        %1151 = vmatprep.subr.mxu0 %v980
        %1152 = vmatpush1.msra.mxu0 %v979
        %1153 = vmatprep.subr.mxu0 %v986
        %1154 = vmatpush1.msra.mxu0 %v985
        %1155 = vmatprep.subr.mxu0 %v992
        %1156 = vmatpush1.msra.mxu0 %v991
        %1157 = vmatprep.subr.mxu0 %v998
        %1158 = vmatpush1.msra.mxu0 %v997
        %1159 = vmatprep.subr.mxu0 %v1004
        %1160 = vmatpush1.msra.mxu0 %v1003
        %1161 = vmatprep.subr.mxu0 %v1010
        %1162 = vmatpush1.msra.mxu0 %v1009
        %1163 = vmatprep.subr.mxu0 %v1016
        %1164 = vmatpush1.msra.mxu0 %v1015
        %1165 = vmatprep.subr.mxu0 %v1022
        %1166 = vmatpush1.msra.mxu0 %v1021
        %1167 = vmatprep.subr.mxu0 %v1028
        %1168 = vmatpush1.msra.mxu0 %v1027
        %1169 = vmatprep.subr.mxu0 %v1034
        %1170 = vmatpush1.msra.mxu0 %v1033
        %1171 = vmatprep.subr.mxu0 %v1040
        %1172 = vmatpush1.msra.mxu0 %v1039
        %1173 = vmatprep.subr.mxu0 %v1046
        %1174 = vmatpush1.msra.mxu0 %v1045
        %1175 = vmatprep.subr.mxu0 %v1052
        %1176 = vmatpush1.msra.mxu0 %v1051
        %1177 = vmatprep.subr.mxu0 %v1058
        %1178 = vmatpush1.msra.mxu0 %v1057
        %1179 = vmatprep.subr.mxu0 %v1064
        %1180 = vmatpush1.msra.mxu0 %v1063
        %1181 = vmatprep.subr.mxu0 %v1070
        %1182 = vmatpush1.msra.mxu0 %v1069
        %1183 = vmatprep.mubr.f32.mxu0 %v1085
        %1184 = vmatmul.mubr.f32.gmra.mrb[0].mxu0 %v1081
        %v1185 = vpop.f32.mrb[0].mxu0
        %v1186 = vadd.f32 %v1092, %v1185
        %v1187 = vpop.f32.mrb[0].mxu0
        %v1188 = vadd.f32 %v1096, %v1187
        %1189 = vdwg.mxu0
        %1190 = vmatprep.subr.mxu0 %v886
        %1191 = vmatpush1.msra.mxu0 %v885
        %1192 = vmatprep.subr.mxu0 %v892
        %1193 = vmatpush1.msra.mxu0 %v891
        %1194 = vmatprep.subr.mxu0 %v898
        %1195 = vmatpush1.msra.mxu0 %v897
        %1196 = vmatprep.subr.mxu0 %v904
        %1197 = vmatpush1.msra.mxu0 %v903
        %1198 = vmatprep.subr.mxu0 %v910
        %1199 = vmatpush1.msra.mxu0 %v909
        %1200 = vmatprep.subr.mxu0 %v916
        %1201 = vmatpush1.msra.mxu0 %v915
        %1202 = vmatprep.subr.mxu0 %v922
        %1203 = vmatpush1.msra.mxu0 %v921
        %1204 = vmatprep.subr.mxu0 %v928
        %1205 = vmatpush1.msra.mxu0 %v927
        %1206 = vmatprep.subr.mxu0 %v934
        %1207 = vmatpush1.msra.mxu0 %v933
        %1208 = vmatprep.subr.mxu0 %v940
        %1209 = vmatpush1.msra.mxu0 %v939
        %1210 = vmatprep.subr.mxu0 %v946
        %1211 = vmatpush1.msra.mxu0 %v945
        %1212 = vmatprep.subr.mxu0 %v952
        %1213 = vmatpush1.msra.mxu0 %v951
        %1214 = vmatprep.subr.mxu0 %v958
        %1215 = vmatpush1.msra.mxu0 %v957
        %1216 = vmatprep.subr.mxu0 %v964
        %1217 = vmatpush1.msra.mxu0 %v963
        %1218 = vmatprep.subr.mxu0 %v970
        %1219 = vmatpush1.msra.mxu0 %v969
        %1220 = vmatprep.subr.mxu0 %v976
        %1221 = vmatpush1.msra.mxu0 %v975
        %1222 = vmatprep.subr.mxu0 %v982
        %1223 = vmatpush1.msra.mxu0 %v981
        %1224 = vmatprep.subr.mxu0 %v988
        %1225 = vmatpush1.msra.mxu0 %v987
        %1226 = vmatprep.subr.mxu0 %v994
        %1227 = vmatpush1.msra.mxu0 %v993
        %1228 = vmatprep.subr.mxu0 %v1000
        %1229 = vmatpush1.msra.mxu0 %v999
        %1230 = vmatprep.subr.mxu0 %v1006
        %1231 = vmatpush1.msra.mxu0 %v1005
        %1232 = vmatprep.subr.mxu0 %v1012
        %1233 = vmatpush1.msra.mxu0 %v1011
        %1234 = vmatprep.subr.mxu0 %v1018
        %1235 = vmatpush1.msra.mxu0 %v1017
        %1236 = vmatprep.subr.mxu0 %v1024
        %1237 = vmatpush1.msra.mxu0 %v1023
        %1238 = vmatprep.subr.mxu0 %v1030
        %1239 = vmatpush1.msra.mxu0 %v1029
        %1240 = vmatprep.subr.mxu0 %v1036
        %1241 = vmatpush1.msra.mxu0 %v1035
        %1242 = vmatprep.subr.mxu0 %v1042
        %1243 = vmatpush1.msra.mxu0 %v1041
        %1244 = vmatprep.subr.mxu0 %v1048
        %1245 = vmatpush1.msra.mxu0 %v1047
        %1246 = vmatprep.subr.mxu0 %v1054
        %1247 = vmatpush1.msra.mxu0 %v1053
        %1248 = vmatprep.subr.mxu0 %v1060
        %1249 = vmatpush1.msra.mxu0 %v1059
        %1250 = vmatprep.subr.mxu0 %v1066
        %1251 = vmatpush1.msra.mxu0 %v1065
        %1252 = vmatprep.subr.mxu0 %v1072
        %1253 = vmatpush1.msra.mxu0 %v1071
        %1254 = vmatprep.mubr.f32.mxu0 %v1085
        %1255 = vmatmul.mubr.f32.gmra.mrb[0].mxu0 %v1081
        %v1256 = vpop.f32.mrb[0].mxu0
        %v1257 = vadd.f32 %v1100, %v1256
        %v1258 = vpop.f32.mrb[0].mxu0
        %v1259 = vadd.f32 %v1104, %v1258
        %1260 = vdwg.mxu0
        %1261 = vmatprep.subr.mxu0 %v888
        %1262 = vmatpush1.msra.mxu0 %v887
        %1263 = vmatprep.subr.mxu0 %v894
        %1264 = vmatpush1.msra.mxu0 %v893
        %1265 = vmatprep.subr.mxu0 %v900
        %1266 = vmatpush1.msra.mxu0 %v899
        %1267 = vmatprep.subr.mxu0 %v906
        %1268 = vmatpush1.msra.mxu0 %v905
        %1269 = vmatprep.subr.mxu0 %v912
        %1270 = vmatpush1.msra.mxu0 %v911
        %1271 = vmatprep.subr.mxu0 %v918
        %1272 = vmatpush1.msra.mxu0 %v917
        %1273 = vmatprep.subr.mxu0 %v924
        %1274 = vmatpush1.msra.mxu0 %v923
        %1275 = vmatprep.subr.mxu0 %v930
        %1276 = vmatpush1.msra.mxu0 %v929
        %1277 = vmatprep.subr.mxu0 %v936
        %1278 = vmatpush1.msra.mxu0 %v935
        %1279 = vmatprep.subr.mxu0 %v942
        %1280 = vmatpush1.msra.mxu0 %v941
        %1281 = vmatprep.subr.mxu0 %v948
        %1282 = vmatpush1.msra.mxu0 %v947
        %1283 = vmatprep.subr.mxu0 %v954
        %1284 = vmatpush1.msra.mxu0 %v953
        %1285 = vmatprep.subr.mxu0 %v960
        %1286 = vmatpush1.msra.mxu0 %v959
        %1287 = vmatprep.subr.mxu0 %v966
        %1288 = vmatpush1.msra.mxu0 %v965
        %1289 = vmatprep.subr.mxu0 %v972
        %1290 = vmatpush1.msra.mxu0 %v971
        %1291 = vmatprep.subr.mxu0 %v978
        %1292 = vmatpush1.msra.mxu0 %v977
        %1293 = vmatprep.subr.mxu0 %v984
        %1294 = vmatpush1.msra.mxu0 %v983
        %1295 = vmatprep.subr.mxu0 %v990
        %1296 = vmatpush1.msra.mxu0 %v989
        %1297 = vmatprep.subr.mxu0 %v996
        %1298 = vmatpush1.msra.mxu0 %v995
        %1299 = vmatprep.subr.mxu0 %v1002
        %1300 = vmatpush1.msra.mxu0 %v1001
        %1301 = vmatprep.subr.mxu0 %v1008
        %1302 = vmatpush1.msra.mxu0 %v1007
        %1303 = vmatprep.subr.mxu0 %v1014
        %1304 = vmatpush1.msra.mxu0 %v1013
        %1305 = vmatprep.subr.mxu0 %v1020
        %1306 = vmatpush1.msra.mxu0 %v1019
        %1307 = vmatprep.subr.mxu0 %v1026
        %1308 = vmatpush1.msra.mxu0 %v1025
        %1309 = vmatprep.subr.mxu0 %v1032
        %1310 = vmatpush1.msra.mxu0 %v1031
        %1311 = vmatprep.subr.mxu0 %v1038
        %1312 = vmatpush1.msra.mxu0 %v1037
        %1313 = vmatprep.subr.mxu0 %v1044
        %1314 = vmatpush1.msra.mxu0 %v1043
        %1315 = vmatprep.subr.mxu0 %v1050
        %1316 = vmatpush1.msra.mxu0 %v1049
        %1317 = vmatprep.subr.mxu0 %v1056
        %1318 = vmatpush1.msra.mxu0 %v1055
        %1319 = vmatprep.subr.mxu0 %v1062
        %1320 = vmatpush1.msra.mxu0 %v1061
        %1321 = vmatprep.subr.mxu0 %v1068
        %1322 = vmatpush1.msra.mxu0 %v1067
        %1323 = vmatprep.subr.mxu0 %v1074
        %1324 = vmatpush1.msra.mxu0 %v1073
        %1325 = vmatprep.mubr.f32.mxu0 %v1085
        %1326 = vmatmul.mubr.f32.gmra.mrb[0].mxu0 %v1081
        %v1327 = vpop.f32.mrb[0].mxu0
        %v1328 = vadd.f32 %v1108, %v1327
        %v1329 = vpop.f32.mrb[0].mxu0
        %v1330 = vadd.f32 %v1112, %v1329
        %1331 = vdwg.mxu0
        %v1332 = vadd.f32 %v737, %v1186
        %v1333 = vadd.f32 %v739, %v1188
        %v1334 = vxor.u32 %v1332, 2147483648
        %v1335 = vxor.u32 %v1333, 2147483648
        %v1336 = vmul.f32 %v1334, 1.442695
        %v1337 = vpow.pop %v1336
        %v1338 = vmul.f32 %v1335, 1.442695
        %v1339 = vpow.pop %v1338
        %v1340 = vadd.f32 %v1337, 1.0
        %v1341 = vadd.f32 %v1339, 1.0
        %v1342 = vrcp.pop %v1340
        %v1343 = vmul.f32 1.0, %v1342
        %v1344 = vrcp.pop %v1341
        %v1345 = vmul.f32 1.0, %v1344
        %v1346 = vadd.f32 %v808, %v1257
        %v1347 = vadd.f32 %v810, %v1259
        %v1348 = vxor.u32 %v1346, 2147483648
        %v1349 = vxor.u32 %v1347, 2147483648
        %v1350 = vmul.f32 %v1348, 1.442695
        %v1351 = vpow.pop %v1350
        %v1352 = vmul.f32 %v1349, 1.442695
        %v1353 = vpow.pop %v1352
        %v1354 = vadd.f32 %v1351, 1.0
        %v1355 = vadd.f32 %v1353, 1.0
        %v1356 = vrcp.pop %v1354
        %v1357 = vmul.f32 1.0, %v1356
        %v1358 = vrcp.pop %v1355
        %v1359 = vmul.f32 1.0, %v1358
        %v1360 = vmul.f32 %v1343, %v1328
        %v1361 = vmul.f32 %v1345, %v1330
        %v1362 = vadd.f32 %v879, %v1360
        %v1363 = vadd.f32 %v881, %v1361
        %v1364 = vtanh.pop %v1362
        %v1365 = vtanh.pop %v1363
        %v1366 = vsub.f32 1.0, %v1357
        %v1367 = vsub.f32 1.0, %v1359
        %v1368 = vmul.f32 %v1366, %v1364
        %v1369 = vmul.f32 %v1367, %v1365
        %v1370 = vmul.f32 %v1357, %v1081
        %v1371 = vmul.f32 %v1359, %v1085
        %v1372 = vadd.f32 %v1368, %v1370
        %v1373 = vadd.f32 %v1369, %v1371
        %v1376 = vcombine.low %v1372, %v1373
        %v1378 = vunpack.c.l.s4 1966171168
        %v1379 = vunpack.c.0.s8 %v1378
        %v1380 = vlaneseq
        %v1381 = vshrl.u32 %v1380, 7
        %v1382 = vsub.s32 %v1379, %v1381
        %v1383 = vrot.slane %v1376, %v1382
        %v1385 = vunpack.c.l.s4 1966171168
        %v1386 = vunpack.c.0.s8 %v1385
        %v1387 = vlaneseq
        %v1388 = vshrl.u32 %v1387, 7
        %v1389 = vsub.s32 %v1386, %v1388
        %v1390 = vrot.slane %v1383, %v1389
        %1392 = vst.msk [vmem:[%s309] ss:$8 sm:$0x3] %vm341, %v1390
        %1393 = vst.msk [vmem:[%s309] ss:$8 sm:$0x0] %vm341, %v1390
        %1394 = vmatprep.subr.mxu0 %v884
        %1395 = vmatpush1.msra.mxu0 %v883
        %1396 = vmatprep.subr.mxu0 %v890
        %1397 = vmatpush1.msra.mxu0 %v889
        %1398 = vmatprep.subr.mxu0 %v896
        %1399 = vmatpush1.msra.mxu0 %v895
        %1400 = vmatprep.subr.mxu0 %v902
        %1401 = vmatpush1.msra.mxu0 %v901
        %1402 = vmatprep.subr.mxu0 %v908
        %1403 = vmatpush1.msra.mxu0 %v907
        %1404 = vmatprep.subr.mxu0 %v914
        %1405 = vmatpush1.msra.mxu0 %v913
        %1406 = vmatprep.subr.mxu0 %v920
        %1407 = vmatpush1.msra.mxu0 %v919
        %1408 = vmatprep.subr.mxu0 %v926
        %1409 = vmatpush1.msra.mxu0 %v925
        %1410 = vmatprep.subr.mxu0 %v932
        %1411 = vmatpush1.msra.mxu0 %v931
        %1412 = vmatprep.subr.mxu0 %v938
        %1413 = vmatpush1.msra.mxu0 %v937
        %1414 = vmatprep.subr.mxu0 %v944
        %1415 = vmatpush1.msra.mxu0 %v943
        %1416 = vmatprep.subr.mxu0 %v950
        %1417 = vmatpush1.msra.mxu0 %v949
        %1418 = vmatprep.subr.mxu0 %v956
        %1419 = vmatpush1.msra.mxu0 %v955
        %1420 = vmatprep.subr.mxu0 %v962
        %1421 = vmatpush1.msra.mxu0 %v961
        %1422 = vmatprep.subr.mxu0 %v968
        %1423 = vmatpush1.msra.mxu0 %v967
        %1424 = vmatprep.subr.mxu0 %v974
        %1425 = vmatpush1.msra.mxu0 %v973
        %1426 = vmatprep.subr.mxu0 %v980
        %1427 = vmatpush1.msra.mxu0 %v979
        %1428 = vmatprep.subr.mxu0 %v986
        %1429 = vmatpush1.msra.mxu0 %v985
        %1430 = vmatprep.subr.mxu0 %v992
        %1431 = vmatpush1.msra.mxu0 %v991
        %1432 = vmatprep.subr.mxu0 %v998
        %1433 = vmatpush1.msra.mxu0 %v997
        %1434 = vmatprep.subr.mxu0 %v1004
        %1435 = vmatpush1.msra.mxu0 %v1003
        %1436 = vmatprep.subr.mxu0 %v1010
        %1437 = vmatpush1.msra.mxu0 %v1009
        %1438 = vmatprep.subr.mxu0 %v1016
        %1439 = vmatpush1.msra.mxu0 %v1015
        %1440 = vmatprep.subr.mxu0 %v1022
        %1441 = vmatpush1.msra.mxu0 %v1021
        %1442 = vmatprep.subr.mxu0 %v1028
        %1443 = vmatpush1.msra.mxu0 %v1027
        %1444 = vmatprep.subr.mxu0 %v1034
        %1445 = vmatpush1.msra.mxu0 %v1033
        %1446 = vmatprep.subr.mxu0 %v1040
        %1447 = vmatpush1.msra.mxu0 %v1039
        %1448 = vmatprep.subr.mxu0 %v1046
        %1449 = vmatpush1.msra.mxu0 %v1045
        %1450 = vmatprep.subr.mxu0 %v1052
        %1451 = vmatpush1.msra.mxu0 %v1051
        %1452 = vmatprep.subr.mxu0 %v1058
        %1453 = vmatpush1.msra.mxu0 %v1057
        %1454 = vmatprep.subr.mxu0 %v1064
        %1455 = vmatpush1.msra.mxu0 %v1063
        %1456 = vmatprep.subr.mxu0 %v1070
        %1457 = vmatpush1.msra.mxu0 %v1069
        %1458 = vmatprep.mubr.f32.mxu0 %v1373
        %1459 = vmatmul.mubr.f32.gmra.mrb[0].mxu0 %v1372
        %v1460 = vpop.f32.mrb[0].mxu0
        %v1461 = vadd.f32 %v1092, %v1460
        %v1462 = vpop.f32.mrb[0].mxu0
        %v1463 = vadd.f32 %v1096, %v1462
        %1464 = vdwg.mxu0
        %1465 = vmatprep.subr.mxu0 %v886
        %1466 = vmatpush1.msra.mxu0 %v885
        %1467 = vmatprep.subr.mxu0 %v892
        %1468 = vmatpush1.msra.mxu0 %v891
        %1469 = vmatprep.subr.mxu0 %v898
        %1470 = vmatpush1.msra.mxu0 %v897
        %1471 = vmatprep.subr.mxu0 %v904
        %1472 = vmatpush1.msra.mxu0 %v903
        %1473 = vmatprep.subr.mxu0 %v910
        %1474 = vmatpush1.msra.mxu0 %v909
        %1475 = vmatprep.subr.mxu0 %v916
        %1476 = vmatpush1.msra.mxu0 %v915
        %1477 = vmatprep.subr.mxu0 %v922
        %1478 = vmatpush1.msra.mxu0 %v921
        %1479 = vmatprep.subr.mxu0 %v928
        %1480 = vmatpush1.msra.mxu0 %v927
        %1481 = vmatprep.subr.mxu0 %v934
        %1482 = vmatpush1.msra.mxu0 %v933
        %1483 = vmatprep.subr.mxu0 %v940
        %1484 = vmatpush1.msra.mxu0 %v939
        %1485 = vmatprep.subr.mxu0 %v946
        %1486 = vmatpush1.msra.mxu0 %v945
        %1487 = vmatprep.subr.mxu0 %v952
        %1488 = vmatpush1.msra.mxu0 %v951
        %1489 = vmatprep.subr.mxu0 %v958
        %1490 = vmatpush1.msra.mxu0 %v957
        %1491 = vmatprep.subr.mxu0 %v964
        %1492 = vmatpush1.msra.mxu0 %v963
        %1493 = vmatprep.subr.mxu0 %v970
        %1494 = vmatpush1.msra.mxu0 %v969
        %1495 = vmatprep.subr.mxu0 %v976
        %1496 = vmatpush1.msra.mxu0 %v975
        %1497 = vmatprep.subr.mxu0 %v982
        %1498 = vmatpush1.msra.mxu0 %v981
        %1499 = vmatprep.subr.mxu0 %v988
        %1500 = vmatpush1.msra.mxu0 %v987
        %1501 = vmatprep.subr.mxu0 %v994
        %1502 = vmatpush1.msra.mxu0 %v993
        %1503 = vmatprep.subr.mxu0 %v1000
        %1504 = vmatpush1.msra.mxu0 %v999
        %1505 = vmatprep.subr.mxu0 %v1006
        %1506 = vmatpush1.msra.mxu0 %v1005
        %1507 = vmatprep.subr.mxu0 %v1012
        %1508 = vmatpush1.msra.mxu0 %v1011
        %1509 = vmatprep.subr.mxu0 %v1018
        %1510 = vmatpush1.msra.mxu0 %v1017
        %1511 = vmatprep.subr.mxu0 %v1024
        %1512 = vmatpush1.msra.mxu0 %v1023
        %1513 = vmatprep.subr.mxu0 %v1030
        %1514 = vmatpush1.msra.mxu0 %v1029
        %1515 = vmatprep.subr.mxu0 %v1036
        %1516 = vmatpush1.msra.mxu0 %v1035
        %1517 = vmatprep.subr.mxu0 %v1042
        %1518 = vmatpush1.msra.mxu0 %v1041
        %1519 = vmatprep.subr.mxu0 %v1048
        %1520 = vmatpush1.msra.mxu0 %v1047
        %1521 = vmatprep.subr.mxu0 %v1054
        %1522 = vmatpush1.msra.mxu0 %v1053
        %1523 = vmatprep.subr.mxu0 %v1060
        %1524 = vmatpush1.msra.mxu0 %v1059
        %1525 = vmatprep.subr.mxu0 %v1066
        %1526 = vmatpush1.msra.mxu0 %v1065
        %1527 = vmatprep.subr.mxu0 %v1072
        %1528 = vmatpush1.msra.mxu0 %v1071
        %1529 = vmatprep.mubr.f32.mxu0 %v1373
        %1530 = vmatmul.mubr.f32.gmra.mrb[0].mxu0 %v1372
        %v1531 = vpop.f32.mrb[0].mxu0
        %v1532 = vadd.f32 %v1100, %v1531
        %v1533 = vpop.f32.mrb[0].mxu0
        %v1534 = vadd.f32 %v1104, %v1533
        %1535 = vdwg.mxu0
        %1536 = vmatprep.subr.mxu0 %v888
        %1537 = vmatpush1.msra.mxu0 %v887
        %1538 = vmatprep.subr.mxu0 %v894
        %1539 = vmatpush1.msra.mxu0 %v893
        %1540 = vmatprep.subr.mxu0 %v900
        %1541 = vmatpush1.msra.mxu0 %v899
        %1542 = vmatprep.subr.mxu0 %v906
        %1543 = vmatpush1.msra.mxu0 %v905
        %1544 = vmatprep.subr.mxu0 %v912
        %1545 = vmatpush1.msra.mxu0 %v911
        %1546 = vmatprep.subr.mxu0 %v918
        %1547 = vmatpush1.msra.mxu0 %v917
        %1548 = vmatprep.subr.mxu0 %v924
        %1549 = vmatpush1.msra.mxu0 %v923
        %1550 = vmatprep.subr.mxu0 %v930
        %1551 = vmatpush1.msra.mxu0 %v929
        %1552 = vmatprep.subr.mxu0 %v936
        %1553 = vmatpush1.msra.mxu0 %v935
        %1554 = vmatprep.subr.mxu0 %v942
        %1555 = vmatpush1.msra.mxu0 %v941
        %1556 = vmatprep.subr.mxu0 %v948
        %1557 = vmatpush1.msra.mxu0 %v947
        %1558 = vmatprep.subr.mxu0 %v954
        %1559 = vmatpush1.msra.mxu0 %v953
        %1560 = vmatprep.subr.mxu0 %v960
        %1561 = vmatpush1.msra.mxu0 %v959
        %1562 = vmatprep.subr.mxu0 %v966
        %1563 = vmatpush1.msra.mxu0 %v965
        %1564 = vmatprep.subr.mxu0 %v972
        %1565 = vmatpush1.msra.mxu0 %v971
        %1566 = vmatprep.subr.mxu0 %v978
        %1567 = vmatpush1.msra.mxu0 %v977
        %1568 = vmatprep.subr.mxu0 %v984
        %1569 = vmatpush1.msra.mxu0 %v983
        %1570 = vmatprep.subr.mxu0 %v990
        %1571 = vmatpush1.msra.mxu0 %v989
        %1572 = vmatprep.subr.mxu0 %v996
        %1573 = vmatpush1.msra.mxu0 %v995
        %1574 = vmatprep.subr.mxu0 %v1002
        %1575 = vmatpush1.msra.mxu0 %v1001
        %1576 = vmatprep.subr.mxu0 %v1008
        %1577 = vmatpush1.msra.mxu0 %v1007
        %1578 = vmatprep.subr.mxu0 %v1014
        %1579 = vmatpush1.msra.mxu0 %v1013
        %1580 = vmatprep.subr.mxu0 %v1020
        %1581 = vmatpush1.msra.mxu0 %v1019
        %1582 = vmatprep.subr.mxu0 %v1026
        %1583 = vmatpush1.msra.mxu0 %v1025
        %1584 = vmatprep.subr.mxu0 %v1032
        %1585 = vmatpush1.msra.mxu0 %v1031
        %1586 = vmatprep.subr.mxu0 %v1038
        %1587 = vmatpush1.msra.mxu0 %v1037
        %1588 = vmatprep.subr.mxu0 %v1044
        %1589 = vmatpush1.msra.mxu0 %v1043
        %1590 = vmatprep.subr.mxu0 %v1050
        %1591 = vmatpush1.msra.mxu0 %v1049
        %1592 = vmatprep.subr.mxu0 %v1056
        %1593 = vmatpush1.msra.mxu0 %v1055
        %1594 = vmatprep.subr.mxu0 %v1062
        %1595 = vmatpush1.msra.mxu0 %v1061
        %1596 = vmatprep.subr.mxu0 %v1068
        %1597 = vmatpush1.msra.mxu0 %v1067
        %1598 = vmatprep.subr.mxu0 %v1074
        %1599 = vmatpush1.msra.mxu0 %v1073
        %1600 = vmatprep.mubr.f32.mxu0 %v1373
        %1601 = vmatmul.mubr.f32.gmra.mrb[0].mxu0 %v1372
        %v1602 = vpop.f32.mrb[0].mxu0
        %v1603 = vadd.f32 %v1108, %v1602
        %v1604 = vpop.f32.mrb[0].mxu0
        %v1605 = vadd.f32 %v1112, %v1604
        %1606 = vdwg.mxu0
        %v1609 = vrot.slane %v1461, 7
        %v1610 = vrot.slane %v1463, 7
        %v1613 = vadd.f32 %v737, %v1609
        %v1614 = vadd.f32 %v739, %v1610
        %v1615 = vxor.u32 %v1613, 2147483648
        %v1616 = vxor.u32 %v1614, 2147483648
        %v1617 = vmul.f32 %v1615, 1.442695
        %v1618 = vpow.pop %v1617
        %v1619 = vmul.f32 %v1616, 1.442695
        %v1620 = vpow.pop %v1619
        %v1621 = vadd.f32 %v1618, 1.0
        %v1622 = vadd.f32 %v1620, 1.0
        %v1623 = vrcp.pop %v1621
        %v1624 = vmul.f32 1.0, %v1623
        %v1625 = vrcp.pop %v1622
        %v1626 = vmul.f32 1.0, %v1625
        %v1629 = vrot.slane %v1532, 7
        %v1630 = vrot.slane %v1534, 7
        %v1633 = vadd.f32 %v808, %v1629
        %v1634 = vadd.f32 %v810, %v1630
        %v1635 = vxor.u32 %v1633, 2147483648
        %v1636 = vxor.u32 %v1634, 2147483648
        %v1637 = vmul.f32 %v1635, 1.442695
        %v1638 = vpow.pop %v1637
        %v1639 = vmul.f32 %v1636, 1.442695
        %v1640 = vpow.pop %v1639
        %v1641 = vadd.f32 %v1638, 1.0
        %v1642 = vadd.f32 %v1640, 1.0
        %v1643 = vrcp.pop %v1641
        %v1644 = vmul.f32 1.0, %v1643
        %v1645 = vrcp.pop %v1642
        %v1646 = vmul.f32 1.0, %v1645
        %v1649 = vrot.slane %v1603, 7
        %v1650 = vrot.slane %v1605, 7
        %v1653 = vmul.f32 %v1624, %v1649
        %v1654 = vmul.f32 %v1626, %v1650
        %v1655 = vadd.f32 %v879, %v1653
        %v1656 = vadd.f32 %v881, %v1654
        %v1657 = vtanh.pop %v1655
        %v1658 = vtanh.pop %v1656
        %v1659 = vsub.f32 1.0, %v1644
        %v1660 = vsub.f32 1.0, %v1646
        %v1661 = vmul.f32 %v1659, %v1657
        %v1662 = vmul.f32 %v1660, %v1658
        %v1663 = vrot.slane %v1372, 7
        %v1664 = vrot.slane %v1373, 7
        %v1667 = vmul.f32 %v1644, %v1663
        %v1668 = vmul.f32 %v1646, %v1664
        %v1669 = vadd.f32 %v1661, %v1667
        %v1670 = vadd.f32 %v1662, %v1668
        %v1673 = vcombine.low %v1669, %v1670
        %v1675 = vunpack.c.l.s4 1966171168
        %v1676 = vunpack.c.0.s8 %v1675
        %v1677 = vlaneseq
        %v1678 = vshrl.u32 %v1677, 7
        %v1679 = vsub.s32 %v1676, %v1678
        %v1680 = vrot.slane %v1673, %v1679
        %v1681 = vcombine.high %v1680, %v1680
        %v1683 = vunpack.c.l.s4 1966171168
        %v1684 = vunpack.c.0.s8 %v1683
        %v1685 = vlaneseq
        %v1686 = vshrl.u32 %v1685, 7
        %v1687 = vsub.s32 %v1684, %v1686
        %v1688 = vrot.slane %v1681, %v1687
        %s1690 = scalar_lea.vmem %s309, 1 [#allocation12]
        %1691 = vst.msk [vmem:[%s1690] ss:$8 sm:$0x3] %vm341, %v1688
        %1692 = vst.msk [vmem:[%s1690] ss:$8 sm:$0x0] %vm341, %v1688
        %v1693 = vrot.slane %v1669, 1
        %v1694 = vrot.slane %v1670, 1
        %1697 = vmatprep.subr.mxu0 %v884
        %1698 = vmatpush1.msra.mxu0 %v883
        %1699 = vmatprep.subr.mxu0 %v890
        %1700 = vmatpush1.msra.mxu0 %v889
        %1701 = vmatprep.subr.mxu0 %v896
        %1702 = vmatpush1.msra.mxu0 %v895
        %1703 = vmatprep.subr.mxu0 %v902
        %1704 = vmatpush1.msra.mxu0 %v901
        %1705 = vmatprep.subr.mxu0 %v908
        %1706 = vmatpush1.msra.mxu0 %v907
        %1707 = vmatprep.subr.mxu0 %v914
        %1708 = vmatpush1.msra.mxu0 %v913
        %1709 = vmatprep.subr.mxu0 %v920
        %1710 = vmatpush1.msra.mxu0 %v919
        %1711 = vmatprep.subr.mxu0 %v926
        %1712 = vmatpush1.msra.mxu0 %v925
        %1713 = vmatprep.subr.mxu0 %v932
        %1714 = vmatpush1.msra.mxu0 %v931
        %1715 = vmatprep.subr.mxu0 %v938
        %1716 = vmatpush1.msra.mxu0 %v937
        %1717 = vmatprep.subr.mxu0 %v944
        %1718 = vmatpush1.msra.mxu0 %v943
        %1719 = vmatprep.subr.mxu0 %v950
        %1720 = vmatpush1.msra.mxu0 %v949
        %1721 = vmatprep.subr.mxu0 %v956
        %1722 = vmatpush1.msra.mxu0 %v955
        %1723 = vmatprep.subr.mxu0 %v962
        %1724 = vmatpush1.msra.mxu0 %v961
        %1725 = vmatprep.subr.mxu0 %v968
        %1726 = vmatpush1.msra.mxu0 %v967
        %1727 = vmatprep.subr.mxu0 %v974
        %1728 = vmatpush1.msra.mxu0 %v973
        %1729 = vmatprep.subr.mxu0 %v980
        %1730 = vmatpush1.msra.mxu0 %v979
        %1731 = vmatprep.subr.mxu0 %v986
        %1732 = vmatpush1.msra.mxu0 %v985
        %1733 = vmatprep.subr.mxu0 %v992
        %1734 = vmatpush1.msra.mxu0 %v991
        %1735 = vmatprep.subr.mxu0 %v998
        %1736 = vmatpush1.msra.mxu0 %v997
        %1737 = vmatprep.subr.mxu0 %v1004
        %1738 = vmatpush1.msra.mxu0 %v1003
        %1739 = vmatprep.subr.mxu0 %v1010
        %1740 = vmatpush1.msra.mxu0 %v1009
        %1741 = vmatprep.subr.mxu0 %v1016
        %1742 = vmatpush1.msra.mxu0 %v1015
        %1743 = vmatprep.subr.mxu0 %v1022
        %1744 = vmatpush1.msra.mxu0 %v1021
        %1745 = vmatprep.subr.mxu0 %v1028
        %1746 = vmatpush1.msra.mxu0 %v1027
        %1747 = vmatprep.subr.mxu0 %v1034
        %1748 = vmatpush1.msra.mxu0 %v1033
        %1749 = vmatprep.subr.mxu0 %v1040
        %1750 = vmatpush1.msra.mxu0 %v1039
        %1751 = vmatprep.subr.mxu0 %v1046
        %1752 = vmatpush1.msra.mxu0 %v1045
        %1753 = vmatprep.subr.mxu0 %v1052
        %1754 = vmatpush1.msra.mxu0 %v1051
        %1755 = vmatprep.subr.mxu0 %v1058
        %1756 = vmatpush1.msra.mxu0 %v1057
        %1757 = vmatprep.subr.mxu0 %v1064
        %1758 = vmatpush1.msra.mxu0 %v1063
        %1759 = vmatprep.subr.mxu0 %v1070
        %1760 = vmatpush1.msra.mxu0 %v1069
        %1761 = vmatprep.mubr.f32.mxu0 %v1694
        %1762 = vmatmul.mubr.f32.gmra.mrb[0].mxu0 %v1693
        %v1763 = vpop.f32.mrb[0].mxu0
        %v1764 = vadd.f32 %v1092, %v1763
        %v1765 = vpop.f32.mrb[0].mxu0
        %v1766 = vadd.f32 %v1096, %v1765
        %1767 = vdwg.mxu0
        %1768 = vmatprep.subr.mxu0 %v886
        %1769 = vmatpush1.msra.mxu0 %v885
        %1770 = vmatprep.subr.mxu0 %v892
        %1771 = vmatpush1.msra.mxu0 %v891
        %1772 = vmatprep.subr.mxu0 %v898
        %1773 = vmatpush1.msra.mxu0 %v897
        %1774 = vmatprep.subr.mxu0 %v904
        %1775 = vmatpush1.msra.mxu0 %v903
        %1776 = vmatprep.subr.mxu0 %v910
        %1777 = vmatpush1.msra.mxu0 %v909
        %1778 = vmatprep.subr.mxu0 %v916
        %1779 = vmatpush1.msra.mxu0 %v915
        %1780 = vmatprep.subr.mxu0 %v922
        %1781 = vmatpush1.msra.mxu0 %v921
        %1782 = vmatprep.subr.mxu0 %v928
        %1783 = vmatpush1.msra.mxu0 %v927
        %1784 = vmatprep.subr.mxu0 %v934
        %1785 = vmatpush1.msra.mxu0 %v933
        %1786 = vmatprep.subr.mxu0 %v940
        %1787 = vmatpush1.msra.mxu0 %v939
        %1788 = vmatprep.subr.mxu0 %v946
        %1789 = vmatpush1.msra.mxu0 %v945
        %1790 = vmatprep.subr.mxu0 %v952
        %1791 = vmatpush1.msra.mxu0 %v951
        %1792 = vmatprep.subr.mxu0 %v958
        %1793 = vmatpush1.msra.mxu0 %v957
        %1794 = vmatprep.subr.mxu0 %v964
        %1795 = vmatpush1.msra.mxu0 %v963
        %1796 = vmatprep.subr.mxu0 %v970
        %1797 = vmatpush1.msra.mxu0 %v969
        %1798 = vmatprep.subr.mxu0 %v976
        %1799 = vmatpush1.msra.mxu0 %v975
        %1800 = vmatprep.subr.mxu0 %v982
        %1801 = vmatpush1.msra.mxu0 %v981
        %1802 = vmatprep.subr.mxu0 %v988
        %1803 = vmatpush1.msra.mxu0 %v987
        %1804 = vmatprep.subr.mxu0 %v994
        %1805 = vmatpush1.msra.mxu0 %v993
        %1806 = vmatprep.subr.mxu0 %v1000
        %1807 = vmatpush1.msra.mxu0 %v999
        %1808 = vmatprep.subr.mxu0 %v1006
        %1809 = vmatpush1.msra.mxu0 %v1005
        %1810 = vmatprep.subr.mxu0 %v1012
        %1811 = vmatpush1.msra.mxu0 %v1011
        %1812 = vmatprep.subr.mxu0 %v1018
        %1813 = vmatpush1.msra.mxu0 %v1017
        %1814 = vmatprep.subr.mxu0 %v1024
        %1815 = vmatpush1.msra.mxu0 %v1023
        %1816 = vmatprep.subr.mxu0 %v1030
        %1817 = vmatpush1.msra.mxu0 %v1029
        %1818 = vmatprep.subr.mxu0 %v1036
        %1819 = vmatpush1.msra.mxu0 %v1035
        %1820 = vmatprep.subr.mxu0 %v1042
        %1821 = vmatpush1.msra.mxu0 %v1041
        %1822 = vmatprep.subr.mxu0 %v1048
        %1823 = vmatpush1.msra.mxu0 %v1047
        %1824 = vmatprep.subr.mxu0 %v1054
        %1825 = vmatpush1.msra.mxu0 %v1053
        %1826 = vmatprep.subr.mxu0 %v1060
        %1827 = vmatpush1.msra.mxu0 %v1059
        %1828 = vmatprep.subr.mxu0 %v1066
        %1829 = vmatpush1.msra.mxu0 %v1065
        %1830 = vmatprep.subr.mxu0 %v1072
        %1831 = vmatpush1.msra.mxu0 %v1071
        %1832 = vmatprep.mubr.f32.mxu0 %v1694
        %1833 = vmatmul.mubr.f32.gmra.mrb[0].mxu0 %v1693
        %v1834 = vpop.f32.mrb[0].mxu0
        %v1835 = vadd.f32 %v1100, %v1834
        %v1836 = vpop.f32.mrb[0].mxu0
        %v1837 = vadd.f32 %v1104, %v1836
        %1838 = vdwg.mxu0
        %1839 = vmatprep.subr.mxu0 %v888
        %1840 = vmatpush1.msra.mxu0 %v887
        %1841 = vmatprep.subr.mxu0 %v894
        %1842 = vmatpush1.msra.mxu0 %v893
        %1843 = vmatprep.subr.mxu0 %v900
        %1844 = vmatpush1.msra.mxu0 %v899
        %1845 = vmatprep.subr.mxu0 %v906
        %1846 = vmatpush1.msra.mxu0 %v905
        %1847 = vmatprep.subr.mxu0 %v912
        %1848 = vmatpush1.msra.mxu0 %v911
        %1849 = vmatprep.subr.mxu0 %v918
        %1850 = vmatpush1.msra.mxu0 %v917
        %1851 = vmatprep.subr.mxu0 %v924
        %1852 = vmatpush1.msra.mxu0 %v923
        %1853 = vmatprep.subr.mxu0 %v930
        %1854 = vmatpush1.msra.mxu0 %v929
        %1855 = vmatprep.subr.mxu0 %v936
        %1856 = vmatpush1.msra.mxu0 %v935
        %1857 = vmatprep.subr.mxu0 %v942
        %1858 = vmatpush1.msra.mxu0 %v941
        %1859 = vmatprep.subr.mxu0 %v948
        %1860 = vmatpush1.msra.mxu0 %v947
        %1861 = vmatprep.subr.mxu0 %v954
        %1862 = vmatpush1.msra.mxu0 %v953
        %1863 = vmatprep.subr.mxu0 %v960
        %1864 = vmatpush1.msra.mxu0 %v959
        %1865 = vmatprep.subr.mxu0 %v966
        %1866 = vmatpush1.msra.mxu0 %v965
        %1867 = vmatprep.subr.mxu0 %v972
        %1868 = vmatpush1.msra.mxu0 %v971
        %1869 = vmatprep.subr.mxu0 %v978
        %1870 = vmatpush1.msra.mxu0 %v977
        %1871 = vmatprep.subr.mxu0 %v984
        %1872 = vmatpush1.msra.mxu0 %v983
        %1873 = vmatprep.subr.mxu0 %v990
        %1874 = vmatpush1.msra.mxu0 %v989
        %1875 = vmatprep.subr.mxu0 %v996
        %1876 = vmatpush1.msra.mxu0 %v995
        %1877 = vmatprep.subr.mxu0 %v1002
        %1878 = vmatpush1.msra.mxu0 %v1001
        %1879 = vmatprep.subr.mxu0 %v1008
        %1880 = vmatpush1.msra.mxu0 %v1007
        %1881 = vmatprep.subr.mxu0 %v1014
        %1882 = vmatpush1.msra.mxu0 %v1013
        %1883 = vmatprep.subr.mxu0 %v1020
        %1884 = vmatpush1.msra.mxu0 %v1019
        %1885 = vmatprep.subr.mxu0 %v1026
        %1886 = vmatpush1.msra.mxu0 %v1025
        %1887 = vmatprep.subr.mxu0 %v1032
        %1888 = vmatpush1.msra.mxu0 %v1031
        %1889 = vmatprep.subr.mxu0 %v1038
        %1890 = vmatpush1.msra.mxu0 %v1037
        %1891 = vmatprep.subr.mxu0 %v1044
        %1892 = vmatpush1.msra.mxu0 %v1043
        %1893 = vmatprep.subr.mxu0 %v1050
        %1894 = vmatpush1.msra.mxu0 %v1049
        %1895 = vmatprep.subr.mxu0 %v1056
        %1896 = vmatpush1.msra.mxu0 %v1055
        %1897 = vmatprep.subr.mxu0 %v1062
        %1898 = vmatpush1.msra.mxu0 %v1061
        %1899 = vmatprep.subr.mxu0 %v1068
        %1900 = vmatpush1.msra.mxu0 %v1067
        %1901 = vmatprep.subr.mxu0 %v1074
        %1902 = vmatpush1.msra.mxu0 %v1073
        %1903 = vmatprep.mubr.f32.mxu0 %v1694
        %1904 = vmatmul.mubr.f32.gmra.mrb[0].mxu0 %v1693
        %v1905 = vpop.f32.mrb[0].mxu0
        %v1906 = vadd.f32 %v1108, %v1905
        %v1907 = vpop.f32.mrb[0].mxu0
        %v1908 = vadd.f32 %v1112, %v1907
        %1909 = vdwg.mxu0
        %v1912 = vrot.slane %v1764, 6
        %v1913 = vrot.slane %v1766, 6
        %v1916 = vadd.f32 %v737, %v1912
        %v1917 = vadd.f32 %v739, %v1913
        %v1918 = vxor.u32 %v1916, 2147483648
        %v1919 = vxor.u32 %v1917, 2147483648
        %v1920 = vmul.f32 %v1918, 1.442695
        %v1921 = vpow.pop %v1920
        %v1922 = vmul.f32 %v1919, 1.442695
        %v1923 = vpow.pop %v1922
        %v1924 = vadd.f32 %v1921, 1.0
        %v1925 = vadd.f32 %v1923, 1.0
        %v1926 = vrcp.pop %v1924
        %v1927 = vmul.f32 1.0, %v1926
        %v1928 = vrcp.pop %v1925
        %v1929 = vmul.f32 1.0, %v1928
        %v1932 = vrot.slane %v1835, 6
        %v1933 = vrot.slane %v1837, 6
        %v1936 = vadd.f32 %v808, %v1932
        %v1937 = vadd.f32 %v810, %v1933
        %v1938 = vxor.u32 %v1936, 2147483648
        %v1939 = vxor.u32 %v1937, 2147483648
        %v1940 = vmul.f32 %v1938, 1.442695
        %v1941 = vpow.pop %v1940
        %v1942 = vmul.f32 %v1939, 1.442695
        %v1943 = vpow.pop %v1942
        %v1944 = vadd.f32 %v1941, 1.0
        %v1945 = vadd.f32 %v1943, 1.0
        %v1946 = vrcp.pop %v1944
        %v1947 = vmul.f32 1.0, %v1946
        %v1948 = vrcp.pop %v1945
        %v1949 = vmul.f32 1.0, %v1948
        %v1952 = vrot.slane %v1906, 6
        %v1953 = vrot.slane %v1908, 6
        %v1956 = vmul.f32 %v1927, %v1952
        %v1957 = vmul.f32 %v1929, %v1953
        %v1958 = vadd.f32 %v879, %v1956
        %v1959 = vadd.f32 %v881, %v1957
        %v1960 = vtanh.pop %v1958
        %v1961 = vtanh.pop %v1959
        %v1962 = vsub.f32 1.0, %v1947
        %v1963 = vsub.f32 1.0, %v1949
        %v1964 = vmul.f32 %v1962, %v1960
        %v1965 = vmul.f32 %v1963, %v1961
        %v1966 = vrot.slane %v1669, 7
        %v1967 = vrot.slane %v1670, 7
        %v1970 = vmul.f32 %v1947, %v1966
        %v1971 = vmul.f32 %v1949, %v1967
        %v1972 = vadd.f32 %v1964, %v1970
        %v1973 = vadd.f32 %v1965, %v1971
        %v1976 = vcombine.low %v1972, %v1973
        %v1978 = vunpack.c.l.s4 1966171168
        %v1979 = vunpack.c.0.s8 %v1978
        %v1980 = vlaneseq
        %v1981 = vshrl.u32 %v1980, 7
        %v1982 = vsub.s32 %v1979, %v1981
        %v1983 = vrot.slane %v1976, %v1982
        %v1985 = vunpack.c.l.s4 1966171168
        %v1986 = vunpack.c.0.s8 %v1985
        %v1987 = vlaneseq
        %v1988 = vshrl.u32 %v1987, 7
        %v1989 = vsub.s32 %v1986, %v1988
        %v1990 = vrot.slane %v1983, %v1989
        %v1991 = vcombine.high %v1990, %v1990
        %s1993 = scalar_lea.vmem %s309, 2 [#allocation12]
        %1994 = vst.msk [vmem:[%s1993] ss:$8 sm:$0x3] %vm341, %v1991
        %1995 = vst.msk [vmem:[%s1993] ss:$8 sm:$0x0] %vm341, %v1991
        %v1996 = vrot.slane %v1972, 2
        %v1997 = vrot.slane %v1973, 2
        %2000 = vmatprep.subr.mxu0 %v884
        %2001 = vmatpush1.msra.mxu0 %v883
        %2002 = vmatprep.subr.mxu0 %v890
        %2003 = vmatpush1.msra.mxu0 %v889
        %2004 = vmatprep.subr.mxu0 %v896
        %2005 = vmatpush1.msra.mxu0 %v895
        %2006 = vmatprep.subr.mxu0 %v902
        %2007 = vmatpush1.msra.mxu0 %v901
        %2008 = vmatprep.subr.mxu0 %v908
        %2009 = vmatpush1.msra.mxu0 %v907
        %2010 = vmatprep.subr.mxu0 %v914
        %2011 = vmatpush1.msra.mxu0 %v913
        %2012 = vmatprep.subr.mxu0 %v920
        %2013 = vmatpush1.msra.mxu0 %v919
        %2014 = vmatprep.subr.mxu0 %v926
        %2015 = vmatpush1.msra.mxu0 %v925
        %2016 = vmatprep.subr.mxu0 %v932
        %2017 = vmatpush1.msra.mxu0 %v931
        %2018 = vmatprep.subr.mxu0 %v938
        %2019 = vmatpush1.msra.mxu0 %v937
        %2020 = vmatprep.subr.mxu0 %v944
        %2021 = vmatpush1.msra.mxu0 %v943
        %2022 = vmatprep.subr.mxu0 %v950
        %2023 = vmatpush1.msra.mxu0 %v949
        %2024 = vmatprep.subr.mxu0 %v956
        %2025 = vmatpush1.msra.mxu0 %v955
        %2026 = vmatprep.subr.mxu0 %v962
        %2027 = vmatpush1.msra.mxu0 %v961
        %2028 = vmatprep.subr.mxu0 %v968
        %2029 = vmatpush1.msra.mxu0 %v967
        %2030 = vmatprep.subr.mxu0 %v974
        %2031 = vmatpush1.msra.mxu0 %v973
        %2032 = vmatprep.subr.mxu0 %v980
        %2033 = vmatpush1.msra.mxu0 %v979
        %2034 = vmatprep.subr.mxu0 %v986
        %2035 = vmatpush1.msra.mxu0 %v985
        %2036 = vmatprep.subr.mxu0 %v992
        %2037 = vmatpush1.msra.mxu0 %v991
        %2038 = vmatprep.subr.mxu0 %v998
        %2039 = vmatpush1.msra.mxu0 %v997
        %2040 = vmatprep.subr.mxu0 %v1004
        %2041 = vmatpush1.msra.mxu0 %v1003
        %2042 = vmatprep.subr.mxu0 %v1010
        %2043 = vmatpush1.msra.mxu0 %v1009
        %2044 = vmatprep.subr.mxu0 %v1016
        %2045 = vmatpush1.msra.mxu0 %v1015
        %2046 = vmatprep.subr.mxu0 %v1022
        %2047 = vmatpush1.msra.mxu0 %v1021
        %2048 = vmatprep.subr.mxu0 %v1028
        %2049 = vmatpush1.msra.mxu0 %v1027
        %2050 = vmatprep.subr.mxu0 %v1034
        %2051 = vmatpush1.msra.mxu0 %v1033
        %2052 = vmatprep.subr.mxu0 %v1040
        %2053 = vmatpush1.msra.mxu0 %v1039
        %2054 = vmatprep.subr.mxu0 %v1046
        %2055 = vmatpush1.msra.mxu0 %v1045
        %2056 = vmatprep.subr.mxu0 %v1052
        %2057 = vmatpush1.msra.mxu0 %v1051
        %2058 = vmatprep.subr.mxu0 %v1058
        %2059 = vmatpush1.msra.mxu0 %v1057
        %2060 = vmatprep.subr.mxu0 %v1064
        %2061 = vmatpush1.msra.mxu0 %v1063
        %2062 = vmatprep.subr.mxu0 %v1070
        %2063 = vmatpush1.msra.mxu0 %v1069
        %2064 = vmatprep.mubr.f32.mxu0 %v1997
        %2065 = vmatmul.mubr.f32.gmra.mrb[0].mxu0 %v1996
        %v2066 = vpop.f32.mrb[0].mxu0
        %v2067 = vadd.f32 %v1092, %v2066
        %v2068 = vpop.f32.mrb[0].mxu0
        %v2069 = vadd.f32 %v1096, %v2068
        %2070 = vdwg.mxu0
        %2071 = vmatprep.subr.mxu0 %v886
        %2072 = vmatpush1.msra.mxu0 %v885
        %2073 = vmatprep.subr.mxu0 %v892
        %2074 = vmatpush1.msra.mxu0 %v891
        %2075 = vmatprep.subr.mxu0 %v898
        %2076 = vmatpush1.msra.mxu0 %v897
        %2077 = vmatprep.subr.mxu0 %v904
        %2078 = vmatpush1.msra.mxu0 %v903
        %2079 = vmatprep.subr.mxu0 %v910
        %2080 = vmatpush1.msra.mxu0 %v909
        %2081 = vmatprep.subr.mxu0 %v916
        %2082 = vmatpush1.msra.mxu0 %v915
        %2083 = vmatprep.subr.mxu0 %v922
        %2084 = vmatpush1.msra.mxu0 %v921
        %2085 = vmatprep.subr.mxu0 %v928
        %2086 = vmatpush1.msra.mxu0 %v927
        %2087 = vmatprep.subr.mxu0 %v934
        %2088 = vmatpush1.msra.mxu0 %v933
        %2089 = vmatprep.subr.mxu0 %v940
        %2090 = vmatpush1.msra.mxu0 %v939
        %2091 = vmatprep.subr.mxu0 %v946
        %2092 = vmatpush1.msra.mxu0 %v945
        %2093 = vmatprep.subr.mxu0 %v952
        %2094 = vmatpush1.msra.mxu0 %v951
        %2095 = vmatprep.subr.mxu0 %v958
        %2096 = vmatpush1.msra.mxu0 %v957
        %2097 = vmatprep.subr.mxu0 %v964
        %2098 = vmatpush1.msra.mxu0 %v963
        %2099 = vmatprep.subr.mxu0 %v970
        %2100 = vmatpush1.msra.mxu0 %v969
        %2101 = vmatprep.subr.mxu0 %v976
        %2102 = vmatpush1.msra.mxu0 %v975
        %2103 = vmatprep.subr.mxu0 %v982
        %2104 = vmatpush1.msra.mxu0 %v981
        %2105 = vmatprep.subr.mxu0 %v988
        %2106 = vmatpush1.msra.mxu0 %v987
        %2107 = vmatprep.subr.mxu0 %v994
        %2108 = vmatpush1.msra.mxu0 %v993
        %2109 = vmatprep.subr.mxu0 %v1000
        %2110 = vmatpush1.msra.mxu0 %v999
        %2111 = vmatprep.subr.mxu0 %v1006
        %2112 = vmatpush1.msra.mxu0 %v1005
        %2113 = vmatprep.subr.mxu0 %v1012
        %2114 = vmatpush1.msra.mxu0 %v1011
        %2115 = vmatprep.subr.mxu0 %v1018
        %2116 = vmatpush1.msra.mxu0 %v1017
        %2117 = vmatprep.subr.mxu0 %v1024
        %2118 = vmatpush1.msra.mxu0 %v1023
        %2119 = vmatprep.subr.mxu0 %v1030
        %2120 = vmatpush1.msra.mxu0 %v1029
        %2121 = vmatprep.subr.mxu0 %v1036
        %2122 = vmatpush1.msra.mxu0 %v1035
        %2123 = vmatprep.subr.mxu0 %v1042
        %2124 = vmatpush1.msra.mxu0 %v1041
        %2125 = vmatprep.subr.mxu0 %v1048
        %2126 = vmatpush1.msra.mxu0 %v1047
        %2127 = vmatprep.subr.mxu0 %v1054
        %2128 = vmatpush1.msra.mxu0 %v1053
        %2129 = vmatprep.subr.mxu0 %v1060
        %2130 = vmatpush1.msra.mxu0 %v1059
        %2131 = vmatprep.subr.mxu0 %v1066
        %2132 = vmatpush1.msra.mxu0 %v1065
        %2133 = vmatprep.subr.mxu0 %v1072
        %2134 = vmatpush1.msra.mxu0 %v1071
        %2135 = vmatprep.mubr.f32.mxu0 %v1997
        %2136 = vmatmul.mubr.f32.gmra.mrb[0].mxu0 %v1996
        %v2137 = vpop.f32.mrb[0].mxu0
        %v2138 = vadd.f32 %v1100, %v2137
        %v2139 = vpop.f32.mrb[0].mxu0
        %v2140 = vadd.f32 %v1104, %v2139
        %2141 = vdwg.mxu0
        %2142 = vmatprep.subr.mxu0 %v888
        %2143 = vmatpush1.msra.mxu0 %v887
        %2144 = vmatprep.subr.mxu0 %v894
        %2145 = vmatpush1.msra.mxu0 %v893
        %2146 = vmatprep.subr.mxu0 %v900
        %2147 = vmatpush1.msra.mxu0 %v899
        %2148 = vmatprep.subr.mxu0 %v906
        %2149 = vmatpush1.msra.mxu0 %v905
        %2150 = vmatprep.subr.mxu0 %v912
        %2151 = vmatpush1.msra.mxu0 %v911
        %2152 = vmatprep.subr.mxu0 %v918
        %2153 = vmatpush1.msra.mxu0 %v917
        %2154 = vmatprep.subr.mxu0 %v924
        %2155 = vmatpush1.msra.mxu0 %v923
        %2156 = vmatprep.subr.mxu0 %v930
        %2157 = vmatpush1.msra.mxu0 %v929
        %2158 = vmatprep.subr.mxu0 %v936
        %2159 = vmatpush1.msra.mxu0 %v935
        %2160 = vmatprep.subr.mxu0 %v942
        %2161 = vmatpush1.msra.mxu0 %v941
        %2162 = vmatprep.subr.mxu0 %v948
        %2163 = vmatpush1.msra.mxu0 %v947
        %2164 = vmatprep.subr.mxu0 %v954
        %2165 = vmatpush1.msra.mxu0 %v953
        %2166 = vmatprep.subr.mxu0 %v960
        %2167 = vmatpush1.msra.mxu0 %v959
        %2168 = vmatprep.subr.mxu0 %v966
        %2169 = vmatpush1.msra.mxu0 %v965
        %2170 = vmatprep.subr.mxu0 %v972
        %2171 = vmatpush1.msra.mxu0 %v971
        %2172 = vmatprep.subr.mxu0 %v978
        %2173 = vmatpush1.msra.mxu0 %v977
        %2174 = vmatprep.subr.mxu0 %v984
        %2175 = vmatpush1.msra.mxu0 %v983
        %2176 = vmatprep.subr.mxu0 %v990
        %2177 = vmatpush1.msra.mxu0 %v989
        %2178 = vmatprep.subr.mxu0 %v996
        %2179 = vmatpush1.msra.mxu0 %v995
        %2180 = vmatprep.subr.mxu0 %v1002
        %2181 = vmatpush1.msra.mxu0 %v1001
        %2182 = vmatprep.subr.mxu0 %v1008
        %2183 = vmatpush1.msra.mxu0 %v1007
        %2184 = vmatprep.subr.mxu0 %v1014
        %2185 = vmatpush1.msra.mxu0 %v1013
        %2186 = vmatprep.subr.mxu0 %v1020
        %2187 = vmatpush1.msra.mxu0 %v1019
        %2188 = vmatprep.subr.mxu0 %v1026
        %2189 = vmatpush1.msra.mxu0 %v1025
        %2190 = vmatprep.subr.mxu0 %v1032
        %2191 = vmatpush1.msra.mxu0 %v1031
        %2192 = vmatprep.subr.mxu0 %v1038
        %2193 = vmatpush1.msra.mxu0 %v1037
        %2194 = vmatprep.subr.mxu0 %v1044
        %2195 = vmatpush1.msra.mxu0 %v1043
        %2196 = vmatprep.subr.mxu0 %v1050
        %2197 = vmatpush1.msra.mxu0 %v1049
        %2198 = vmatprep.subr.mxu0 %v1056
        %2199 = vmatpush1.msra.mxu0 %v1055
        %2200 = vmatprep.subr.mxu0 %v1062
        %2201 = vmatpush1.msra.mxu0 %v1061
        %2202 = vmatprep.subr.mxu0 %v1068
        %2203 = vmatpush1.msra.mxu0 %v1067
        %2204 = vmatprep.subr.mxu0 %v1074
        %2205 = vmatpush1.msra.mxu0 %v1073
        %2206 = vmatprep.mubr.f32.mxu0 %v1997
        %2207 = vmatmul.mubr.f32.gmra.mrb[0].mxu0 %v1996
        %v2208 = vpop.f32.mrb[0].mxu0
        %v2209 = vadd.f32 %v1108, %v2208
        %v2210 = vpop.f32.mrb[0].mxu0
        %v2211 = vadd.f32 %v1112, %v2210
        %2212 = vdwg.mxu0
        %v2215 = vrot.slane %v2067, 5
        %v2216 = vrot.slane %v2069, 5
        %v2219 = vadd.f32 %v737, %v2215
        %v2220 = vadd.f32 %v739, %v2216
        %v2221 = vxor.u32 %v2219, 2147483648
        %v2222 = vxor.u32 %v2220, 2147483648
        %v2223 = vmul.f32 %v2221, 1.442695
        %v2224 = vpow.pop %v2223
        %v2225 = vmul.f32 %v2222, 1.442695
        %v2226 = vpow.pop %v2225
        %v2227 = vadd.f32 %v2224, 1.0
        %v2228 = vadd.f32 %v2226, 1.0
        %v2229 = vrcp.pop %v2227
        %v2230 = vmul.f32 1.0, %v2229
        %v2231 = vrcp.pop %v2228
        %v2232 = vmul.f32 1.0, %v2231
        %v2235 = vrot.slane %v2138, 5
        %v2236 = vrot.slane %v2140, 5
        %v2239 = vadd.f32 %v808, %v2235
        %v2240 = vadd.f32 %v810, %v2236
        %v2241 = vxor.u32 %v2239, 2147483648
        %v2242 = vxor.u32 %v2240, 2147483648
        %v2243 = vmul.f32 %v2241, 1.442695
        %v2244 = vpow.pop %v2243
        %v2245 = vmul.f32 %v2242, 1.442695
        %v2246 = vpow.pop %v2245
        %v2247 = vadd.f32 %v2244, 1.0
        %v2248 = vadd.f32 %v2246, 1.0
        %v2249 = vrcp.pop %v2247
        %v2250 = vmul.f32 1.0, %v2249
        %v2251 = vrcp.pop %v2248
        %v2252 = vmul.f32 1.0, %v2251
        %v2255 = vrot.slane %v2209, 5
        %v2256 = vrot.slane %v2211, 5
        %v2259 = vmul.f32 %v2230, %v2255
        %v2260 = vmul.f32 %v2232, %v2256
        %v2261 = vadd.f32 %v879, %v2259
        %v2262 = vadd.f32 %v881, %v2260
        %v2263 = vtanh.pop %v2261
        %v2264 = vtanh.pop %v2262
        %v2265 = vsub.f32 1.0, %v2250
        %v2266 = vsub.f32 1.0, %v2252
        %v2267 = vmul.f32 %v2265, %v2263
        %v2268 = vmul.f32 %v2266, %v2264
        %v2269 = vrot.slane %v1972, 7
        %v2270 = vrot.slane %v1973, 7
        %v2273 = vmul.f32 %v2250, %v2269
        %v2274 = vmul.f32 %v2252, %v2270
        %v2275 = vadd.f32 %v2267, %v2273
        %v2276 = vadd.f32 %v2268, %v2274
        %v2279 = vcombine.low %v2275, %v2276
        %v2281 = vunpack.c.l.s4 1966171168
        %v2282 = vunpack.c.0.s8 %v2281
        %v2283 = vlaneseq
        %v2284 = vshrl.u32 %v2283, 7
        %v2285 = vsub.s32 %v2282, %v2284
        %v2286 = vrot.slane %v2279, %v2285
        %v2287 = vcombine.high %v2286, %v2286
        %v2289 = vunpack.c.l.s4 1966171168
        %v2290 = vunpack.c.0.s8 %v2289
        %v2291 = vlaneseq
        %v2292 = vshrl.u32 %v2291, 7
        %v2293 = vsub.s32 %v2290, %v2292
        %v2294 = vrot.slane %v2287, %v2293
        %v2295 = vcombine.high %v2294, %v2294
        %s2297 = scalar_lea.vmem %s309, 3 [#allocation12]
        %2298 = vst.msk [vmem:[%s2297] ss:$8 sm:$0x3] %vm341, %v2295
        %2299 = vst.msk [vmem:[%s2297] ss:$8 sm:$0x0] %vm341, %v2295
        %v2300 = vrot.slane %v2275, 3
        %v2301 = vrot.slane %v2276, 3
        %2304 = vmatprep.subr.mxu0 %v884
        %2305 = vmatpush1.msra.mxu0 %v883
        %2306 = vmatprep.subr.mxu0 %v890
        %2307 = vmatpush1.msra.mxu0 %v889
        %2308 = vmatprep.subr.mxu0 %v896
        %2309 = vmatpush1.msra.mxu0 %v895
        %2310 = vmatprep.subr.mxu0 %v902
        %2311 = vmatpush1.msra.mxu0 %v901
        %2312 = vmatprep.subr.mxu0 %v908
        %2313 = vmatpush1.msra.mxu0 %v907
        %2314 = vmatprep.subr.mxu0 %v914
        %2315 = vmatpush1.msra.mxu0 %v913
        %2316 = vmatprep.subr.mxu0 %v920
        %2317 = vmatpush1.msra.mxu0 %v919
        %2318 = vmatprep.subr.mxu0 %v926
        %2319 = vmatpush1.msra.mxu0 %v925
        %2320 = vmatprep.subr.mxu0 %v932
        %2321 = vmatpush1.msra.mxu0 %v931
        %2322 = vmatprep.subr.mxu0 %v938
        %2323 = vmatpush1.msra.mxu0 %v937
        %2324 = vmatprep.subr.mxu0 %v944
        %2325 = vmatpush1.msra.mxu0 %v943
        %2326 = vmatprep.subr.mxu0 %v950
        %2327 = vmatpush1.msra.mxu0 %v949
        %2328 = vmatprep.subr.mxu0 %v956
        %2329 = vmatpush1.msra.mxu0 %v955
        %2330 = vmatprep.subr.mxu0 %v962
        %2331 = vmatpush1.msra.mxu0 %v961
        %2332 = vmatprep.subr.mxu0 %v968
        %2333 = vmatpush1.msra.mxu0 %v967
        %2334 = vmatprep.subr.mxu0 %v974
        %2335 = vmatpush1.msra.mxu0 %v973
        %2336 = vmatprep.subr.mxu0 %v980
        %2337 = vmatpush1.msra.mxu0 %v979
        %2338 = vmatprep.subr.mxu0 %v986
        %2339 = vmatpush1.msra.mxu0 %v985
        %2340 = vmatprep.subr.mxu0 %v992
        %2341 = vmatpush1.msra.mxu0 %v991
        %2342 = vmatprep.subr.mxu0 %v998
        %2343 = vmatpush1.msra.mxu0 %v997
        %2344 = vmatprep.subr.mxu0 %v1004
        %2345 = vmatpush1.msra.mxu0 %v1003
        %2346 = vmatprep.subr.mxu0 %v1010
        %2347 = vmatpush1.msra.mxu0 %v1009
        %2348 = vmatprep.subr.mxu0 %v1016
        %2349 = vmatpush1.msra.mxu0 %v1015
        %2350 = vmatprep.subr.mxu0 %v1022
        %2351 = vmatpush1.msra.mxu0 %v1021
        %2352 = vmatprep.subr.mxu0 %v1028
        %2353 = vmatpush1.msra.mxu0 %v1027
        %2354 = vmatprep.subr.mxu0 %v1034
        %2355 = vmatpush1.msra.mxu0 %v1033
        %2356 = vmatprep.subr.mxu0 %v1040
        %2357 = vmatpush1.msra.mxu0 %v1039
        %2358 = vmatprep.subr.mxu0 %v1046
        %2359 = vmatpush1.msra.mxu0 %v1045
        %2360 = vmatprep.subr.mxu0 %v1052
        %2361 = vmatpush1.msra.mxu0 %v1051
        %2362 = vmatprep.subr.mxu0 %v1058
        %2363 = vmatpush1.msra.mxu0 %v1057
        %2364 = vmatprep.subr.mxu0 %v1064
        %2365 = vmatpush1.msra.mxu0 %v1063
        %2366 = vmatprep.subr.mxu0 %v1070
        %2367 = vmatpush1.msra.mxu0 %v1069
        %2368 = vmatprep.mubr.f32.mxu0 %v2301
        %2369 = vmatmul.mubr.f32.gmra.mrb[0].mxu0 %v2300
        %v2370 = vpop.f32.mrb[0].mxu0
        %v2371 = vadd.f32 %v1092, %v2370
        %v2372 = vpop.f32.mrb[0].mxu0
        %v2373 = vadd.f32 %v1096, %v2372
        %2374 = vdwg.mxu0
        %2375 = vmatprep.subr.mxu0 %v886
        %2376 = vmatpush1.msra.mxu0 %v885
        %2377 = vmatprep.subr.mxu0 %v892
        %2378 = vmatpush1.msra.mxu0 %v891
        %2379 = vmatprep.subr.mxu0 %v898
        %2380 = vmatpush1.msra.mxu0 %v897
        %2381 = vmatprep.subr.mxu0 %v904
        %2382 = vmatpush1.msra.mxu0 %v903
        %2383 = vmatprep.subr.mxu0 %v910
        %2384 = vmatpush1.msra.mxu0 %v909
        %2385 = vmatprep.subr.mxu0 %v916
        %2386 = vmatpush1.msra.mxu0 %v915
        %2387 = vmatprep.subr.mxu0 %v922
        %2388 = vmatpush1.msra.mxu0 %v921
        %2389 = vmatprep.subr.mxu0 %v928
        %2390 = vmatpush1.msra.mxu0 %v927
        %2391 = vmatprep.subr.mxu0 %v934
        %2392 = vmatpush1.msra.mxu0 %v933
        %2393 = vmatprep.subr.mxu0 %v940
        %2394 = vmatpush1.msra.mxu0 %v939
        %2395 = vmatprep.subr.mxu0 %v946
        %2396 = vmatpush1.msra.mxu0 %v945
        %2397 = vmatprep.subr.mxu0 %v952
        %2398 = vmatpush1.msra.mxu0 %v951
        %2399 = vmatprep.subr.mxu0 %v958
        %2400 = vmatpush1.msra.mxu0 %v957
        %2401 = vmatprep.subr.mxu0 %v964
        %2402 = vmatpush1.msra.mxu0 %v963
        %2403 = vmatprep.subr.mxu0 %v970
        %2404 = vmatpush1.msra.mxu0 %v969
        %2405 = vmatprep.subr.mxu0 %v976
        %2406 = vmatpush1.msra.mxu0 %v975
        %2407 = vmatprep.subr.mxu0 %v982
        %2408 = vmatpush1.msra.mxu0 %v981
        %2409 = vmatprep.subr.mxu0 %v988
        %2410 = vmatpush1.msra.mxu0 %v987
        %2411 = vmatprep.subr.mxu0 %v994
        %2412 = vmatpush1.msra.mxu0 %v993
        %2413 = vmatprep.subr.mxu0 %v1000
        %2414 = vmatpush1.msra.mxu0 %v999
        %2415 = vmatprep.subr.mxu0 %v1006
        %2416 = vmatpush1.msra.mxu0 %v1005
        %2417 = vmatprep.subr.mxu0 %v1012
        %2418 = vmatpush1.msra.mxu0 %v1011
        %2419 = vmatprep.subr.mxu0 %v1018
        %2420 = vmatpush1.msra.mxu0 %v1017
        %2421 = vmatprep.subr.mxu0 %v1024
        %2422 = vmatpush1.msra.mxu0 %v1023
        %2423 = vmatprep.subr.mxu0 %v1030
        %2424 = vmatpush1.msra.mxu0 %v1029
        %2425 = vmatprep.subr.mxu0 %v1036
        %2426 = vmatpush1.msra.mxu0 %v1035
        %2427 = vmatprep.subr.mxu0 %v1042
        %2428 = vmatpush1.msra.mxu0 %v1041
        %2429 = vmatprep.subr.mxu0 %v1048
        %2430 = vmatpush1.msra.mxu0 %v1047
        %2431 = vmatprep.subr.mxu0 %v1054
        %2432 = vmatpush1.msra.mxu0 %v1053
        %2433 = vmatprep.subr.mxu0 %v1060
        %2434 = vmatpush1.msra.mxu0 %v1059
        %2435 = vmatprep.subr.mxu0 %v1066
        %2436 = vmatpush1.msra.mxu0 %v1065
        %2437 = vmatprep.subr.mxu0 %v1072
        %2438 = vmatpush1.msra.mxu0 %v1071
        %2439 = vmatprep.mubr.f32.mxu0 %v2301
        %2440 = vmatmul.mubr.f32.gmra.mrb[0].mxu0 %v2300
        %v2441 = vpop.f32.mrb[0].mxu0
        %v2442 = vadd.f32 %v1100, %v2441
        %v2443 = vpop.f32.mrb[0].mxu0
        %v2444 = vadd.f32 %v1104, %v2443
        %2445 = vdwg.mxu0
        %2446 = vmatprep.subr.mxu0 %v888
        %2447 = vmatpush1.msra.mxu0 %v887
        %2448 = vmatprep.subr.mxu0 %v894
        %2449 = vmatpush1.msra.mxu0 %v893
        %2450 = vmatprep.subr.mxu0 %v900
        %2451 = vmatpush1.msra.mxu0 %v899
        %2452 = vmatprep.subr.mxu0 %v906
        %2453 = vmatpush1.msra.mxu0 %v905
        %2454 = vmatprep.subr.mxu0 %v912
        %2455 = vmatpush1.msra.mxu0 %v911
        %2456 = vmatprep.subr.mxu0 %v918
        %2457 = vmatpush1.msra.mxu0 %v917
        %2458 = vmatprep.subr.mxu0 %v924
        %2459 = vmatpush1.msra.mxu0 %v923
        %2460 = vmatprep.subr.mxu0 %v930
        %2461 = vmatpush1.msra.mxu0 %v929
        %2462 = vmatprep.subr.mxu0 %v936
        %2463 = vmatpush1.msra.mxu0 %v935
        %2464 = vmatprep.subr.mxu0 %v942
        %2465 = vmatpush1.msra.mxu0 %v941
        %2466 = vmatprep.subr.mxu0 %v948
        %2467 = vmatpush1.msra.mxu0 %v947
        %2468 = vmatprep.subr.mxu0 %v954
        %2469 = vmatpush1.msra.mxu0 %v953
        %2470 = vmatprep.subr.mxu0 %v960
        %2471 = vmatpush1.msra.mxu0 %v959
        %2472 = vmatprep.subr.mxu0 %v966
        %2473 = vmatpush1.msra.mxu0 %v965
        %2474 = vmatprep.subr.mxu0 %v972
        %2475 = vmatpush1.msra.mxu0 %v971
        %2476 = vmatprep.subr.mxu0 %v978
        %2477 = vmatpush1.msra.mxu0 %v977
        %2478 = vmatprep.subr.mxu0 %v984
        %2479 = vmatpush1.msra.mxu0 %v983
        %2480 = vmatprep.subr.mxu0 %v990
        %2481 = vmatpush1.msra.mxu0 %v989
        %2482 = vmatprep.subr.mxu0 %v996
        %2483 = vmatpush1.msra.mxu0 %v995
        %2484 = vmatprep.subr.mxu0 %v1002
        %2485 = vmatpush1.msra.mxu0 %v1001
        %2486 = vmatprep.subr.mxu0 %v1008
        %2487 = vmatpush1.msra.mxu0 %v1007
        %2488 = vmatprep.subr.mxu0 %v1014
        %2489 = vmatpush1.msra.mxu0 %v1013
        %2490 = vmatprep.subr.mxu0 %v1020
        %2491 = vmatpush1.msra.mxu0 %v1019
        %2492 = vmatprep.subr.mxu0 %v1026
        %2493 = vmatpush1.msra.mxu0 %v1025
        %2494 = vmatprep.subr.mxu0 %v1032
        %2495 = vmatpush1.msra.mxu0 %v1031
        %2496 = vmatprep.subr.mxu0 %v1038
        %2497 = vmatpush1.msra.mxu0 %v1037
        %2498 = vmatprep.subr.mxu0 %v1044
        %2499 = vmatpush1.msra.mxu0 %v1043
        %2500 = vmatprep.subr.mxu0 %v1050
        %2501 = vmatpush1.msra.mxu0 %v1049
        %2502 = vmatprep.subr.mxu0 %v1056
        %2503 = vmatpush1.msra.mxu0 %v1055
        %2504 = vmatprep.subr.mxu0 %v1062
        %2505 = vmatpush1.msra.mxu0 %v1061
        %2506 = vmatprep.subr.mxu0 %v1068
        %2507 = vmatpush1.msra.mxu0 %v1067
        %2508 = vmatprep.subr.mxu0 %v1074
        %2509 = vmatpush1.msra.mxu0 %v1073
        %2510 = vmatprep.mubr.f32.mxu0 %v2301
        %2511 = vmatmul.mubr.f32.gmra.mrb[0].mxu0 %v2300
        %v2512 = vpop.f32.mrb[0].mxu0
        %v2513 = vadd.f32 %v1108, %v2512
        %v2514 = vpop.f32.mrb[0].mxu0
        %v2515 = vadd.f32 %v1112, %v2514
        %2516 = vdwg.mxu0
        %v2519 = vrot.slane %v2371, 4
        %v2520 = vrot.slane %v2373, 4
        %v2523 = vadd.f32 %v737, %v2519
        %v2524 = vadd.f32 %v739, %v2520
        %v2525 = vxor.u32 %v2523, 2147483648
        %v2526 = vxor.u32 %v2524, 2147483648
        %v2527 = vmul.f32 %v2525, 1.442695
        %v2528 = vpow.pop %v2527
        %v2529 = vmul.f32 %v2526, 1.442695
        %v2530 = vpow.pop %v2529
        %v2531 = vadd.f32 %v2528, 1.0
        %v2532 = vadd.f32 %v2530, 1.0
        %v2533 = vrcp.pop %v2531
        %v2534 = vmul.f32 1.0, %v2533
        %v2535 = vrcp.pop %v2532
        %v2536 = vmul.f32 1.0, %v2535
        %v2539 = vrot.slane %v2442, 4
        %v2540 = vrot.slane %v2444, 4
        %v2543 = vadd.f32 %v808, %v2539
        %v2544 = vadd.f32 %v810, %v2540
        %v2545 = vxor.u32 %v2543, 2147483648
        %v2546 = vxor.u32 %v2544, 2147483648
        %v2547 = vmul.f32 %v2545, 1.442695
        %v2548 = vpow.pop %v2547
        %v2549 = vmul.f32 %v2546, 1.442695
        %v2550 = vpow.pop %v2549
        %v2551 = vadd.f32 %v2548, 1.0
        %v2552 = vadd.f32 %v2550, 1.0
        %v2553 = vrcp.pop %v2551
        %v2554 = vmul.f32 1.0, %v2553
        %v2555 = vrcp.pop %v2552
        %v2556 = vmul.f32 1.0, %v2555
        %v2559 = vrot.slane %v2513, 4
        %v2560 = vrot.slane %v2515, 4
        %v2563 = vmul.f32 %v2534, %v2559
        %v2564 = vmul.f32 %v2536, %v2560
        %v2565 = vadd.f32 %v879, %v2563
        %v2566 = vadd.f32 %v881, %v2564
        %v2567 = vtanh.pop %v2565
        %v2568 = vtanh.pop %v2566
        %v2569 = vsub.f32 1.0, %v2554
        %v2570 = vsub.f32 1.0, %v2556
        %v2571 = vmul.f32 %v2569, %v2567
        %v2572 = vmul.f32 %v2570, %v2568
        %v2573 = vrot.slane %v2275, 7
        %v2574 = vrot.slane %v2276, 7
        %v2577 = vmul.f32 %v2554, %v2573
        %v2578 = vmul.f32 %v2556, %v2574
        %v2579 = vadd.f32 %v2571, %v2577
        %v2580 = vadd.f32 %v2572, %v2578
        %v2583 = vcombine.high %v2579, %v2580
        %v2585 = vunpack.c.l.s4 1966171168
        %v2586 = vunpack.c.0.s8 %v2585
        %v2587 = vlaneseq
        %v2588 = vshrl.u32 %v2587, 7
        %v2589 = vsub.s32 %v2586, %v2588
        %v2590 = vrot.slane %v2583, %v2589
        %v2592 = vunpack.c.l.s4 1966171168
        %v2593 = vunpack.c.0.s8 %v2592
        %v2594 = vlaneseq
        %v2595 = vshrl.u32 %v2594, 7
        %v2596 = vsub.s32 %v2593, %v2595
        %v2597 = vrot.slane %v2590, %v2596
        %s2599 = scalar_lea.vmem %s309, 4 [#allocation12]
        %2600 = vst.msk [vmem:[%s2599] ss:$8 sm:$0x3] %vm341, %v2597
        %2601 = vst.msk [vmem:[%s2599] ss:$8 sm:$0x0] %vm341, %v2597
        %v2602 = vrot.slane %v2579, 4
        %v2603 = vrot.slane %v2580, 4
        %2606 = vmatprep.subr.mxu0 %v884
        %2607 = vmatpush1.msra.mxu0 %v883
        %2608 = vmatprep.subr.mxu0 %v890
        %2609 = vmatpush1.msra.mxu0 %v889
        %2610 = vmatprep.subr.mxu0 %v896
        %2611 = vmatpush1.msra.mxu0 %v895
        %2612 = vmatprep.subr.mxu0 %v902
        %2613 = vmatpush1.msra.mxu0 %v901
        %2614 = vmatprep.subr.mxu0 %v908
        %2615 = vmatpush1.msra.mxu0 %v907
        %2616 = vmatprep.subr.mxu0 %v914
        %2617 = vmatpush1.msra.mxu0 %v913
        %2618 = vmatprep.subr.mxu0 %v920
        %2619 = vmatpush1.msra.mxu0 %v919
        %2620 = vmatprep.subr.mxu0 %v926
        %2621 = vmatpush1.msra.mxu0 %v925
        %2622 = vmatprep.subr.mxu0 %v932
        %2623 = vmatpush1.msra.mxu0 %v931
        %2624 = vmatprep.subr.mxu0 %v938
        %2625 = vmatpush1.msra.mxu0 %v937
        %2626 = vmatprep.subr.mxu0 %v944
        %2627 = vmatpush1.msra.mxu0 %v943
        %2628 = vmatprep.subr.mxu0 %v950
        %2629 = vmatpush1.msra.mxu0 %v949
        %2630 = vmatprep.subr.mxu0 %v956
        %2631 = vmatpush1.msra.mxu0 %v955
        %2632 = vmatprep.subr.mxu0 %v962
        %2633 = vmatpush1.msra.mxu0 %v961
        %2634 = vmatprep.subr.mxu0 %v968
        %2635 = vmatpush1.msra.mxu0 %v967
        %2636 = vmatprep.subr.mxu0 %v974
        %2637 = vmatpush1.msra.mxu0 %v973
        %2638 = vmatprep.subr.mxu0 %v980
        %2639 = vmatpush1.msra.mxu0 %v979
        %2640 = vmatprep.subr.mxu0 %v986
        %2641 = vmatpush1.msra.mxu0 %v985
        %2642 = vmatprep.subr.mxu0 %v992
        %2643 = vmatpush1.msra.mxu0 %v991
        %2644 = vmatprep.subr.mxu0 %v998
        %2645 = vmatpush1.msra.mxu0 %v997
        %2646 = vmatprep.subr.mxu0 %v1004
        %2647 = vmatpush1.msra.mxu0 %v1003
        %2648 = vmatprep.subr.mxu0 %v1010
        %2649 = vmatpush1.msra.mxu0 %v1009
        %2650 = vmatprep.subr.mxu0 %v1016
        %2651 = vmatpush1.msra.mxu0 %v1015
        %2652 = vmatprep.subr.mxu0 %v1022
        %2653 = vmatpush1.msra.mxu0 %v1021
        %2654 = vmatprep.subr.mxu0 %v1028
        %2655 = vmatpush1.msra.mxu0 %v1027
        %2656 = vmatprep.subr.mxu0 %v1034
        %2657 = vmatpush1.msra.mxu0 %v1033
        %2658 = vmatprep.subr.mxu0 %v1040
        %2659 = vmatpush1.msra.mxu0 %v1039
        %2660 = vmatprep.subr.mxu0 %v1046
        %2661 = vmatpush1.msra.mxu0 %v1045
        %2662 = vmatprep.subr.mxu0 %v1052
        %2663 = vmatpush1.msra.mxu0 %v1051
        %2664 = vmatprep.subr.mxu0 %v1058
        %2665 = vmatpush1.msra.mxu0 %v1057
        %2666 = vmatprep.subr.mxu0 %v1064
        %2667 = vmatpush1.msra.mxu0 %v1063
        %2668 = vmatprep.subr.mxu0 %v1070
        %2669 = vmatpush1.msra.mxu0 %v1069
        %2670 = vmatprep.mubr.f32.mxu0 %v2603
        %2671 = vmatmul.mubr.f32.gmra.mrb[0].mxu0 %v2602
        %v2672 = vpop.f32.mrb[0].mxu0
        %v2673 = vadd.f32 %v1092, %v2672
        %v2674 = vpop.f32.mrb[0].mxu0
        %v2675 = vadd.f32 %v1096, %v2674
        %2676 = vdwg.mxu0
        %2677 = vmatprep.subr.mxu0 %v886
        %2678 = vmatpush1.msra.mxu0 %v885
        %2679 = vmatprep.subr.mxu0 %v892
        %2680 = vmatpush1.msra.mxu0 %v891
        %2681 = vmatprep.subr.mxu0 %v898
        %2682 = vmatpush1.msra.mxu0 %v897
        %2683 = vmatprep.subr.mxu0 %v904
        %2684 = vmatpush1.msra.mxu0 %v903
        %2685 = vmatprep.subr.mxu0 %v910
        %2686 = vmatpush1.msra.mxu0 %v909
        %2687 = vmatprep.subr.mxu0 %v916
        %2688 = vmatpush1.msra.mxu0 %v915
        %2689 = vmatprep.subr.mxu0 %v922
        %2690 = vmatpush1.msra.mxu0 %v921
        %2691 = vmatprep.subr.mxu0 %v928
        %2692 = vmatpush1.msra.mxu0 %v927
        %2693 = vmatprep.subr.mxu0 %v934
        %2694 = vmatpush1.msra.mxu0 %v933
        %2695 = vmatprep.subr.mxu0 %v940
        %2696 = vmatpush1.msra.mxu0 %v939
        %2697 = vmatprep.subr.mxu0 %v946
        %2698 = vmatpush1.msra.mxu0 %v945
        %2699 = vmatprep.subr.mxu0 %v952
        %2700 = vmatpush1.msra.mxu0 %v951
        %2701 = vmatprep.subr.mxu0 %v958
        %2702 = vmatpush1.msra.mxu0 %v957
        %2703 = vmatprep.subr.mxu0 %v964
        %2704 = vmatpush1.msra.mxu0 %v963
        %2705 = vmatprep.subr.mxu0 %v970
        %2706 = vmatpush1.msra.mxu0 %v969
        %2707 = vmatprep.subr.mxu0 %v976
        %2708 = vmatpush1.msra.mxu0 %v975
        %2709 = vmatprep.subr.mxu0 %v982
        %2710 = vmatpush1.msra.mxu0 %v981
        %2711 = vmatprep.subr.mxu0 %v988
        %2712 = vmatpush1.msra.mxu0 %v987
        %2713 = vmatprep.subr.mxu0 %v994
        %2714 = vmatpush1.msra.mxu0 %v993
        %2715 = vmatprep.subr.mxu0 %v1000
        %2716 = vmatpush1.msra.mxu0 %v999
        %2717 = vmatprep.subr.mxu0 %v1006
        %2718 = vmatpush1.msra.mxu0 %v1005
        %2719 = vmatprep.subr.mxu0 %v1012
        %2720 = vmatpush1.msra.mxu0 %v1011
        %2721 = vmatprep.subr.mxu0 %v1018
        %2722 = vmatpush1.msra.mxu0 %v1017
        %2723 = vmatprep.subr.mxu0 %v1024
        %2724 = vmatpush1.msra.mxu0 %v1023
        %2725 = vmatprep.subr.mxu0 %v1030
        %2726 = vmatpush1.msra.mxu0 %v1029
        %2727 = vmatprep.subr.mxu0 %v1036
        %2728 = vmatpush1.msra.mxu0 %v1035
        %2729 = vmatprep.subr.mxu0 %v1042
        %2730 = vmatpush1.msra.mxu0 %v1041
        %2731 = vmatprep.subr.mxu0 %v1048
        %2732 = vmatpush1.msra.mxu0 %v1047
        %2733 = vmatprep.subr.mxu0 %v1054
        %2734 = vmatpush1.msra.mxu0 %v1053
        %2735 = vmatprep.subr.mxu0 %v1060
        %2736 = vmatpush1.msra.mxu0 %v1059
        %2737 = vmatprep.subr.mxu0 %v1066
        %2738 = vmatpush1.msra.mxu0 %v1065
        %2739 = vmatprep.subr.mxu0 %v1072
        %2740 = vmatpush1.msra.mxu0 %v1071
        %2741 = vmatprep.mubr.f32.mxu0 %v2603
        %2742 = vmatmul.mubr.f32.gmra.mrb[0].mxu0 %v2602
        %v2743 = vpop.f32.mrb[0].mxu0
        %v2744 = vadd.f32 %v1100, %v2743
        %v2745 = vpop.f32.mrb[0].mxu0
        %v2746 = vadd.f32 %v1104, %v2745
        %2747 = vdwg.mxu0
        %2748 = vmatprep.subr.mxu0 %v888
        %2749 = vmatpush1.msra.mxu0 %v887
        %2750 = vmatprep.subr.mxu0 %v894
        %2751 = vmatpush1.msra.mxu0 %v893
        %2752 = vmatprep.subr.mxu0 %v900
        %2753 = vmatpush1.msra.mxu0 %v899
        %2754 = vmatprep.subr.mxu0 %v906
        %2755 = vmatpush1.msra.mxu0 %v905
        %2756 = vmatprep.subr.mxu0 %v912
        %2757 = vmatpush1.msra.mxu0 %v911
        %2758 = vmatprep.subr.mxu0 %v918
        %2759 = vmatpush1.msra.mxu0 %v917
        %2760 = vmatprep.subr.mxu0 %v924
        %2761 = vmatpush1.msra.mxu0 %v923
        %2762 = vmatprep.subr.mxu0 %v930
        %2763 = vmatpush1.msra.mxu0 %v929
        %2764 = vmatprep.subr.mxu0 %v936
        %2765 = vmatpush1.msra.mxu0 %v935
        %2766 = vmatprep.subr.mxu0 %v942
        %2767 = vmatpush1.msra.mxu0 %v941
        %2768 = vmatprep.subr.mxu0 %v948
        %2769 = vmatpush1.msra.mxu0 %v947
        %2770 = vmatprep.subr.mxu0 %v954
        %2771 = vmatpush1.msra.mxu0 %v953
        %2772 = vmatprep.subr.mxu0 %v960
        %2773 = vmatpush1.msra.mxu0 %v959
        %2774 = vmatprep.subr.mxu0 %v966
        %2775 = vmatpush1.msra.mxu0 %v965
        %2776 = vmatprep.subr.mxu0 %v972
        %2777 = vmatpush1.msra.mxu0 %v971
        %2778 = vmatprep.subr.mxu0 %v978
        %2779 = vmatpush1.msra.mxu0 %v977
        %2780 = vmatprep.subr.mxu0 %v984
        %2781 = vmatpush1.msra.mxu0 %v983
        %2782 = vmatprep.subr.mxu0 %v990
        %2783 = vmatpush1.msra.mxu0 %v989
        %2784 = vmatprep.subr.mxu0 %v996
        %2785 = vmatpush1.msra.mxu0 %v995
        %2786 = vmatprep.subr.mxu0 %v1002
        %2787 = vmatpush1.msra.mxu0 %v1001
        %2788 = vmatprep.subr.mxu0 %v1008
        %2789 = vmatpush1.msra.mxu0 %v1007
        %2790 = vmatprep.subr.mxu0 %v1014
        %2791 = vmatpush1.msra.mxu0 %v1013
        %2792 = vmatprep.subr.mxu0 %v1020
        %2793 = vmatpush1.msra.mxu0 %v1019
        %2794 = vmatprep.subr.mxu0 %v1026
        %2795 = vmatpush1.msra.mxu0 %v1025
        %2796 = vmatprep.subr.mxu0 %v1032
        %2797 = vmatpush1.msra.mxu0 %v1031
        %2798 = vmatprep.subr.mxu0 %v1038
        %2799 = vmatpush1.msra.mxu0 %v1037
        %2800 = vmatprep.subr.mxu0 %v1044
        %2801 = vmatpush1.msra.mxu0 %v1043
        %2802 = vmatprep.subr.mxu0 %v1050
        %2803 = vmatpush1.msra.mxu0 %v1049
        %2804 = vmatprep.subr.mxu0 %v1056
        %2805 = vmatpush1.msra.mxu0 %v1055
        %2806 = vmatprep.subr.mxu0 %v1062
        %2807 = vmatpush1.msra.mxu0 %v1061
        %2808 = vmatprep.subr.mxu0 %v1068
        %2809 = vmatpush1.msra.mxu0 %v1067
        %2810 = vmatprep.subr.mxu0 %v1074
        %2811 = vmatpush1.msra.mxu0 %v1073
        %2812 = vmatprep.mubr.f32.mxu0 %v2603
        %2813 = vmatmul.mubr.f32.gmra.mrb[0].mxu0 %v2602
        %v2814 = vpop.f32.mrb[0].mxu0
        %v2815 = vadd.f32 %v1108, %v2814
        %v2816 = vpop.f32.mrb[0].mxu0
        %v2817 = vadd.f32 %v1112, %v2816
        %2818 = vdwg.mxu0
        %v2821 = vrot.slane %v2673, 3
        %v2822 = vrot.slane %v2675, 3
        %v2825 = vadd.f32 %v737, %v2821
        %v2826 = vadd.f32 %v739, %v2822
        %v2827 = vxor.u32 %v2825, 2147483648
        %v2828 = vxor.u32 %v2826, 2147483648
        %v2829 = vmul.f32 %v2827, 1.442695
        %v2830 = vpow.pop %v2829
        %v2831 = vmul.f32 %v2828, 1.442695
        %v2832 = vpow.pop %v2831
        %v2833 = vadd.f32 %v2830, 1.0
        %v2834 = vadd.f32 %v2832, 1.0
        %v2835 = vrcp.pop %v2833
        %v2836 = vmul.f32 1.0, %v2835
        %v2837 = vrcp.pop %v2834
        %v2838 = vmul.f32 1.0, %v2837
        %v2841 = vrot.slane %v2744, 3
        %v2842 = vrot.slane %v2746, 3
        %v2845 = vadd.f32 %v808, %v2841
        %v2846 = vadd.f32 %v810, %v2842
        %v2847 = vxor.u32 %v2845, 2147483648
        %v2848 = vxor.u32 %v2846, 2147483648
        %v2849 = vmul.f32 %v2847, 1.442695
        %v2850 = vpow.pop %v2849
        %v2851 = vmul.f32 %v2848, 1.442695
        %v2852 = vpow.pop %v2851
        %v2853 = vadd.f32 %v2850, 1.0
        %v2854 = vadd.f32 %v2852, 1.0
        %v2855 = vrcp.pop %v2853
        %v2856 = vmul.f32 1.0, %v2855
        %v2857 = vrcp.pop %v2854
        %v2858 = vmul.f32 1.0, %v2857
        %v2861 = vrot.slane %v2815, 3
        %v2862 = vrot.slane %v2817, 3
        %v2865 = vmul.f32 %v2836, %v2861
        %v2866 = vmul.f32 %v2838, %v2862
        %v2867 = vadd.f32 %v879, %v2865
        %v2868 = vadd.f32 %v881, %v2866
        %v2869 = vtanh.pop %v2867
        %v2870 = vtanh.pop %v2868
        %v2871 = vsub.f32 1.0, %v2856
        %v2872 = vsub.f32 1.0, %v2858
        %v2873 = vmul.f32 %v2871, %v2869
        %v2874 = vmul.f32 %v2872, %v2870
        %v2875 = vrot.slane %v2579, 7
        %v2876 = vrot.slane %v2580, 7
        %v2879 = vmul.f32 %v2856, %v2875
        %v2880 = vmul.f32 %v2858, %v2876
        %v2881 = vadd.f32 %v2873, %v2879
        %v2882 = vadd.f32 %v2874, %v2880
        %v2885 = vcombine.high %v2881, %v2882
        %v2887 = vunpack.c.l.s4 1966171168
        %v2888 = vunpack.c.0.s8 %v2887
        %v2889 = vlaneseq
        %v2890 = vshrl.u32 %v2889, 7
        %v2891 = vsub.s32 %v2888, %v2890
        %v2892 = vrot.slane %v2885, %v2891
        %v2893 = vcombine.high %v2892, %v2892
        %v2895 = vunpack.c.l.s4 1966171168
        %v2896 = vunpack.c.0.s8 %v2895
        %v2897 = vlaneseq
        %v2898 = vshrl.u32 %v2897, 7
        %v2899 = vsub.s32 %v2896, %v2898
        %v2900 = vrot.slane %v2893, %v2899
        %s2902 = scalar_lea.vmem %s309, 5 [#allocation12]
        %2903 = vst.msk [vmem:[%s2902] ss:$8 sm:$0x3] %vm341, %v2900
        %2904 = vst.msk [vmem:[%s2902] ss:$8 sm:$0x0] %vm341, %v2900
        %v2905 = vrot.slane %v2881, 5
        %v2906 = vrot.slane %v2882, 5
        %2909 = vmatprep.subr.mxu0 %v884
        %2910 = vmatpush1.msra.mxu0 %v883
        %2911 = vmatprep.subr.mxu0 %v890
        %2912 = vmatpush1.msra.mxu0 %v889
        %2913 = vmatprep.subr.mxu0 %v896
        %2914 = vmatpush1.msra.mxu0 %v895
        %2915 = vmatprep.subr.mxu0 %v902
        %2916 = vmatpush1.msra.mxu0 %v901
        %2917 = vmatprep.subr.mxu0 %v908
        %2918 = vmatpush1.msra.mxu0 %v907
        %2919 = vmatprep.subr.mxu0 %v914
        %2920 = vmatpush1.msra.mxu0 %v913
        %2921 = vmatprep.subr.mxu0 %v920
        %2922 = vmatpush1.msra.mxu0 %v919
        %2923 = vmatprep.subr.mxu0 %v926
        %2924 = vmatpush1.msra.mxu0 %v925
        %2925 = vmatprep.subr.mxu0 %v932
        %2926 = vmatpush1.msra.mxu0 %v931
        %2927 = vmatprep.subr.mxu0 %v938
        %2928 = vmatpush1.msra.mxu0 %v937
        %2929 = vmatprep.subr.mxu0 %v944
        %2930 = vmatpush1.msra.mxu0 %v943
        %2931 = vmatprep.subr.mxu0 %v950
        %2932 = vmatpush1.msra.mxu0 %v949
        %2933 = vmatprep.subr.mxu0 %v956
        %2934 = vmatpush1.msra.mxu0 %v955
        %2935 = vmatprep.subr.mxu0 %v962
        %2936 = vmatpush1.msra.mxu0 %v961
        %2937 = vmatprep.subr.mxu0 %v968
        %2938 = vmatpush1.msra.mxu0 %v967
        %2939 = vmatprep.subr.mxu0 %v974
        %2940 = vmatpush1.msra.mxu0 %v973
        %2941 = vmatprep.subr.mxu0 %v980
        %2942 = vmatpush1.msra.mxu0 %v979
        %2943 = vmatprep.subr.mxu0 %v986
        %2944 = vmatpush1.msra.mxu0 %v985
        %2945 = vmatprep.subr.mxu0 %v992
        %2946 = vmatpush1.msra.mxu0 %v991
        %2947 = vmatprep.subr.mxu0 %v998
        %2948 = vmatpush1.msra.mxu0 %v997
        %2949 = vmatprep.subr.mxu0 %v1004
        %2950 = vmatpush1.msra.mxu0 %v1003
        %2951 = vmatprep.subr.mxu0 %v1010
        %2952 = vmatpush1.msra.mxu0 %v1009
        %2953 = vmatprep.subr.mxu0 %v1016
        %2954 = vmatpush1.msra.mxu0 %v1015
        %2955 = vmatprep.subr.mxu0 %v1022
        %2956 = vmatpush1.msra.mxu0 %v1021
        %2957 = vmatprep.subr.mxu0 %v1028
        %2958 = vmatpush1.msra.mxu0 %v1027
        %2959 = vmatprep.subr.mxu0 %v1034
        %2960 = vmatpush1.msra.mxu0 %v1033
        %2961 = vmatprep.subr.mxu0 %v1040
        %2962 = vmatpush1.msra.mxu0 %v1039
        %2963 = vmatprep.subr.mxu0 %v1046
        %2964 = vmatpush1.msra.mxu0 %v1045
        %2965 = vmatprep.subr.mxu0 %v1052
        %2966 = vmatpush1.msra.mxu0 %v1051
        %2967 = vmatprep.subr.mxu0 %v1058
        %2968 = vmatpush1.msra.mxu0 %v1057
        %2969 = vmatprep.subr.mxu0 %v1064
        %2970 = vmatpush1.msra.mxu0 %v1063
        %2971 = vmatprep.subr.mxu0 %v1070
        %2972 = vmatpush1.msra.mxu0 %v1069
        %2973 = vmatprep.mubr.f32.mxu0 %v2906
        %2974 = vmatmul.mubr.f32.gmra.mrb[0].mxu0 %v2905
        %v2975 = vpop.f32.mrb[0].mxu0
        %v2976 = vadd.f32 %v1092, %v2975
        %v2977 = vpop.f32.mrb[0].mxu0
        %v2978 = vadd.f32 %v1096, %v2977
        %2979 = vdwg.mxu0
        %2980 = vmatprep.subr.mxu0 %v886
        %2981 = vmatpush1.msra.mxu0 %v885
        %2982 = vmatprep.subr.mxu0 %v892
        %2983 = vmatpush1.msra.mxu0 %v891
        %2984 = vmatprep.subr.mxu0 %v898
        %2985 = vmatpush1.msra.mxu0 %v897
        %2986 = vmatprep.subr.mxu0 %v904
        %2987 = vmatpush1.msra.mxu0 %v903
        %2988 = vmatprep.subr.mxu0 %v910
        %2989 = vmatpush1.msra.mxu0 %v909
        %2990 = vmatprep.subr.mxu0 %v916
        %2991 = vmatpush1.msra.mxu0 %v915
        %2992 = vmatprep.subr.mxu0 %v922
        %2993 = vmatpush1.msra.mxu0 %v921
        %2994 = vmatprep.subr.mxu0 %v928
        %2995 = vmatpush1.msra.mxu0 %v927
        %2996 = vmatprep.subr.mxu0 %v934
        %2997 = vmatpush1.msra.mxu0 %v933
        %2998 = vmatprep.subr.mxu0 %v940
        %2999 = vmatpush1.msra.mxu0 %v939
        %3000 = vmatprep.subr.mxu0 %v946
        %3001 = vmatpush1.msra.mxu0 %v945
        %3002 = vmatprep.subr.mxu0 %v952
        %3003 = vmatpush1.msra.mxu0 %v951
        %3004 = vmatprep.subr.mxu0 %v958
        %3005 = vmatpush1.msra.mxu0 %v957
        %3006 = vmatprep.subr.mxu0 %v964
        %3007 = vmatpush1.msra.mxu0 %v963
        %3008 = vmatprep.subr.mxu0 %v970
        %3009 = vmatpush1.msra.mxu0 %v969
        %3010 = vmatprep.subr.mxu0 %v976
        %3011 = vmatpush1.msra.mxu0 %v975
        %3012 = vmatprep.subr.mxu0 %v982
        %3013 = vmatpush1.msra.mxu0 %v981
        %3014 = vmatprep.subr.mxu0 %v988
        %3015 = vmatpush1.msra.mxu0 %v987
        %3016 = vmatprep.subr.mxu0 %v994
        %3017 = vmatpush1.msra.mxu0 %v993
        %3018 = vmatprep.subr.mxu0 %v1000
        %3019 = vmatpush1.msra.mxu0 %v999
        %3020 = vmatprep.subr.mxu0 %v1006
        %3021 = vmatpush1.msra.mxu0 %v1005
        %3022 = vmatprep.subr.mxu0 %v1012
        %3023 = vmatpush1.msra.mxu0 %v1011
        %3024 = vmatprep.subr.mxu0 %v1018
        %3025 = vmatpush1.msra.mxu0 %v1017
        %3026 = vmatprep.subr.mxu0 %v1024
        %3027 = vmatpush1.msra.mxu0 %v1023
        %3028 = vmatprep.subr.mxu0 %v1030
        %3029 = vmatpush1.msra.mxu0 %v1029
        %3030 = vmatprep.subr.mxu0 %v1036
        %3031 = vmatpush1.msra.mxu0 %v1035
        %3032 = vmatprep.subr.mxu0 %v1042
        %3033 = vmatpush1.msra.mxu0 %v1041
        %3034 = vmatprep.subr.mxu0 %v1048
        %3035 = vmatpush1.msra.mxu0 %v1047
        %3036 = vmatprep.subr.mxu0 %v1054
        %3037 = vmatpush1.msra.mxu0 %v1053
        %3038 = vmatprep.subr.mxu0 %v1060
        %3039 = vmatpush1.msra.mxu0 %v1059
        %3040 = vmatprep.subr.mxu0 %v1066
        %3041 = vmatpush1.msra.mxu0 %v1065
        %3042 = vmatprep.subr.mxu0 %v1072
        %3043 = vmatpush1.msra.mxu0 %v1071
        %3044 = vmatprep.mubr.f32.mxu0 %v2906
        %3045 = vmatmul.mubr.f32.gmra.mrb[0].mxu0 %v2905
        %v3046 = vpop.f32.mrb[0].mxu0
        %v3047 = vadd.f32 %v1100, %v3046
        %v3048 = vpop.f32.mrb[0].mxu0
        %v3049 = vadd.f32 %v1104, %v3048
        %3050 = vdwg.mxu0
        %3051 = vmatprep.subr.mxu0 %v888
        %3052 = vmatpush1.msra.mxu0 %v887
        %3053 = vmatprep.subr.mxu0 %v894
        %3054 = vmatpush1.msra.mxu0 %v893
        %3055 = vmatprep.subr.mxu0 %v900
        %3056 = vmatpush1.msra.mxu0 %v899
        %3057 = vmatprep.subr.mxu0 %v906
        %3058 = vmatpush1.msra.mxu0 %v905
        %3059 = vmatprep.subr.mxu0 %v912
        %3060 = vmatpush1.msra.mxu0 %v911
        %3061 = vmatprep.subr.mxu0 %v918
        %3062 = vmatpush1.msra.mxu0 %v917
        %3063 = vmatprep.subr.mxu0 %v924
        %3064 = vmatpush1.msra.mxu0 %v923
        %3065 = vmatprep.subr.mxu0 %v930
        %3066 = vmatpush1.msra.mxu0 %v929
        %3067 = vmatprep.subr.mxu0 %v936
        %3068 = vmatpush1.msra.mxu0 %v935
        %3069 = vmatprep.subr.mxu0 %v942
        %3070 = vmatpush1.msra.mxu0 %v941
        %3071 = vmatprep.subr.mxu0 %v948
        %3072 = vmatpush1.msra.mxu0 %v947
        %3073 = vmatprep.subr.mxu0 %v954
        %3074 = vmatpush1.msra.mxu0 %v953
        %3075 = vmatprep.subr.mxu0 %v960
        %3076 = vmatpush1.msra.mxu0 %v959
        %3077 = vmatprep.subr.mxu0 %v966
        %3078 = vmatpush1.msra.mxu0 %v965
        %3079 = vmatprep.subr.mxu0 %v972
        %3080 = vmatpush1.msra.mxu0 %v971
        %3081 = vmatprep.subr.mxu0 %v978
        %3082 = vmatpush1.msra.mxu0 %v977
        %3083 = vmatprep.subr.mxu0 %v984
        %3084 = vmatpush1.msra.mxu0 %v983
        %3085 = vmatprep.subr.mxu0 %v990
        %3086 = vmatpush1.msra.mxu0 %v989
        %3087 = vmatprep.subr.mxu0 %v996
        %3088 = vmatpush1.msra.mxu0 %v995
        %3089 = vmatprep.subr.mxu0 %v1002
        %3090 = vmatpush1.msra.mxu0 %v1001
        %3091 = vmatprep.subr.mxu0 %v1008
        %3092 = vmatpush1.msra.mxu0 %v1007
        %3093 = vmatprep.subr.mxu0 %v1014
        %3094 = vmatpush1.msra.mxu0 %v1013
        %3095 = vmatprep.subr.mxu0 %v1020
        %3096 = vmatpush1.msra.mxu0 %v1019
        %3097 = vmatprep.subr.mxu0 %v1026
        %3098 = vmatpush1.msra.mxu0 %v1025
        %3099 = vmatprep.subr.mxu0 %v1032
        %3100 = vmatpush1.msra.mxu0 %v1031
        %3101 = vmatprep.subr.mxu0 %v1038
        %3102 = vmatpush1.msra.mxu0 %v1037
        %3103 = vmatprep.subr.mxu0 %v1044
        %3104 = vmatpush1.msra.mxu0 %v1043
        %3105 = vmatprep.subr.mxu0 %v1050
        %3106 = vmatpush1.msra.mxu0 %v1049
        %3107 = vmatprep.subr.mxu0 %v1056
        %3108 = vmatpush1.msra.mxu0 %v1055
        %3109 = vmatprep.subr.mxu0 %v1062
        %3110 = vmatpush1.msra.mxu0 %v1061
        %3111 = vmatprep.subr.mxu0 %v1068
        %3112 = vmatpush1.msra.mxu0 %v1067
        %3113 = vmatprep.subr.mxu0 %v1074
        %3114 = vmatpush1.msra.mxu0 %v1073
        %3115 = vmatprep.mubr.f32.mxu0 %v2906
        %3116 = vmatmul.mubr.f32.gmra.mrb[0].mxu0 %v2905
        %v3117 = vpop.f32.mrb[0].mxu0
        %v3118 = vadd.f32 %v1108, %v3117
        %v3119 = vpop.f32.mrb[0].mxu0
        %v3120 = vadd.f32 %v1112, %v3119
        %3121 = vdwg.mxu0
        %v3124 = vrot.slane %v2976, 2
        %v3125 = vrot.slane %v2978, 2
        %v3128 = vadd.f32 %v737, %v3124
        %v3129 = vadd.f32 %v739, %v3125
        %v3130 = vxor.u32 %v3128, 2147483648
        %v3131 = vxor.u32 %v3129, 2147483648
        %v3132 = vmul.f32 %v3130, 1.442695
        %v3133 = vpow.pop %v3132
        %v3134 = vmul.f32 %v3131, 1.442695
        %v3135 = vpow.pop %v3134
        %v3136 = vadd.f32 %v3133, 1.0
        %v3137 = vadd.f32 %v3135, 1.0
        %v3138 = vrcp.pop %v3136
        %v3139 = vmul.f32 1.0, %v3138
        %v3140 = vrcp.pop %v3137
        %v3141 = vmul.f32 1.0, %v3140
        %v3144 = vrot.slane %v3047, 2
        %v3145 = vrot.slane %v3049, 2
        %v3148 = vadd.f32 %v808, %v3144
        %v3149 = vadd.f32 %v810, %v3145
        %v3150 = vxor.u32 %v3148, 2147483648
        %v3151 = vxor.u32 %v3149, 2147483648
        %v3152 = vmul.f32 %v3150, 1.442695
        %v3153 = vpow.pop %v3152
        %v3154 = vmul.f32 %v3151, 1.442695
        %v3155 = vpow.pop %v3154
        %v3156 = vadd.f32 %v3153, 1.0
        %v3157 = vadd.f32 %v3155, 1.0
        %v3158 = vrcp.pop %v3156
        %v3159 = vmul.f32 1.0, %v3158
        %v3160 = vrcp.pop %v3157
        %v3161 = vmul.f32 1.0, %v3160
        %v3164 = vrot.slane %v3118, 2
        %v3165 = vrot.slane %v3120, 2
        %v3168 = vmul.f32 %v3139, %v3164
        %v3169 = vmul.f32 %v3141, %v3165
        %v3170 = vadd.f32 %v879, %v3168
        %v3171 = vadd.f32 %v881, %v3169
        %v3172 = vtanh.pop %v3170
        %v3173 = vtanh.pop %v3171
        %v3174 = vsub.f32 1.0, %v3159
        %v3175 = vsub.f32 1.0, %v3161
        %v3176 = vmul.f32 %v3174, %v3172
        %v3177 = vmul.f32 %v3175, %v3173
        %v3178 = vrot.slane %v2881, 7
        %v3179 = vrot.slane %v2882, 7
        %v3182 = vmul.f32 %v3159, %v3178
        %v3183 = vmul.f32 %v3161, %v3179
        %v3184 = vadd.f32 %v3176, %v3182
        %v3185 = vadd.f32 %v3177, %v3183
        %v3188 = vcombine.high %v3184, %v3185
        %v3190 = vunpack.c.l.s4 1966171168
        %v3191 = vunpack.c.0.s8 %v3190
        %v3192 = vlaneseq
        %v3193 = vshrl.u32 %v3192, 7
        %v3194 = vsub.s32 %v3191, %v3193
        %v3195 = vrot.slane %v3188, %v3194
        %v3197 = vunpack.c.l.s4 1966171168
        %v3198 = vunpack.c.0.s8 %v3197
        %v3199 = vlaneseq
        %v3200 = vshrl.u32 %v3199, 7
        %v3201 = vsub.s32 %v3198, %v3200
        %v3202 = vrot.slane %v3195, %v3201
        %v3203 = vcombine.high %v3202, %v3202
        %s3205 = scalar_lea.vmem %s309, 6 [#allocation12]
        %3206 = vst.msk [vmem:[%s3205] ss:$8 sm:$0x3] %vm341, %v3203
        %3207 = vst.msk [vmem:[%s3205] ss:$8 sm:$0x0] %vm341, %v3203
        %v3208 = vrot.slane %v3184, 6
        %v3209 = vrot.slane %v3185, 6
        %3212 = vmatprep.subr.mxu0 %v884
        %3213 = vmatpush1.msra.mxu0 %v883
        %3214 = vmatprep.subr.mxu0 %v890
        %3215 = vmatpush1.msra.mxu0 %v889
        %3216 = vmatprep.subr.mxu0 %v896
        %3217 = vmatpush1.msra.mxu0 %v895
        %3218 = vmatprep.subr.mxu0 %v902
        %3219 = vmatpush1.msra.mxu0 %v901
        %3220 = vmatprep.subr.mxu0 %v908
        %3221 = vmatpush1.msra.mxu0 %v907
        %3222 = vmatprep.subr.mxu0 %v914
        %3223 = vmatpush1.msra.mxu0 %v913
        %3224 = vmatprep.subr.mxu0 %v920
        %3225 = vmatpush1.msra.mxu0 %v919
        %3226 = vmatprep.subr.mxu0 %v926
        %3227 = vmatpush1.msra.mxu0 %v925
        %3228 = vmatprep.subr.mxu0 %v932
        %3229 = vmatpush1.msra.mxu0 %v931
        %3230 = vmatprep.subr.mxu0 %v938
        %3231 = vmatpush1.msra.mxu0 %v937
        %3232 = vmatprep.subr.mxu0 %v944
        %3233 = vmatpush1.msra.mxu0 %v943
        %3234 = vmatprep.subr.mxu0 %v950
        %3235 = vmatpush1.msra.mxu0 %v949
        %3236 = vmatprep.subr.mxu0 %v956
        %3237 = vmatpush1.msra.mxu0 %v955
        %3238 = vmatprep.subr.mxu0 %v962
        %3239 = vmatpush1.msra.mxu0 %v961
        %3240 = vmatprep.subr.mxu0 %v968
        %3241 = vmatpush1.msra.mxu0 %v967
        %3242 = vmatprep.subr.mxu0 %v974
        %3243 = vmatpush1.msra.mxu0 %v973
        %3244 = vmatprep.subr.mxu0 %v980
        %3245 = vmatpush1.msra.mxu0 %v979
        %3246 = vmatprep.subr.mxu0 %v986
        %3247 = vmatpush1.msra.mxu0 %v985
        %3248 = vmatprep.subr.mxu0 %v992
        %3249 = vmatpush1.msra.mxu0 %v991
        %3250 = vmatprep.subr.mxu0 %v998
        %3251 = vmatpush1.msra.mxu0 %v997
        %3252 = vmatprep.subr.mxu0 %v1004
        %3253 = vmatpush1.msra.mxu0 %v1003
        %3254 = vmatprep.subr.mxu0 %v1010
        %3255 = vmatpush1.msra.mxu0 %v1009
        %3256 = vmatprep.subr.mxu0 %v1016
        %3257 = vmatpush1.msra.mxu0 %v1015
        %3258 = vmatprep.subr.mxu0 %v1022
        %3259 = vmatpush1.msra.mxu0 %v1021
        %3260 = vmatprep.subr.mxu0 %v1028
        %3261 = vmatpush1.msra.mxu0 %v1027
        %3262 = vmatprep.subr.mxu0 %v1034
        %3263 = vmatpush1.msra.mxu0 %v1033
        %3264 = vmatprep.subr.mxu0 %v1040
        %3265 = vmatpush1.msra.mxu0 %v1039
        %3266 = vmatprep.subr.mxu0 %v1046
        %3267 = vmatpush1.msra.mxu0 %v1045
        %3268 = vmatprep.subr.mxu0 %v1052
        %3269 = vmatpush1.msra.mxu0 %v1051
        %3270 = vmatprep.subr.mxu0 %v1058
        %3271 = vmatpush1.msra.mxu0 %v1057
        %3272 = vmatprep.subr.mxu0 %v1064
        %3273 = vmatpush1.msra.mxu0 %v1063
        %3274 = vmatprep.subr.mxu0 %v1070
        %3275 = vmatpush1.msra.mxu0 %v1069
        %3276 = vmatprep.mubr.f32.mxu0 %v3209
        %3277 = vmatmul.mubr.f32.gmra.mrb[0].mxu0 %v3208
        %v3278 = vpop.f32.mrb[0].mxu0
        %v3279 = vadd.f32 %v1092, %v3278
        %v3280 = vpop.f32.mrb[0].mxu0
        %v3281 = vadd.f32 %v1096, %v3280
        %3282 = vdwg.mxu0
        %3283 = vmatprep.subr.mxu0 %v886
        %3284 = vmatpush1.msra.mxu0 %v885
        %3285 = vmatprep.subr.mxu0 %v892
        %3286 = vmatpush1.msra.mxu0 %v891
        %3287 = vmatprep.subr.mxu0 %v898
        %3288 = vmatpush1.msra.mxu0 %v897
        %3289 = vmatprep.subr.mxu0 %v904
        %3290 = vmatpush1.msra.mxu0 %v903
        %3291 = vmatprep.subr.mxu0 %v910
        %3292 = vmatpush1.msra.mxu0 %v909
        %3293 = vmatprep.subr.mxu0 %v916
        %3294 = vmatpush1.msra.mxu0 %v915
        %3295 = vmatprep.subr.mxu0 %v922
        %3296 = vmatpush1.msra.mxu0 %v921
        %3297 = vmatprep.subr.mxu0 %v928
        %3298 = vmatpush1.msra.mxu0 %v927
        %3299 = vmatprep.subr.mxu0 %v934
        %3300 = vmatpush1.msra.mxu0 %v933
        %3301 = vmatprep.subr.mxu0 %v940
        %3302 = vmatpush1.msra.mxu0 %v939
        %3303 = vmatprep.subr.mxu0 %v946
        %3304 = vmatpush1.msra.mxu0 %v945
        %3305 = vmatprep.subr.mxu0 %v952
        %3306 = vmatpush1.msra.mxu0 %v951
        %3307 = vmatprep.subr.mxu0 %v958
        %3308 = vmatpush1.msra.mxu0 %v957
        %3309 = vmatprep.subr.mxu0 %v964
        %3310 = vmatpush1.msra.mxu0 %v963
        %3311 = vmatprep.subr.mxu0 %v970
        %3312 = vmatpush1.msra.mxu0 %v969
        %3313 = vmatprep.subr.mxu0 %v976
        %3314 = vmatpush1.msra.mxu0 %v975
        %3315 = vmatprep.subr.mxu0 %v982
        %3316 = vmatpush1.msra.mxu0 %v981
        %3317 = vmatprep.subr.mxu0 %v988
        %3318 = vmatpush1.msra.mxu0 %v987
        %3319 = vmatprep.subr.mxu0 %v994
        %3320 = vmatpush1.msra.mxu0 %v993
        %3321 = vmatprep.subr.mxu0 %v1000
        %3322 = vmatpush1.msra.mxu0 %v999
        %3323 = vmatprep.subr.mxu0 %v1006
        %3324 = vmatpush1.msra.mxu0 %v1005
        %3325 = vmatprep.subr.mxu0 %v1012
        %3326 = vmatpush1.msra.mxu0 %v1011
        %3327 = vmatprep.subr.mxu0 %v1018
        %3328 = vmatpush1.msra.mxu0 %v1017
        %3329 = vmatprep.subr.mxu0 %v1024
        %3330 = vmatpush1.msra.mxu0 %v1023
        %3331 = vmatprep.subr.mxu0 %v1030
        %3332 = vmatpush1.msra.mxu0 %v1029
        %3333 = vmatprep.subr.mxu0 %v1036
        %3334 = vmatpush1.msra.mxu0 %v1035
        %3335 = vmatprep.subr.mxu0 %v1042
        %3336 = vmatpush1.msra.mxu0 %v1041
        %3337 = vmatprep.subr.mxu0 %v1048
        %3338 = vmatpush1.msra.mxu0 %v1047
        %3339 = vmatprep.subr.mxu0 %v1054
        %3340 = vmatpush1.msra.mxu0 %v1053
        %3341 = vmatprep.subr.mxu0 %v1060
        %3342 = vmatpush1.msra.mxu0 %v1059
        %3343 = vmatprep.subr.mxu0 %v1066
        %3344 = vmatpush1.msra.mxu0 %v1065
        %3345 = vmatprep.subr.mxu0 %v1072
        %3346 = vmatpush1.msra.mxu0 %v1071
        %3347 = vmatprep.mubr.f32.mxu0 %v3209
        %3348 = vmatmul.mubr.f32.gmra.mrb[0].mxu0 %v3208
        %v3349 = vpop.f32.mrb[0].mxu0
        %v3350 = vadd.f32 %v1100, %v3349
        %v3351 = vpop.f32.mrb[0].mxu0
        %v3352 = vadd.f32 %v1104, %v3351
        %3353 = vdwg.mxu0
        %3354 = vmatprep.subr.mxu0 %v888
        %3355 = vmatpush1.msra.mxu0 %v887
        %3356 = vmatprep.subr.mxu0 %v894
        %3357 = vmatpush1.msra.mxu0 %v893
        %3358 = vmatprep.subr.mxu0 %v900
        %3359 = vmatpush1.msra.mxu0 %v899
        %3360 = vmatprep.subr.mxu0 %v906
        %3361 = vmatpush1.msra.mxu0 %v905
        %3362 = vmatprep.subr.mxu0 %v912
        %3363 = vmatpush1.msra.mxu0 %v911
        %3364 = vmatprep.subr.mxu0 %v918
        %3365 = vmatpush1.msra.mxu0 %v917
        %3366 = vmatprep.subr.mxu0 %v924
        %3367 = vmatpush1.msra.mxu0 %v923
        %3368 = vmatprep.subr.mxu0 %v930
        %3369 = vmatpush1.msra.mxu0 %v929
        %3370 = vmatprep.subr.mxu0 %v936
        %3371 = vmatpush1.msra.mxu0 %v935
        %3372 = vmatprep.subr.mxu0 %v942
        %3373 = vmatpush1.msra.mxu0 %v941
        %3374 = vmatprep.subr.mxu0 %v948
        %3375 = vmatpush1.msra.mxu0 %v947
        %3376 = vmatprep.subr.mxu0 %v954
        %3377 = vmatpush1.msra.mxu0 %v953
        %3378 = vmatprep.subr.mxu0 %v960
        %3379 = vmatpush1.msra.mxu0 %v959
        %3380 = vmatprep.subr.mxu0 %v966
        %3381 = vmatpush1.msra.mxu0 %v965
        %3382 = vmatprep.subr.mxu0 %v972
        %3383 = vmatpush1.msra.mxu0 %v971
        %3384 = vmatprep.subr.mxu0 %v978
        %3385 = vmatpush1.msra.mxu0 %v977
        %3386 = vmatprep.subr.mxu0 %v984
        %3387 = vmatpush1.msra.mxu0 %v983
        %3388 = vmatprep.subr.mxu0 %v990
        %3389 = vmatpush1.msra.mxu0 %v989
        %3390 = vmatprep.subr.mxu0 %v996
        %3391 = vmatpush1.msra.mxu0 %v995
        %3392 = vmatprep.subr.mxu0 %v1002
        %3393 = vmatpush1.msra.mxu0 %v1001
        %3394 = vmatprep.subr.mxu0 %v1008
        %3395 = vmatpush1.msra.mxu0 %v1007
        %3396 = vmatprep.subr.mxu0 %v1014
        %3397 = vmatpush1.msra.mxu0 %v1013
        %3398 = vmatprep.subr.mxu0 %v1020
        %3399 = vmatpush1.msra.mxu0 %v1019
        %3400 = vmatprep.subr.mxu0 %v1026
        %3401 = vmatpush1.msra.mxu0 %v1025
        %3402 = vmatprep.subr.mxu0 %v1032
        %3403 = vmatpush1.msra.mxu0 %v1031
        %3404 = vmatprep.subr.mxu0 %v1038
        %3405 = vmatpush1.msra.mxu0 %v1037
        %3406 = vmatprep.subr.mxu0 %v1044
        %3407 = vmatpush1.msra.mxu0 %v1043
        %3408 = vmatprep.subr.mxu0 %v1050
        %3409 = vmatpush1.msra.mxu0 %v1049
        %3410 = vmatprep.subr.mxu0 %v1056
        %3411 = vmatpush1.msra.mxu0 %v1055
        %3412 = vmatprep.subr.mxu0 %v1062
        %3413 = vmatpush1.msra.mxu0 %v1061
        %3414 = vmatprep.subr.mxu0 %v1068
        %3415 = vmatpush1.msra.mxu0 %v1067
        %3416 = vmatprep.subr.mxu0 %v1074
        %3417 = vmatpush1.msra.mxu0 %v1073
        %3418 = vmatprep.mubr.f32.mxu0 %v3209
        %3419 = vmatmul.mubr.f32.gmra.mrb[0].mxu0 %v3208
        %v3420 = vpop.f32.mrb[0].mxu0
        %v3421 = vadd.f32 %v1108, %v3420
        %v3422 = vpop.f32.mrb[0].mxu0
        %v3423 = vadd.f32 %v1112, %v3422
        %3424 = vdwg.mxu0
        %v3427 = vrot.slane %v3279, 1
        %v3428 = vrot.slane %v3281, 1
        %v3431 = vadd.f32 %v737, %v3427
        %v3432 = vadd.f32 %v739, %v3428
        %v3433 = vxor.u32 %v3431, 2147483648
        %v3434 = vxor.u32 %v3432, 2147483648
        %v3435 = vmul.f32 %v3433, 1.442695
        %v3436 = vpow.pop %v3435
        %v3437 = vmul.f32 %v3434, 1.442695
        %v3438 = vpow.pop %v3437
        %v3439 = vadd.f32 %v3436, 1.0
        %v3440 = vadd.f32 %v3438, 1.0
        %v3441 = vrcp.pop %v3439
        %v3442 = vmul.f32 1.0, %v3441
        %v3443 = vrcp.pop %v3440
        %v3444 = vmul.f32 1.0, %v3443
        %v3447 = vrot.slane %v3350, 1
        %v3448 = vrot.slane %v3352, 1
        %v3451 = vadd.f32 %v808, %v3447
        %v3452 = vadd.f32 %v810, %v3448
        %v3453 = vxor.u32 %v3451, 2147483648
        %v3454 = vxor.u32 %v3452, 2147483648
        %v3455 = vmul.f32 %v3453, 1.442695
        %v3456 = vpow.pop %v3455
        %v3457 = vmul.f32 %v3454, 1.442695
        %v3458 = vpow.pop %v3457
        %v3459 = vadd.f32 %v3456, 1.0
        %v3460 = vadd.f32 %v3458, 1.0
        %v3461 = vrcp.pop %v3459
        %v3462 = vmul.f32 1.0, %v3461
        %v3463 = vrcp.pop %v3460
        %v3464 = vmul.f32 1.0, %v3463
        %v3467 = vrot.slane %v3421, 1
        %v3468 = vrot.slane %v3423, 1
        %v3471 = vmul.f32 %v3442, %v3467
        %v3472 = vmul.f32 %v3444, %v3468
        %v3473 = vadd.f32 %v879, %v3471
        %v3474 = vadd.f32 %v881, %v3472
        %v3475 = vtanh.pop %v3473
        %v3476 = vtanh.pop %v3474
        %v3477 = vsub.f32 1.0, %v3462
        %v3478 = vsub.f32 1.0, %v3464
        %v3479 = vmul.f32 %v3477, %v3475
        %v3480 = vmul.f32 %v3478, %v3476
        %v3481 = vrot.slane %v3184, 7
        %v3482 = vrot.slane %v3185, 7
        %v3485 = vmul.f32 %v3462, %v3481
        %v3486 = vmul.f32 %v3464, %v3482
        %v3487 = vadd.f32 %v3479, %v3485
        %v3488 = vadd.f32 %v3480, %v3486
        %v3491 = vcombine.high %v3487, %v3488
        %v3493 = vunpack.c.l.s4 1966171168
        %v3494 = vunpack.c.0.s8 %v3493
        %v3495 = vlaneseq
        %v3496 = vshrl.u32 %v3495, 7
        %v3497 = vsub.s32 %v3494, %v3496
        %v3498 = vrot.slane %v3491, %v3497
        %v3499 = vcombine.high %v3498, %v3498
        %v3501 = vunpack.c.l.s4 1966171168
        %v3502 = vunpack.c.0.s8 %v3501
        %v3503 = vlaneseq
        %v3504 = vshrl.u32 %v3503, 7
        %v3505 = vsub.s32 %v3502, %v3504
        %v3506 = vrot.slane %v3499, %v3505
        %v3507 = vcombine.high %v3506, %v3506
        %s3509 = scalar_lea.vmem %s309, 7 [#allocation12]
        %3510 = vst.msk [vmem:[%s3509] ss:$8 sm:$0x3] %vm341, %v3507
        %3511 = vst.msk [vmem:[%s3509] ss:$8 sm:$0x0] %vm341, %v3507
        %3512 = vst.msk [vmem:[#allocation2] sm:$0x3] %vm341, %v3507
        %s3513 = sand.u32 %s166, 1
        %s3514 = scalar_lea.sflag [#allocation8], %s3513
        %s3515 = sand.u32 %s166, 1
        %s3516 = smul.addr %s3515, 16
        %s3517 = scalar_lea.vmem [#allocation12], %s3516
        %s3518 = sand.u32 %s192, 1
        %s3519 = scalar_lea.sflag [#allocation14], %s3518
        %s3520 = sand.u32 %s192, 1
        %s3521 = smul.addr %s3520, 16
        %s3522 = scalar_lea.vmem [#allocation13], %s3521
        // Predicated region
        $region61: #{tpu_custom_call.1} parent=43 // pred_check
          %p3523 = pneg %p176
        $region62: #{tpu_custom_call.1} parent=43 // pred_check_branch
          %3525 = sbr.rel (%p3523) target = $region64
        $region63: #{tpu_custom_call.1} parent=43 // pred_region
          %s3527 = ssub.s32 256, 256
          %3528 = vsyncadd %s3514, %s3527
          %s3529 = smul.addr %s32, 2
          %s3530 = smul.addr %s3529, 128
          %s3531 = scalar_lea.hbm %s7, %s3530
          %s3533 = sshll.u32 %s3517, 4
          %s3534 = int_to_ptr.vmem [resolvable:$true] %s3533
          %3536 = dma.vmem_to_hbm [thread:$0]  %s3534, 256, %s3531, %s3514
        $region64: #{tpu_custom_call.1} parent=43 // pred_fallthru
          _
        // Predicated region
        $region65: #{tpu_custom_call.1} parent=43 // pred_check
          %p3537 = pneg %p202
        $region66: #{tpu_custom_call.1} parent=43 // pred_check_branch
          %3539 = sbr.rel (%p3537) target = $region68
        $region67: #{tpu_custom_call.1} parent=43 // pred_region
          %s3541 = ssub.s32 256, 256
          %3542 = vsyncadd %s3519, %s3541
          %s3543 = smul.addr %s32, 2
          %s3544 = smul.addr %s3543, 128
          %s3545 = scalar_lea.hbm %s8, %s3544
          %s3547 = sshll.u32 %s3522, 4
          %s3548 = int_to_ptr.vmem [resolvable:$true] %s3547
          %3550 = dma.vmem_to_hbm [thread:$0]  %s3548, 256, %s3545, %s3519
        $region68: #{tpu_custom_call.1} parent=43 // pred_fallthru
          _
      $region44: #{tpu_custom_call.1} parent=5 // pred_fallthru
        _
      %p3551 = scmp.le.s32.totalorder 2, %s27
      // Predicated region
      $region69: #{tpu_custom_call.1} parent=5 // pred_check
        %p3552 = pneg %p3551
      $region70: #{tpu_custom_call.1} parent=5 // pred_check_branch
        %3554 = sbr.rel (%p3552) target = $region72
      $region71: #{tpu_custom_call.1} parent=5 // pred_region
        %s3555 = ssub.s32 %s27, 2
        // Predicated region
        $region73: #{tpu_custom_call.1} parent=71 // pred_check
          %p3556 = pneg %p182
        $region74: #{tpu_custom_call.1} parent=71 // pred_check_branch
          %3558 = sbr.rel (%p3556) target = $region76
        $region75: #{tpu_custom_call.1} parent=71 // pred_region
          %s3559 = sand.u32 %s167, 1
          %s3560 = scalar_lea.sflag [#allocation8], %s3559
          %s3561 = sand.u32 %s167, 1
          %s3562 = smul.addr %s3561, 16
          %s3563 = scalar_lea.vmem [#allocation12], %s3562
          %3564 = dma.done %s3560, 256
        $region76: #{tpu_custom_call.1} parent=71 // pred_fallthru
          _
        // Predicated region
        $region77: #{tpu_custom_call.1} parent=71 // pred_check
          %p3565 = pneg %p208
        $region78: #{tpu_custom_call.1} parent=71 // pred_check_branch
          %3567 = sbr.rel (%p3565) target = $region80
        $region79: #{tpu_custom_call.1} parent=71 // pred_region
          %s3568 = sand.u32 %s193, 1
          %s3569 = scalar_lea.sflag [#allocation14], %s3568
          %s3570 = sand.u32 %s193, 1
          %s3571 = smul.addr %s3570, 16
          %s3572 = scalar_lea.vmem [#allocation13], %s3571
          %3573 = dma.done %s3569, 256
        $region80: #{tpu_custom_call.1} parent=71 // pred_fallthru
          _
      $region72: #{tpu_custom_call.1} parent=5 // pred_fallthru
        _
    $region6: #{tpu_custom_call.1} parent=1 // loop_footer
      %s31 = sadd.s32 1, %s27
    $region7: #{tpu_custom_call.1} parent=1 // loop_footer_branch
      %26 = sbr.rel target = $region3
    $region8: #{tpu_custom_call.1} parent=1 // loop_exit
      _
    %3574 = vsyncpa [#allocation7], 1
    %s3575 = scalar_lea.sflag [#allocation7], 1
    %3576 = vsyncpa %s3575, 1
    %3577 = vsyncpa [#allocation10], 1
    %3578 = vsyncpa [#allocation8], 1
    %s3579 = scalar_lea.sflag [#allocation8], 1
    %3580 = vsyncpa %s3579, 1
    %3581 = vsyncpa [#allocation14], 1
    %s3582 = scalar_lea.sflag [#allocation14], 1
    %3583 = vsyncpa %s3582, 1

</llo_original>
